<compile_context>
chip_gen: v6e
topology: v6e:2x2x1
jax: 0.10.0
libtpu: 0.0.40
codegen_flags: <defaults>
</compile_context>

<pallas_src>
import numpy as np

import jax
import jax.numpy as jnp
from jax.experimental import pallas as pl
from jax.experimental.pallas import tpu as pltpu

EPS = 1e-5
_MM_DTYPE = jnp.float32   # jnp.bfloat16 trades ~1% abs error for fewer MXU passes


# ----------------------------- small helpers -----------------------------

def _vmem():
    return pl.BlockSpec(memory_space=pltpu.MemorySpace.VMEM)


def _mm(a, b):
    return jnp.dot(a.astype(_MM_DTYPE), b.astype(_MM_DTYPE),
                   preferred_element_type=jnp.float32)


def _roll(x, shift, axis):
    # pltpu.roll with a non-negative shift (jnp.roll convention:
    # result[i] = x[(i - shift) mod n]).
    return pltpu.roll(x, shift % x.shape[axis], axis)


def _local_row(rows, cols, h):
    # Row index within each image for a batch stacked along sublanes.
    r = jax.lax.broadcasted_iota(jnp.int32, (rows, cols), 0)
    if h & (h - 1) == 0:
        return jnp.bitwise_and(r, h - 1)
    return jnp.remainder(r, h)


# --------------------------- in-kernel building blocks ---------------------------

def _conv3x3(x, h, b_ref):
    """3x3 same-padded conv on batched rows.

    x: (N*h, w*Cin), images stacked along sublanes.  Vertical taps come from
    pltpu.roll (XLU) + an iota mask (zero padding AND image-boundary guard).
    Horizontal taps + channel mixing live in b_ref = vstack(B_ky0, B_ky1,
    B_ky2), built once per call in the wrapper.  When 3*w*Cin is lane aligned
    the three taps collapse into one wide-K matmul.
    """
    rows, wc = x.shape
    local = _local_row(rows, wc, h)
    up = jnp.where(local == 0, 0.0, _roll(x, 1, 0))       # row i holds x[i-1]
    dn = jnp.where(local == h - 1, 0.0, _roll(x, -1, 0))  # row i holds x[i+1]
    if wc % 128 == 0:
        taps = jnp.concatenate([up, x, dn], axis=1)        # (rows, 3*wc)
        return _mm(taps, b_ref[...])
    return (_mm(up, b_ref[0:wc, :])
            + _mm(x, b_ref[wc:2 * wc, :])
            + _mm(dn, b_ref[2 * wc:3 * wc, :]))


def _bn_relu(y, g_ref, gt_ref, gamma_c, beta_c):
    """Training-mode BatchNorm2d (batch stats, biased var, eps=1e-5) + ReLU.

    g (W*C, C) sums lanes per channel; gt (C, W*C) broadcasts channel -> lane.
    Per-channel affine folded: out = (y - mean) * (gamma*rsqrt(var+eps)) + beta.
    """
    g = g_ref[...]
    gt = gt_ref[...]
    c = g.shape[1]
    inv_count = 1.0 / float(y.shape[0] * y.shape[1] // c)
    mean_c = _mm(jnp.sum(y, axis=0, keepdims=True), g) * inv_count      # (1, C)
    d = y - _mm(mean_c, gt)                                             # centered
    var_c = _mm(jnp.sum(d * d, axis=0, keepdims=True), g) * inv_count   # (1, C)
    a_c = jax.lax.rsqrt(var_c + EPS) * gamma_c                          # (1, C)
    return jnp.maximum(d * _mm(a_c, gt) + _mm(beta_c, gt), 0.0)


def _maxpool(y, r_ref, cs_ref):
    """2x2/2 max pool on (rows, W*C): row-pair max via sublane roll (XLU/VPU),
    then row compaction + two lane-group gathers (MXU) with a max."""
    t = jnp.maximum(y, _roll(y, -1, 0))     # valid at even local rows
    t = _mm(r_ref[...], t)                  # keep even rows, per image
    return jnp.maximum(_mm(t, cs_ref[0]), _mm(t, cs_ref[1]))


def _deconv2x2(x, d_ref, s_ref):
    """ConvTranspose2d(k=2, s=2): d_ref[dy] folds the dx lane scatter + channel
    mixing; s_ref[dy] scatters input rows to output rows 2r+dy per image."""
    return _mm(s_ref[0], _mm(x, d_ref[0])) + _mm(s_ref[1], _mm(x, d_ref[1]))


# ------------------------------- fused kernel -------------------------------

def _fused_kernel(x_ref, b1_ref, b2_ref, d3_ref, d4_ref,
                  g1_ref, gt1_ref, g2_ref, gt2_ref, g3_ref, gt3_ref,
                  r1_ref, cs1_ref, r2_ref, cs2_ref, s3_ref, s4_ref,
                  bn_ref, b4_ref, out_ref):
    h1 = x_ref.shape[1]          # square, single-channel input: W == H
    h2 = h1 // 2
    c1 = g1_ref.shape[1]
    c2 = g2_ref.shape[1]
    c3 = g3_ref.shape[1]
    bn = bn_ref[...]
    x = x_ref[...]

    # enc_block_1: Conv2d(1->16, 3, p=1) + BN + ReLU + MaxPool  (conv bias dropped: BN cancels it)
    y = _conv3x3(x, h1, b1_ref)
    y = _bn_relu(y, g1_ref, gt1_ref, bn[0:1, :c1], bn[1:2, :c1])
    x = _maxpool(y, r1_ref, cs1_ref)

    # enc_block_2: Conv2d(16->4, 3, p=1) + BN + ReLU + MaxPool
    y = _conv3x3(x, h2, b2_ref)
    y = _bn_relu(y, g2_ref, gt2_ref, bn[2:3, :c2], bn[3:4, :c2])
    x = _maxpool(y, r2_ref, cs2_ref)

    # dec_block_1: ConvTranspose2d(4->16, 2, s=2) + BN + ReLU
    y = _deconv2x2(x, d3_ref, s3_ref)
    x = _bn_relu(y, g3_ref, gt3_ref, bn[4:5, :c3], bn[5:6, :c3])

    # dec_block_2: ConvTranspose2d(16->1, 2, s=2) + ReLU  (bias kept: no BN after)
    y = _deconv2x2(x, d4_ref, s4_ref)
    out_ref[...] = jnp.maximum(y + b4_ref[...], 0.0)


# --------------------- wrapper-side constants / weight plumbing ---------------------

def _group_mats(width, ch):
    # G (width*ch, ch) sums lanes per channel; Gt (ch, width*ch) broadcasts back.
    g = np.tile(np.eye(ch, dtype=np.float32), (width, 1))
    return jnp.asarray(g), jnp.asarray(np.ascontiguousarray(g.T))


def _colsel_np(width, ch):
    # (2, width*ch, (width//2)*ch): lane gather of horizontal pool pair dx in {0,1}.
    sel = []
    for dx in (0, 1):
        s = np.zeros((width, width // 2), np.float32)
        s[2 * np.arange(width // 2) + dx, np.arange(width // 2)] = 1.0
        sel.append(np.kron(s, np.eye(ch, dtype=np.float32)))
    return np.stack(sel)


def _row_pool_np(n, h):
    # (n*h//2, n*h): picks even local rows of each image (stride-2 row gather).
    m = np.zeros((n * (h // 2), n * h), np.float32)
    r = np.arange(h // 2)
    for i in range(n):
        m[i * (h // 2) + r, i * h + 2 * r] = 1.0
    return m


def _row_scat_np(n, h_in):
    # (2, n*2*h_in, n*h_in): scatters input row r to output row 2r+dy per image.
    out = []
    r = np.arange(h_in)
    for dy in range(2):
        m = np.zeros((n * 2 * h_in, n * h_in), np.float32)
        for i in range(n):
            m[i * 2 * h_in + 2 * r + dy, i * h_in + r] = 1.0
        out.append(m)
    return np.stack(out)


def _conv_b_full(weight, width):
    # (Cout, Cin, 3, 3) -> (3*width*Cin, width*Cout); W-shift + channel mix per ky,
    # stacked along the contraction dim so the taps can fuse into one matmul.
    mats = []
    for ky in range(3):
        acc = None
        for kx in range(3):
            sw = jnp.asarray(np.eye(width, k=1 - kx, dtype=np.float32))  # dx = kx-1
            term = jnp.kron(sw, weight[:, :, ky, kx].T)
            acc = term if acc is None else acc + term
        mats.append(acc)
    return jnp.concatenate(mats, axis=0)


def _deconv_d_mats(weight, width):
    # (Cin, Cout, 2, 2) -> (2, width*Cin, 2*width*Cout); dx scatter folded per dy.
    mats = []
    for dy in range(2):
        acc = None
        for dx in range(2):
            sc = np.zeros((width, 2 * width), np.float32)
            sc[np.arange(width), 2 * np.arange(width) + dx] = 1.0
            term = jnp.kron(jnp.asarray(sc), weight[:, :, dy, dx])
            acc = term if acc is None else acc + term
        mats.append(acc)
    return jnp.stack(mats)


def conv_autoencoder_forward(x_nchw, params):
    n, c0, h, w = x_nchw.shape
    assert c0 == 1 and h == w and h % 4 == 0
    x = x_nchw.astype(jnp.float32).reshape(n * h, w)   # batch stacked along sublanes
    h2, h4 = h // 2, h // 4

    c1 = params["w1"].shape[0]   # 16
    c2 = params["w2"].shape[0]   # 4
    c3 = params["w3"].shape[1]   # 16
    assert max(c1, c2, c3) <= 16

    # weight-dependent matrices (tiny per-call XLA "plumbing")
    b1 = _conv_b_full(params["w1"], h)        # (3*h,      h*c1)
    b2 = _conv_b_full(params["w2"], h2)       # (3*h2*c1,  h2*c2)
    d3 = _deconv_d_mats(params["w3"], h4)     # (2, h4*c2, h2*c3)
    d4 = _deconv_d_mats(params["w4"], h2)     # (2, h2*c3, h)

    # structural 0/1 constants
    g1, gt1 = _group_mats(h, c1)
    g2, gt2 = _group_mats(h2, c2)
    g3, gt3 = _group_mats(h2, c3)
    r1 = jnp.asarray(_row_pool_np(n, h))
    r2 = jnp.asarray(_row_pool_np(n, h2))
    cs1 = jnp.asarray(_colsel_np(h, c1))
    cs2 = jnp.asarray(_colsel_np(h2, c2))
    s3 = jnp.asarray(_row_scat_np(n, h4))
    s4 = jnp.asarray(_row_scat_np(n, h2))

    # consolidated per-channel BN affines + final bias
    def pad16(v):
        v = v.astype(jnp.float32)
        return jnp.pad(v, (0, 16 - v.shape[0]))

    bn = jnp.stack([pad16(params["g1"]), pad16(params["be1"]),
                    pad16(params["g2"]), pad16(params["be2"]),
                    pad16(params["g3"]), pad16(params["be3"]),
                    jnp.zeros((16,), jnp.float32), jnp.zeros((16,), jnp.float32)])
    b4row = jnp.tile(params["b4"].astype(jnp.float32), (w,)).reshape(1, w)

    args = (x, b1, b2, d3, d4, g1, gt1, g2, gt2, g3, gt3,
            r1, cs1, r2, cs2, s3, s4, bn, b4row)

    out = pl.pallas_call(
        _fused_kernel,
        out_shape=jax.ShapeDtypeStruct((n * h, w), jnp.float32),
        in_specs=[_vmem()] * len(args),
        out_specs=_vmem(),
    )(*args)
    return out.reshape(n, 1, h, w)


# ------------------------------- pure-JAX reference -------------------------------

def _reference_forward(x, params):
    def bn(y, gamma, beta):
        mean = jnp.mean(y, axis=(0, 2, 3), keepdims=True)
        var = jnp.var(y, axis=(0, 2, 3), keepdims=True)
        return ((y - mean) * jax.lax.rsqrt(var + EPS)
                * gamma.reshape(1, -1, 1, 1) + beta.reshape(1, -1, 1, 1))

    def conv(y, wt, b):
        out = jax.lax.conv_general_dilated(
            y, wt, window_strides=(1, 1), padding=((1, 1), (1, 1)),
            dimension_numbers=("NCHW", "OIHW", "NCHW"))
        return out + b.reshape(1, -1, 1, 1)

    def pool(y):
        return jax.lax.reduce_window(y, -jnp.inf, jax.lax.max,
                                     (1, 1, 2, 2), (1, 1, 2, 2), "VALID")

    def deconv(y, wt, b):
        nn_, ci, hh, ww = y.shape
        co = wt.shape[1]
        out = jnp.zeros((nn_, co, 2 * hh, 2 * ww), jnp.float32)
        for dy in range(2):
            for dx in range(2):
                out = out.at[:, :, dy::2, dx::2].set(
                    jnp.einsum("nihw,io->nohw", y, wt[:, :, dy, dx]))
        return out + b.reshape(1, -1, 1, 1)

    y = jnp.maximum(bn(conv(x, params["w1"], params["b1"]), params["g1"], params["be1"]), 0.0)
    y = pool(y)
    y = jnp.maximum(bn(conv(y, params["w2"], params["b2"]), params["g2"], params["be2"]), 0.0)
    y = pool(y)
    y = jnp.maximum(bn(deconv(y, params["w3"], params["b3"]), params["g3"], params["be3"]), 0.0)
    y = jnp.maximum(deconv(y, params["w4"], params["b4"]), 0.0)
    return y


# ------------------------------------ params ------------------------------------

def init_params(key):
    ks = jax.random.split(key, 8)

    def uni(k, shape, fan_in):
        bound = 1.0 / jnp.sqrt(jnp.float32(fan_in))
        return jax.random.uniform(k, shape, jnp.float32, -bound, bound)

    return {
        # enc_block_1: Conv2d(1 -> 16, 3, pad=1), BN(16)
        "w1": uni(ks[0], (16, 1, 3, 3), 1 * 9),
        "b1": uni(ks[1], (16,), 1 * 9),
        "g1": jnp.ones((16,), jnp.float32),
        "be1": jnp.zeros((16,), jnp.float32),
        # enc_block_2: Conv2d(16 -> 4, 3, pad=1), BN(4)
        "w2": uni(ks[2], (4, 16, 3, 3), 16 * 9),
        "b2": uni(ks[3], (4,), 16 * 9),
        "g2": jnp.ones((4,), jnp.float32),
        "be2": jnp.zeros((4,), jnp.float32),
        # dec_block_1: ConvTranspose2d(4 -> 16, 2, stride=2), BN(16)
        "w3": uni(ks[4], (4, 16, 2, 2), 16 * 4),
        "b3": uni(ks[5], (16,), 16 * 4),
        "g3": jnp.ones((16,), jnp.float32),
        "be3": jnp.zeros((16,), jnp.float32),
        # dec_block_2: ConvTranspose2d(16 -> 1, 2, stride=2)
        "w4": uni(ks[6], (16, 1, 2, 2), 1 * 4),
        "b4": uni(ks[7], (1,), 1 * 4),
    }


if __name__ == "__main__":
    key = jax.random.PRNGKey(0)
    kx, kp = jax.random.split(key)
    x = jax.random.normal(kx, (2, 1, 16, 16), jnp.float32)   # NCHW, 1-channel images
    params = init_params(kp)

    fwd = jax.jit(conv_autoencoder_forward)
    out = fwd(x, params)
    jax.block_until_ready(out)

    assert out.shape == (2, 1, 16, 16), out.shape
    assert out.dtype == jnp.float32
    assert bool(jnp.all(jnp.isfinite(out)))

    ref = jax.jit(_reference_forward)(x, params)
    jax.block_until_ready(ref)
    max_err = float(jnp.max(jnp.abs(out - ref)))
    assert max_err < 2e-3, f"max abs err vs reference: {max_err}"

    print("KERNEL_OK")
</pallas_src>

<mosaic_0001>
module attributes {stable_mosaic.version = 11 : i64} {
  func.func @_fused_kernel(%arg0: memref<32x16xf32, #tpu.memory_space<vmem>>, %arg1: memref<48x256xf32, #tpu.memory_space<vmem>>, %arg2: memref<384x32xf32, #tpu.memory_space<vmem>>, %arg3: memref<2x16x128xf32, #tpu.memory_space<vmem>>, %arg4: memref<2x128x16xf32, #tpu.memory_space<vmem>>, %arg5: memref<256x16xf32, #tpu.memory_space<vmem>>, %arg6: memref<16x256xf32, #tpu.memory_space<vmem>>, %arg7: memref<32x4xf32, #tpu.memory_space<vmem>>, %arg8: memref<4x32xf32, #tpu.memory_space<vmem>>, %arg9: memref<128x16xf32, #tpu.memory_space<vmem>>, %arg10: memref<16x128xf32, #tpu.memory_space<vmem>>, %arg11: memref<16x32xf32, #tpu.memory_space<vmem>>, %arg12: memref<2x256x128xf32, #tpu.memory_space<vmem>>, %arg13: memref<8x16xf32, #tpu.memory_space<vmem>>, %arg14: memref<2x32x16xf32, #tpu.memory_space<vmem>>, %arg15: memref<2x16x8xf32, #tpu.memory_space<vmem>>, %arg16: memref<2x32x16xf32, #tpu.memory_space<vmem>>, %arg17: memref<8x16xf32, #tpu.memory_space<vmem>>, %arg18: memref<1x16xf32, #tpu.memory_space<vmem>>, %arg19: memref<32x16xf32, #tpu.memory_space<vmem>>) attributes {dimension_semantics = [], scalar_prefetch = 0 : i64, scratch_operands = 0 : i64, tpu.core_type = #tpu.core_type<tc>} {
    %c0 = arith.constant 0 : index
    %c0_0 = arith.constant 0 : index
    %0 = vector.load %arg17[%c0, %c0_0] : memref<8x16xf32, #tpu.memory_space<vmem>>, vector<8x16xf32>
    %c0_1 = arith.constant 0 : index
    %c0_2 = arith.constant 0 : index
    %1 = vector.load %arg0[%c0_1, %c0_2] : memref<32x16xf32, #tpu.memory_space<vmem>>, vector<32x16xf32>
    %2 = tpu.iota {dimensions = array<i32: 0>} : vector<32x16xi32>
    %c15_i32 = arith.constant 15 : i32
    %3 = vector.broadcast %c15_i32 : i32 to vector<32x16xi32>
    %4 = arith.andi %2, %3 : vector<32x16xi32>
    %c0_i32 = arith.constant 0 : i32
    %5 = vector.broadcast %c0_i32 : i32 to vector<32x16xi32>
    %6 = arith.cmpi eq, %4, %5 : vector<32x16xi32>
    %c1_i32 = arith.constant 1 : i32
    %7 = tpu.dynamic_rotate %1 by %c1_i32 dim 0 : vector<32x16xf32>, i32 -> vector<32x16xf32>
    %cst = arith.constant 0.000000e+00 : f32
    %8 = vector.broadcast %cst : f32 to vector<32x16xf32>
    %9 = arith.select %6, %8, %7 : vector<32x16xi1>, vector<32x16xf32>
    %c15_i32_3 = arith.constant 15 : i32
    %10 = vector.broadcast %c15_i32_3 : i32 to vector<32x16xi32>
    %11 = arith.cmpi eq, %4, %10 : vector<32x16xi32>
    %c31_i32 = arith.constant 31 : i32
    %12 = tpu.dynamic_rotate %1 by %c31_i32 dim 0 : vector<32x16xf32>, i32 -> vector<32x16xf32>
    %cst_4 = arith.constant 0.000000e+00 : f32
    %13 = vector.broadcast %cst_4 : f32 to vector<32x16xf32>
    %14 = arith.select %11, %13, %12 : vector<32x16xi1>, vector<32x16xf32>
    %c0_5 = arith.constant 0 : index
    %c0_6 = arith.constant 0 : index
    %15 = vector.load %arg1[%c0_5, %c0_6] : memref<48x256xf32, #tpu.memory_space<vmem>>, vector<16x256xf32>
    %cst_7 = arith.constant dense<0.000000e+00> : vector<32x256xf32>
    %16 = tpu.matmul %9, %15, %cst_7 {dimension_numbers = #tpu.dot_dimension_numbers<[1], [0], [0], [1], [0, 0, 1, 1], [], []>} : vector<32x16xf32>, vector<16x256xf32>, vector<32x256xf32> -> vector<32x256xf32>
    %c16 = arith.constant 16 : index
    %c0_8 = arith.constant 0 : index
    %17 = vector.load %arg1[%c16, %c0_8] : memref<48x256xf32, #tpu.memory_space<vmem>>, vector<16x256xf32>
    %cst_9 = arith.constant dense<0.000000e+00> : vector<32x256xf32>
    %18 = tpu.matmul %1, %17, %cst_9 {dimension_numbers = #tpu.dot_dimension_numbers<[1], [0], [0], [1], [0, 0, 1, 1], [], []>} : vector<32x16xf32>, vector<16x256xf32>, vector<32x256xf32> -> vector<32x256xf32>
    %19 = arith.addf %16, %18 : vector<32x256xf32>
    %c32 = arith.constant 32 : index
    %c0_10 = arith.constant 0 : index
    %20 = vector.load %arg1[%c32, %c0_10] : memref<48x256xf32, #tpu.memory_space<vmem>>, vector<16x256xf32>
    %cst_11 = arith.constant dense<0.000000e+00> : vector<32x256xf32>
    %21 = tpu.matmul %14, %20, %cst_11 {dimension_numbers = #tpu.dot_dimension_numbers<[1], [0], [0], [1], [0, 0, 1, 1], [], []>} : vector<32x16xf32>, vector<16x256xf32>, vector<32x256xf32> -> vector<32x256xf32>
    %22 = arith.addf %19, %21 : vector<32x256xf32>
    %23 = vector.extract_strided_slice %0 {offsets = [0, 0], sizes = [1, 16], strides = [1, 1]} : vector<8x16xf32> to vector<1x16xf32>
    %24 = vector.extract_strided_slice %0 {offsets = [1, 0], sizes = [1, 16], strides = [1, 1]} : vector<8x16xf32> to vector<1x16xf32>
    %c0_12 = arith.constant 0 : index
    %c0_13 = arith.constant 0 : index
    %25 = vector.load %arg5[%c0_12, %c0_13] : memref<256x16xf32, #tpu.memory_space<vmem>>, vector<256x16xf32>
    %c0_14 = arith.constant 0 : index
    %c0_15 = arith.constant 0 : index
    %26 = vector.load %arg6[%c0_14, %c0_15] : memref<16x256xf32, #tpu.memory_space<vmem>>, vector<16x256xf32>
    %cst_16 = arith.constant dense<0.000000e+00> : vector<256xf32>
    %27 = vector.multi_reduction <add>, %22, %cst_16 [0] : vector<32x256xf32> to vector<256xf32>
    %28 = vector.shape_cast %27 : vector<256xf32> to vector<1x256xf32>
    %cst_17 = arith.constant dense<0.000000e+00> : vector<1x16xf32>
    %29 = tpu.matmul %28, %25, %cst_17 {dimension_numbers = #tpu.dot_dimension_numbers<[1], [0], [0], [1], [0, 0, 1, 1], [], []>} : vector<1x256xf32>, vector<256x16xf32>, vector<1x16xf32> -> vector<1x16xf32>
    %cst_18 = arith.constant 0.001953125 : f32
    %30 = vector.broadcast %cst_18 : f32 to vector<1x16xf32>
    %31 = arith.mulf %29, %30 : vector<1x16xf32>
    %cst_19 = arith.constant dense<0.000000e+00> : vector<1x256xf32>
    %32 = tpu.matmul %31, %26, %cst_19 {dimension_numbers = #tpu.dot_dimension_numbers<[1], [0], [0], [1], [0, 0, 1, 1], [], []>} : vector<1x16xf32>, vector<16x256xf32>, vector<1x256xf32> -> vector<1x256xf32>
    %33 = vector.broadcast %32 : vector<1x256xf32> to vector<32x256xf32>
    %34 = arith.subf %22, %33 : vector<32x256xf32>
    %35 = arith.mulf %34, %34 : vector<32x256xf32>
    %cst_20 = arith.constant dense<0.000000e+00> : vector<256xf32>
    %36 = vector.multi_reduction <add>, %35, %cst_20 [0] : vector<32x256xf32> to vector<256xf32>
    %37 = vector.shape_cast %36 : vector<256xf32> to vector<1x256xf32>
    %cst_21 = arith.constant dense<0.000000e+00> : vector<1x16xf32>
    %38 = tpu.matmul %37, %25, %cst_21 {dimension_numbers = #tpu.dot_dimension_numbers<[1], [0], [0], [1], [0, 0, 1, 1], [], []>} : vector<1x256xf32>, vector<256x16xf32>, vector<1x16xf32> -> vector<1x16xf32>
    %cst_22 = arith.constant 0.001953125 : f32
    %39 = vector.broadcast %cst_22 : f32 to vector<1x16xf32>
    %40 = arith.mulf %38, %39 : vector<1x16xf32>
    %cst_23 = arith.constant 9.99999974E-6 : f32
    %41 = vector.broadcast %cst_23 : f32 to vector<1x16xf32>
    %42 = arith.addf %40, %41 : vector<1x16xf32>
    %43 = math.rsqrt %42 : vector<1x16xf32>
    %44 = arith.mulf %43, %23 : vector<1x16xf32>
    %cst_24 = arith.constant dense<0.000000e+00> : vector<1x256xf32>
    %45 = tpu.matmul %44, %26, %cst_24 {dimension_numbers = #tpu.dot_dimension_numbers<[1], [0], [0], [1], [0, 0, 1, 1], [], []>} : vector<1x16xf32>, vector<16x256xf32>, vector<1x256xf32> -> vector<1x256xf32>
    %46 = vector.broadcast %45 : vector<1x256xf32> to vector<32x256xf32>
    %47 = arith.mulf %34, %46 : vector<32x256xf32>
    %cst_25 = arith.constant dense<0.000000e+00> : vector<1x256xf32>
    %48 = tpu.matmul %24, %26, %cst_25 {dimension_numbers = #tpu.dot_dimension_numbers<[1], [0], [0], [1], [0, 0, 1, 1], [], []>} : vector<1x16xf32>, vector<16x256xf32>, vector<1x256xf32> -> vector<1x256xf32>
    %49 = vector.broadcast %48 : vector<1x256xf32> to vector<32x256xf32>
    %50 = arith.addf %47, %49 : vector<32x256xf32>
    %cst_26 = arith.constant 0.000000e+00 : f32
    %51 = vector.broadcast %cst_26 : f32 to vector<32x256xf32>
    %52 = arith.maximumf %50, %51 : vector<32x256xf32>
    %c31_i32_27 = arith.constant 31 : i32
    %53 = tpu.dynamic_rotate %52 by %c31_i32_27 dim 0 : vector<32x256xf32>, i32 -> vector<32x256xf32>
    %54 = arith.maximumf %52, %53 : vector<32x256xf32>
    %c0_28 = arith.constant 0 : index
    %c0_29 = arith.constant 0 : index
    %55 = vector.load %arg11[%c0_28, %c0_29] : memref<16x32xf32, #tpu.memory_space<vmem>>, vector<16x32xf32>
    %cst_30 = arith.constant dense<0.000000e+00> : vector<16x256xf32>
    %56 = tpu.matmul %55, %54, %cst_30 {dimension_numbers = #tpu.dot_dimension_numbers<[1], [0], [0], [1], [0, 0, 1, 1], [], []>} : vector<16x32xf32>, vector<32x256xf32>, vector<16x256xf32> -> vector<16x256xf32>
    %c0_31 = arith.constant 0 : index
    %c0_32 = arith.constant 0 : index
    %c0_33 = arith.constant 0 : index
    %57 = vector.load %arg12[%c0_31, %c0_32, %c0_33] : memref<2x256x128xf32, #tpu.memory_space<vmem>>, vector<1x256x128xf32>
    %58 = vector.shape_cast %57 : vector<1x256x128xf32> to vector<256x128xf32>
    %cst_34 = arith.constant dense<0.000000e+00> : vector<16x128xf32>
    %59 = tpu.matmul %56, %58, %cst_34 {dimension_numbers = #tpu.dot_dimension_numbers<[1], [0], [0], [1], [0, 0, 1, 1], [], []>} : vector<16x256xf32>, vector<256x128xf32>, vector<16x128xf32> -> vector<16x128xf32>
    %c1 = arith.constant 1 : index
    %c0_35 = arith.constant 0 : index
    %c0_36 = arith.constant 0 : index
    %60 = vector.load %arg12[%c1, %c0_35, %c0_36] : memref<2x256x128xf32, #tpu.memory_space<vmem>>, vector<1x256x128xf32>
    %61 = vector.shape_cast %60 : vector<1x256x128xf32> to vector<256x128xf32>
    %cst_37 = arith.constant dense<0.000000e+00> : vector<16x128xf32>
    %62 = tpu.matmul %56, %61, %cst_37 {dimension_numbers = #tpu.dot_dimension_numbers<[1], [0], [0], [1], [0, 0, 1, 1], [], []>} : vector<16x256xf32>, vector<256x128xf32>, vector<16x128xf32> -> vector<16x128xf32>
    %63 = arith.maximumf %59, %62 : vector<16x128xf32>
    %64 = tpu.iota {dimensions = array<i32: 0>} : vector<16x128xi32>
    %c7_i32 = arith.constant 7 : i32
    %65 = vector.broadcast %c7_i32 : i32 to vector<16x128xi32>
    %66 = arith.andi %64, %65 : vector<16x128xi32>
    %c0_i32_38 = arith.constant 0 : i32
    %67 = vector.broadcast %c0_i32_38 : i32 to vector<16x128xi32>
    %68 = arith.cmpi eq, %66, %67 : vector<16x128xi32>
    %c1_i32_39 = arith.constant 1 : i32
    %69 = tpu.dynamic_rotate %63 by %c1_i32_39 dim 0 : vector<16x128xf32>, i32 -> vector<16x128xf32>
    %cst_40 = arith.constant 0.000000e+00 : f32
    %70 = vector.broadcast %cst_40 : f32 to vector<16x128xf32>
    %71 = arith.select %68, %70, %69 : vector<16x128xi1>, vector<16x128xf32>
    %c7_i32_41 = arith.constant 7 : i32
    %72 = vector.broadcast %c7_i32_41 : i32 to vector<16x128xi32>
    %73 = arith.cmpi eq, %66, %72 : vector<16x128xi32>
    %c15_i32_42 = arith.constant 15 : i32
    %74 = tpu.dynamic_rotate %63 by %c15_i32_42 dim 0 : vector<16x128xf32>, i32 -> vector<16x128xf32>
    %cst_43 = arith.constant 0.000000e+00 : f32
    %75 = vector.broadcast %cst_43 : f32 to vector<16x128xf32>
    %76 = arith.select %73, %75, %74 : vector<16x128xi1>, vector<16x128xf32>
    %77 = tpu.concatenate %71, %63, %76 in 1 : vector<16x128xf32>, vector<16x128xf32>, vector<16x128xf32> -> vector<16x384xf32>
    %c0_44 = arith.constant 0 : index
    %c0_45 = arith.constant 0 : index
    %78 = vector.load %arg2[%c0_44, %c0_45] : memref<384x32xf32, #tpu.memory_space<vmem>>, vector<384x32xf32>
    %cst_46 = arith.constant dense<0.000000e+00> : vector<16x32xf32>
    %79 = tpu.matmul %77, %78, %cst_46 {dimension_numbers = #tpu.dot_dimension_numbers<[1], [0], [0], [1], [0, 0, 1, 1], [], []>} : vector<16x384xf32>, vector<384x32xf32>, vector<16x32xf32> -> vector<16x32xf32>
    %80 = vector.extract_strided_slice %0 {offsets = [2, 0], sizes = [1, 4], strides = [1, 1]} : vector<8x16xf32> to vector<1x4xf32>
    %81 = vector.extract_strided_slice %0 {offsets = [3, 0], sizes = [1, 4], strides = [1, 1]} : vector<8x16xf32> to vector<1x4xf32>
    %c0_47 = arith.constant 0 : index
    %c0_48 = arith.constant 0 : index
    %82 = vector.load %arg7[%c0_47, %c0_48] : memref<32x4xf32, #tpu.memory_space<vmem>>, vector<32x4xf32>
    %c0_49 = arith.constant 0 : index
    %c0_50 = arith.constant 0 : index
    %83 = vector.load %arg8[%c0_49, %c0_50] : memref<4x32xf32, #tpu.memory_space<vmem>>, vector<4x32xf32>
    %cst_51 = arith.constant dense<0.000000e+00> : vector<32xf32>
    %84 = vector.multi_reduction <add>, %79, %cst_51 [0] : vector<16x32xf32> to vector<32xf32>
    %85 = vector.shape_cast %84 : vector<32xf32> to vector<1x32xf32>
    %cst_52 = arith.constant dense<0.000000e+00> : vector<1x4xf32>
    %86 = tpu.matmul %85, %82, %cst_52 {dimension_numbers = #tpu.dot_dimension_numbers<[1], [0], [0], [1], [0, 0, 1, 1], [], []>} : vector<1x32xf32>, vector<32x4xf32>, vector<1x4xf32> -> vector<1x4xf32>
    %cst_53 = arith.constant 7.812500e-03 : f32
    %87 = vector.broadcast %cst_53 : f32 to vector<1x4xf32>
    %88 = arith.mulf %86, %87 : vector<1x4xf32>
    %cst_54 = arith.constant dense<0.000000e+00> : vector<1x32xf32>
    %89 = tpu.matmul %88, %83, %cst_54 {dimension_numbers = #tpu.dot_dimension_numbers<[1], [0], [0], [1], [0, 0, 1, 1], [], []>} : vector<1x4xf32>, vector<4x32xf32>, vector<1x32xf32> -> vector<1x32xf32>
    %90 = vector.broadcast %89 : vector<1x32xf32> to vector<16x32xf32>
    %91 = arith.subf %79, %90 : vector<16x32xf32>
    %92 = arith.mulf %91, %91 : vector<16x32xf32>
    %cst_55 = arith.constant dense<0.000000e+00> : vector<32xf32>
    %93 = vector.multi_reduction <add>, %92, %cst_55 [0] : vector<16x32xf32> to vector<32xf32>
    %94 = vector.shape_cast %93 : vector<32xf32> to vector<1x32xf32>
    %cst_56 = arith.constant dense<0.000000e+00> : vector<1x4xf32>
    %95 = tpu.matmul %94, %82, %cst_56 {dimension_numbers = #tpu.dot_dimension_numbers<[1], [0], [0], [1], [0, 0, 1, 1], [], []>} : vector<1x32xf32>, vector<32x4xf32>, vector<1x4xf32> -> vector<1x4xf32>
    %cst_57 = arith.constant 7.812500e-03 : f32
    %96 = vector.broadcast %cst_57 : f32 to vector<1x4xf32>
    %97 = arith.mulf %95, %96 : vector<1x4xf32>
    %cst_58 = arith.constant 9.99999974E-6 : f32
    %98 = vector.broadcast %cst_58 : f32 to vector<1x4xf32>
    %99 = arith.addf %97, %98 : vector<1x4xf32>
    %100 = math.rsqrt %99 : vector<1x4xf32>
    %101 = arith.mulf %100, %80 : vector<1x4xf32>
    %cst_59 = arith.constant dense<0.000000e+00> : vector<1x32xf32>
    %102 = tpu.matmul %101, %83, %cst_59 {dimension_numbers = #tpu.dot_dimension_numbers<[1], [0], [0], [1], [0, 0, 1, 1], [], []>} : vector<1x4xf32>, vector<4x32xf32>, vector<1x32xf32> -> vector<1x32xf32>
    %103 = vector.broadcast %102 : vector<1x32xf32> to vector<16x32xf32>
    %104 = arith.mulf %91, %103 : vector<16x32xf32>
    %cst_60 = arith.constant dense<0.000000e+00> : vector<1x32xf32>
    %105 = tpu.matmul %81, %83, %cst_60 {dimension_numbers = #tpu.dot_dimension_numbers<[1], [0], [0], [1], [0, 0, 1, 1], [], []>} : vector<1x4xf32>, vector<4x32xf32>, vector<1x32xf32> -> vector<1x32xf32>
    %106 = vector.broadcast %105 : vector<1x32xf32> to vector<16x32xf32>
    %107 = arith.addf %104, %106 : vector<16x32xf32>
    %cst_61 = arith.constant 0.000000e+00 : f32
    %108 = vector.broadcast %cst_61 : f32 to vector<16x32xf32>
    %109 = arith.maximumf %107, %108 : vector<16x32xf32>
    %c15_i32_62 = arith.constant 15 : i32
    %110 = tpu.dynamic_rotate %109 by %c15_i32_62 dim 0 : vector<16x32xf32>, i32 -> vector<16x32xf32>
    %111 = arith.maximumf %109, %110 : vector<16x32xf32>
    %c0_63 = arith.constant 0 : index
    %c0_64 = arith.constant 0 : index
    %112 = vector.load %arg13[%c0_63, %c0_64] : memref<8x16xf32, #tpu.memory_space<vmem>>, vector<8x16xf32>
    %cst_65 = arith.constant dense<0.000000e+00> : vector<8x32xf32>
    %113 = tpu.matmul %112, %111, %cst_65 {dimension_numbers = #tpu.dot_dimension_numbers<[1], [0], [0], [1], [0, 0, 1, 1], [], []>} : vector<8x16xf32>, vector<16x32xf32>, vector<8x32xf32> -> vector<8x32xf32>
    %c0_66 = arith.constant 0 : index
    %c0_67 = arith.constant 0 : index
    %c0_68 = arith.constant 0 : index
    %114 = vector.load %arg14[%c0_66, %c0_67, %c0_68] : memref<2x32x16xf32, #tpu.memory_space<vmem>>, vector<1x32x16xf32>
    %115 = vector.shape_cast %114 : vector<1x32x16xf32> to vector<32x16xf32>
    %cst_69 = arith.constant dense<0.000000e+00> : vector<8x16xf32>
    %116 = tpu.matmul %113, %115, %cst_69 {dimension_numbers = #tpu.dot_dimension_numbers<[1], [0], [0], [1], [0, 0, 1, 1], [], []>} : vector<8x32xf32>, vector<32x16xf32>, vector<8x16xf32> -> vector<8x16xf32>
    %c1_70 = arith.constant 1 : index
    %c0_71 = arith.constant 0 : index
    %c0_72 = arith.constant 0 : index
    %117 = vector.load %arg14[%c1_70, %c0_71, %c0_72] : memref<2x32x16xf32, #tpu.memory_space<vmem>>, vector<1x32x16xf32>
    %118 = vector.shape_cast %117 : vector<1x32x16xf32> to vector<32x16xf32>
    %cst_73 = arith.constant dense<0.000000e+00> : vector<8x16xf32>
    %119 = tpu.matmul %113, %118, %cst_73 {dimension_numbers = #tpu.dot_dimension_numbers<[1], [0], [0], [1], [0, 0, 1, 1], [], []>} : vector<8x32xf32>, vector<32x16xf32>, vector<8x16xf32> -> vector<8x16xf32>
    %120 = arith.maximumf %116, %119 : vector<8x16xf32>
    %c0_74 = arith.constant 0 : index
    %c0_75 = arith.constant 0 : index
    %c0_76 = arith.constant 0 : index
    %121 = vector.load %arg15[%c0_74, %c0_75, %c0_76] : memref<2x16x8xf32, #tpu.memory_space<vmem>>, vector<1x16x8xf32>
    %122 = vector.shape_cast %121 : vector<1x16x8xf32> to vector<16x8xf32>
    %c0_77 = arith.constant 0 : index
    %c0_78 = arith.constant 0 : index
    %c0_79 = arith.constant 0 : index
    %123 = vector.load %arg3[%c0_77, %c0_78, %c0_79] : memref<2x16x128xf32, #tpu.memory_space<vmem>>, vector<1x16x128xf32>
    %124 = vector.shape_cast %123 : vector<1x16x128xf32> to vector<16x128xf32>
    %cst_80 = arith.constant dense<0.000000e+00> : vector<8x128xf32>
    %125 = tpu.matmul %120, %124, %cst_80 {dimension_numbers = #tpu.dot_dimension_numbers<[1], [0], [0], [1], [0, 0, 1, 1], [], []>} : vector<8x16xf32>, vector<16x128xf32>, vector<8x128xf32> -> vector<8x128xf32>
    %cst_81 = arith.constant dense<0.000000e+00> : vector<16x128xf32>
    %126 = tpu.matmul %122, %125, %cst_81 {dimension_numbers = #tpu.dot_dimension_numbers<[1], [0], [0], [1], [0, 0, 1, 1], [], []>} : vector<16x8xf32>, vector<8x128xf32>, vector<16x128xf32> -> vector<16x128xf32>
    %c1_82 = arith.constant 1 : index
    %c0_83 = arith.constant 0 : index
    %c0_84 = arith.constant 0 : index
    %127 = vector.load %arg15[%c1_82, %c0_83, %c0_84] : memref<2x16x8xf32, #tpu.memory_space<vmem>>, vector<1x16x8xf32>
    %128 = vector.shape_cast %127 : vector<1x16x8xf32> to vector<16x8xf32>
    %c1_85 = arith.constant 1 : index
    %c0_86 = arith.constant 0 : index
    %c0_87 = arith.constant 0 : index
    %129 = vector.load %arg3[%c1_85, %c0_86, %c0_87] : memref<2x16x128xf32, #tpu.memory_space<vmem>>, vector<1x16x128xf32>
    %130 = vector.shape_cast %129 : vector<1x16x128xf32> to vector<16x128xf32>
    %cst_88 = arith.constant dense<0.000000e+00> : vector<8x128xf32>
    %131 = tpu.matmul %120, %130, %cst_88 {dimension_numbers = #tpu.dot_dimension_numbers<[1], [0], [0], [1], [0, 0, 1, 1], [], []>} : vector<8x16xf32>, vector<16x128xf32>, vector<8x128xf32> -> vector<8x128xf32>
    %cst_89 = arith.constant dense<0.000000e+00> : vector<16x128xf32>
    %132 = tpu.matmul %128, %131, %cst_89 {dimension_numbers = #tpu.dot_dimension_numbers<[1], [0], [0], [1], [0, 0, 1, 1], [], []>} : vector<16x8xf32>, vector<8x128xf32>, vector<16x128xf32> -> vector<16x128xf32>
    %133 = arith.addf %126, %132 : vector<16x128xf32>
    %134 = vector.extract_strided_slice %0 {offsets = [4, 0], sizes = [1, 16], strides = [1, 1]} : vector<8x16xf32> to vector<1x16xf32>
    %135 = vector.extract_strided_slice %0 {offsets = [5, 0], sizes = [1, 16], strides = [1, 1]} : vector<8x16xf32> to vector<1x16xf32>
    %c0_90 = arith.constant 0 : index
    %c0_91 = arith.constant 0 : index
    %136 = vector.load %arg9[%c0_90, %c0_91] : memref<128x16xf32, #tpu.memory_space<vmem>>, vector<128x16xf32>
    %c0_92 = arith.constant 0 : index
    %c0_93 = arith.constant 0 : index
    %137 = vector.load %arg10[%c0_92, %c0_93] : memref<16x128xf32, #tpu.memory_space<vmem>>, vector<16x128xf32>
    %cst_94 = arith.constant dense<0.000000e+00> : vector<128xf32>
    %138 = vector.multi_reduction <add>, %133, %cst_94 [0] : vector<16x128xf32> to vector<128xf32>
    %139 = vector.shape_cast %138 : vector<128xf32> to vector<1x128xf32>
    %cst_95 = arith.constant dense<0.000000e+00> : vector<1x16xf32>
    %140 = tpu.matmul %139, %136, %cst_95 {dimension_numbers = #tpu.dot_dimension_numbers<[1], [0], [0], [1], [0, 0, 1, 1], [], []>} : vector<1x128xf32>, vector<128x16xf32>, vector<1x16xf32> -> vector<1x16xf32>
    %cst_96 = arith.constant 7.812500e-03 : f32
    %141 = vector.broadcast %cst_96 : f32 to vector<1x16xf32>
    %142 = arith.mulf %140, %141 : vector<1x16xf32>
    %cst_97 = arith.constant dense<0.000000e+00> : vector<1x128xf32>
    %143 = tpu.matmul %142, %137, %cst_97 {dimension_numbers = #tpu.dot_dimension_numbers<[1], [0], [0], [1], [0, 0, 1, 1], [], []>} : vector<1x16xf32>, vector<16x128xf32>, vector<1x128xf32> -> vector<1x128xf32>
    %144 = vector.broadcast %143 : vector<1x128xf32> to vector<16x128xf32>
    %145 = arith.subf %133, %144 : vector<16x128xf32>
    %146 = arith.mulf %145, %145 : vector<16x128xf32>
    %cst_98 = arith.constant dense<0.000000e+00> : vector<128xf32>
    %147 = vector.multi_reduction <add>, %146, %cst_98 [0] : vector<16x128xf32> to vector<128xf32>
    %148 = vector.shape_cast %147 : vector<128xf32> to vector<1x128xf32>
    %cst_99 = arith.constant dense<0.000000e+00> : vector<1x16xf32>
    %149 = tpu.matmul %148, %136, %cst_99 {dimension_numbers = #tpu.dot_dimension_numbers<[1], [0], [0], [1], [0, 0, 1, 1], [], []>} : vector<1x128xf32>, vector<128x16xf32>, vector<1x16xf32> -> vector<1x16xf32>
    %cst_100 = arith.constant 7.812500e-03 : f32
    %150 = vector.broadcast %cst_100 : f32 to vector<1x16xf32>
    %151 = arith.mulf %149, %150 : vector<1x16xf32>
    %cst_101 = arith.constant 9.99999974E-6 : f32
    %152 = vector.broadcast %cst_101 : f32 to vector<1x16xf32>
    %153 = arith.addf %151, %152 : vector<1x16xf32>
    %154 = math.rsqrt %153 : vector<1x16xf32>
    %155 = arith.mulf %154, %134 : vector<1x16xf32>
    %cst_102 = arith.constant dense<0.000000e+00> : vector<1x128xf32>
    %156 = tpu.matmul %155, %137, %cst_102 {dimension_numbers = #tpu.dot_dimension_numbers<[1], [0], [0], [1], [0, 0, 1, 1], [], []>} : vector<1x16xf32>, vector<16x128xf32>, vector<1x128xf32> -> vector<1x128xf32>
    %157 = vector.broadcast %156 : vector<1x128xf32> to vector<16x128xf32>
    %158 = arith.mulf %145, %157 : vector<16x128xf32>
    %cst_103 = arith.constant dense<0.000000e+00> : vector<1x128xf32>
    %159 = tpu.matmul %135, %137, %cst_103 {dimension_numbers = #tpu.dot_dimension_numbers<[1], [0], [0], [1], [0, 0, 1, 1], [], []>} : vector<1x16xf32>, vector<16x128xf32>, vector<1x128xf32> -> vector<1x128xf32>
    %160 = vector.broadcast %159 : vector<1x128xf32> to vector<16x128xf32>
    %161 = arith.addf %158, %160 : vector<16x128xf32>
    %cst_104 = arith.constant 0.000000e+00 : f32
    %162 = vector.broadcast %cst_104 : f32 to vector<16x128xf32>
    %163 = arith.maximumf %161, %162 : vector<16x128xf32>
    %c0_105 = arith.constant 0 : index
    %c0_106 = arith.constant 0 : index
    %c0_107 = arith.constant 0 : index
    %164 = vector.load %arg16[%c0_105, %c0_106, %c0_107] : memref<2x32x16xf32, #tpu.memory_space<vmem>>, vector<1x32x16xf32>
    %165 = vector.shape_cast %164 : vector<1x32x16xf32> to vector<32x16xf32>
    %c0_108 = arith.constant 0 : index
    %c0_109 = arith.constant 0 : index
    %c0_110 = arith.constant 0 : index
    %166 = vector.load %arg4[%c0_108, %c0_109, %c0_110] : memref<2x128x16xf32, #tpu.memory_space<vmem>>, vector<1x128x16xf32>
    %167 = vector.shape_cast %166 : vector<1x128x16xf32> to vector<128x16xf32>
    %cst_111 = arith.constant dense<0.000000e+00> : vector<16x16xf32>
    %168 = tpu.matmul %163, %167, %cst_111 {dimension_numbers = #tpu.dot_dimension_numbers<[1], [0], [0], [1], [0, 0, 1, 1], [], []>} : vector<16x128xf32>, vector<128x16xf32>, vector<16x16xf32> -> vector<16x16xf32>
    %cst_112 = arith.constant dense<0.000000e+00> : vector<32x16xf32>
    %169 = tpu.matmul %165, %168, %cst_112 {dimension_numbers = #tpu.dot_dimension_numbers<[1], [0], [0], [1], [0, 0, 1, 1], [], []>} : vector<32x16xf32>, vector<16x16xf32>, vector<32x16xf32> -> vector<32x16xf32>
    %c1_113 = arith.constant 1 : index
    %c0_114 = arith.constant 0 : index
    %c0_115 = arith.constant 0 : index
    %170 = vector.load %arg16[%c1_113, %c0_114, %c0_115] : memref<2x32x16xf32, #tpu.memory_space<vmem>>, vector<1x32x16xf32>
    %171 = vector.shape_cast %170 : vector<1x32x16xf32> to vector<32x16xf32>
    %c1_116 = arith.constant 1 : index
    %c0_117 = arith.constant 0 : index
    %c0_118 = arith.constant 0 : index
    %172 = vector.load %arg4[%c1_116, %c0_117, %c0_118] : memref<2x128x16xf32, #tpu.memory_space<vmem>>, vector<1x128x16xf32>
    %173 = vector.shape_cast %172 : vector<1x128x16xf32> to vector<128x16xf32>
    %cst_119 = arith.constant dense<0.000000e+00> : vector<16x16xf32>
    %174 = tpu.matmul %163, %173, %cst_119 {dimension_numbers = #tpu.dot_dimension_numbers<[1], [0], [0], [1], [0, 0, 1, 1], [], []>} : vector<16x128xf32>, vector<128x16xf32>, vector<16x16xf32> -> vector<16x16xf32>
    %cst_120 = arith.constant dense<0.000000e+00> : vector<32x16xf32>
    %175 = tpu.matmul %171, %174, %cst_120 {dimension_numbers = #tpu.dot_dimension_numbers<[1], [0], [0], [1], [0, 0, 1, 1], [], []>} : vector<32x16xf32>, vector<16x16xf32>, vector<32x16xf32> -> vector<32x16xf32>
    %176 = arith.addf %169, %175 : vector<32x16xf32>
    %c0_121 = arith.constant 0 : index
    %c0_122 = arith.constant 0 : index
    %177 = vector.load %arg18[%c0_121, %c0_122] : memref<1x16xf32, #tpu.memory_space<vmem>>, vector<1x16xf32>
    %178 = vector.broadcast %177 : vector<1x16xf32> to vector<32x16xf32>
    %179 = arith.addf %176, %178 : vector<32x16xf32>
    %cst_123 = arith.constant 0.000000e+00 : f32
    %180 = vector.broadcast %cst_123 : f32 to vector<32x16xf32>
    %181 = arith.maximumf %179, %180 : vector<32x16xf32>
    %c0_124 = arith.constant 0 : index
    %c0_125 = arith.constant 0 : index
    %182 = vector.load %arg19[%c0_124, %c0_125] : memref<32x16xf32, #tpu.memory_space<vmem>>, vector<32x16xf32>
    tpu.vector_store %arg19[%c0_124, %c0_125], %181 {strides = array<i32>} : memref<32x16xf32, #tpu.memory_space<vmem>>, vector<32x16xf32>,
    return
  }
}

</mosaic_0001>

<llo_original>
// kernel: conv_autoencoder_forward.1
$region0: #{conv_autoencoder_forward.1}
  #allocation0 [shape = 'u32[]', space=smem, size = 0x4, offset = 0x4, fixed_abs, tag = 'smem constant byte address 0x4 - core index']
  #allocation1 [shape = 'u32[144,128]{1,0:T(1,128)}', space=vmem, size = 0x12000, scoped, tag = 'internal scratch']
  %s0 = inlined_call_operand.vmem [shape: f32[32,16], index: 0, kind: input, shape index: {}]
  %s1 = inlined_call_operand.vmem [shape: f32[48,256], index: 1, kind: input, shape index: {}]
  %s2 = inlined_call_operand.vmem [shape: f32[384,32], index: 2, kind: input, shape index: {}]
  %s3 = inlined_call_operand.vmem [shape: f32[2,16,128], index: 3, kind: input, shape index: {}]
  %s4 = inlined_call_operand.vmem [shape: f32[2,128,16], index: 4, kind: input, shape index: {}]
  %s5 = inlined_call_operand.vmem [shape: f32[256,16], index: 5, kind: input, shape index: {}]
  %s6 = inlined_call_operand.vmem [shape: f32[16,256], index: 6, kind: input, shape index: {}]
  %s7 = inlined_call_operand.vmem [shape: f32[32,4], index: 7, kind: input, shape index: {}]
  %s8 = inlined_call_operand.vmem [shape: f32[4,32], index: 8, kind: input, shape index: {}]
  %s9 = inlined_call_operand.vmem [shape: f32[128,16], index: 9, kind: input, shape index: {}]
  %s10 = inlined_call_operand.vmem [shape: f32[16,128], index: 10, kind: input, shape index: {}]
  %s11 = inlined_call_operand.vmem [shape: f32[16,32], index: 11, kind: input, shape index: {}]
  %s12 = inlined_call_operand.vmem [shape: f32[2,256,128], index: 12, kind: input, shape index: {}]
  %s13 = inlined_call_operand.vmem [shape: f32[8,16], index: 13, kind: input, shape index: {}]
  %s14 = inlined_call_operand.vmem [shape: f32[2,32,16], index: 14, kind: input, shape index: {}]
  %s15 = inlined_call_operand.vmem [shape: f32[2,16,8], index: 15, kind: input, shape index: {}]
  %s16 = inlined_call_operand.vmem [shape: f32[2,32,16], index: 16, kind: input, shape index: {}]
  %s17 = inlined_call_operand.vmem [shape: f32[8,16], index: 17, kind: input, shape index: {}]
  %s18 = inlined_call_operand.vmem [shape: f32[1,16], index: 18, kind: input, shape index: {}]
  %s19 = inlined_call_operand.hbm [shape: f32[32,16], index: 19, kind: output, shape index: {}]
  %s20 = sld [smem:[#allocation0]]
  $region86: #{conv_autoencoder_forward.1} parent=0
    _
  %s22 = ssub.s32 1, %s20
  %s23 = scalar_select 0, %s22, %s20
  $region1: #{conv_autoencoder_forward.1} parent=0
    #allocation2 [shape = 'u8[16384]{0}', space=vmem, size = 0x4000, scoped, tag = 'output window, operand 0, single buffered']
    #allocation3 [shape = 's32[1]{0}', space=sflag, size = 0x4, scoped, tag = 'scoped memory for conv_autoencoder_forward.1']
    %24 = vsyncpa [#allocation3], 0
    // Predicated region
    $region2: #{conv_autoencoder_forward.1} parent=1 // pred_check
      _
    $region3: #{conv_autoencoder_forward.1} parent=1 // pred_check_branch
      %26 = sbr.rel (0) target = $region5
    $region4: #{conv_autoencoder_forward.1} parent=1 // pred_region
      _
    $region5: #{conv_autoencoder_forward.1} parent=1 // pred_fallthru
      _
    // Predicated region
    $region6: #{conv_autoencoder_forward.1} parent=1 // pred_check
      _
    $region7: #{conv_autoencoder_forward.1} parent=1 // pred_check_branch
      %28 = sbr.rel (0) target = $region9
    $region8: #{conv_autoencoder_forward.1} parent=1 // pred_region
      _
    $region9: #{conv_autoencoder_forward.1} parent=1 // pred_fallthru
      _
    // Predicated region
    $region10: #{conv_autoencoder_forward.1} parent=1 // pred_check
      _
    $region11: #{conv_autoencoder_forward.1} parent=1 // pred_check_branch
      %30 = sbr.rel (0) target = $region13
    $region12: #{conv_autoencoder_forward.1} parent=1 // pred_region
      _
    $region13: #{conv_autoencoder_forward.1} parent=1 // pred_fallthru
      _
    // Predicated region
    $region14: #{conv_autoencoder_forward.1} parent=1 // pred_check
      _
    $region15: #{conv_autoencoder_forward.1} parent=1 // pred_check_branch
      %32 = sbr.rel (0) target = $region17
    $region16: #{conv_autoencoder_forward.1} parent=1 // pred_region
      _
    $region17: #{conv_autoencoder_forward.1} parent=1 // pred_fallthru
      _
    // Predicated region
    $region18: #{conv_autoencoder_forward.1} parent=1 // pred_check
      _
    $region19: #{conv_autoencoder_forward.1} parent=1 // pred_check_branch
      %34 = sbr.rel (0) target = $region21
    $region20: #{conv_autoencoder_forward.1} parent=1 // pred_region
      _
    $region21: #{conv_autoencoder_forward.1} parent=1 // pred_fallthru
      _
    // Predicated region
    $region22: #{conv_autoencoder_forward.1} parent=1 // pred_check
      _
    $region23: #{conv_autoencoder_forward.1} parent=1 // pred_check_branch
      %36 = sbr.rel (0) target = $region25
    $region24: #{conv_autoencoder_forward.1} parent=1 // pred_region
      _
    $region25: #{conv_autoencoder_forward.1} parent=1 // pred_fallthru
      _
    // Predicated region
    $region26: #{conv_autoencoder_forward.1} parent=1 // pred_check
      _
    $region27: #{conv_autoencoder_forward.1} parent=1 // pred_check_branch
      %38 = sbr.rel (0) target = $region29
    $region28: #{conv_autoencoder_forward.1} parent=1 // pred_region
      _
    $region29: #{conv_autoencoder_forward.1} parent=1 // pred_fallthru
      _
    // Predicated region
    $region30: #{conv_autoencoder_forward.1} parent=1 // pred_check
      _
    $region31: #{conv_autoencoder_forward.1} parent=1 // pred_check_branch
      %40 = sbr.rel (0) target = $region33
    $region32: #{conv_autoencoder_forward.1} parent=1 // pred_region
      _
    $region33: #{conv_autoencoder_forward.1} parent=1 // pred_fallthru
      _
    // Predicated region
    $region34: #{conv_autoencoder_forward.1} parent=1 // pred_check
      _
    $region35: #{conv_autoencoder_forward.1} parent=1 // pred_check_branch
      %42 = sbr.rel (0) target = $region37
    $region36: #{conv_autoencoder_forward.1} parent=1 // pred_region
      _
    $region37: #{conv_autoencoder_forward.1} parent=1 // pred_fallthru
      _
    // Predicated region
    $region38: #{conv_autoencoder_forward.1} parent=1 // pred_check
      _
    $region39: #{conv_autoencoder_forward.1} parent=1 // pred_check_branch
      %44 = sbr.rel (0) target = $region41
    $region40: #{conv_autoencoder_forward.1} parent=1 // pred_region
      _
    $region41: #{conv_autoencoder_forward.1} parent=1 // pred_fallthru
      _
    // Predicated region
    $region42: #{conv_autoencoder_forward.1} parent=1 // pred_check
      _
    $region43: #{conv_autoencoder_forward.1} parent=1 // pred_check_branch
      %46 = sbr.rel (0) target = $region45
    $region44: #{conv_autoencoder_forward.1} parent=1 // pred_region
      _
    $region45: #{conv_autoencoder_forward.1} parent=1 // pred_fallthru
      _
    // Predicated region
    $region46: #{conv_autoencoder_forward.1} parent=1 // pred_check
      _
    $region47: #{conv_autoencoder_forward.1} parent=1 // pred_check_branch
      %48 = sbr.rel (0) target = $region49
    $region48: #{conv_autoencoder_forward.1} parent=1 // pred_region
      _
    $region49: #{conv_autoencoder_forward.1} parent=1 // pred_fallthru
      _
    // Predicated region
    $region50: #{conv_autoencoder_forward.1} parent=1 // pred_check
      _
    $region51: #{conv_autoencoder_forward.1} parent=1 // pred_check_branch
      %50 = sbr.rel (0) target = $region53
    $region52: #{conv_autoencoder_forward.1} parent=1 // pred_region
      _
    $region53: #{conv_autoencoder_forward.1} parent=1 // pred_fallthru
      _
    // Predicated region
    $region54: #{conv_autoencoder_forward.1} parent=1 // pred_check
      _
    $region55: #{conv_autoencoder_forward.1} parent=1 // pred_check_branch
      %52 = sbr.rel (0) target = $region57
    $region56: #{conv_autoencoder_forward.1} parent=1 // pred_region
      _
    $region57: #{conv_autoencoder_forward.1} parent=1 // pred_fallthru
      _
    // Predicated region
    $region58: #{conv_autoencoder_forward.1} parent=1 // pred_check
      _
    $region59: #{conv_autoencoder_forward.1} parent=1 // pred_check_branch
      %54 = sbr.rel (0) target = $region61
    $region60: #{conv_autoencoder_forward.1} parent=1 // pred_region
      _
    $region61: #{conv_autoencoder_forward.1} parent=1 // pred_fallthru
      _
    // Predicated region
    $region62: #{conv_autoencoder_forward.1} parent=1 // pred_check
      _
    $region63: #{conv_autoencoder_forward.1} parent=1 // pred_check_branch
      %56 = sbr.rel (0) target = $region65
    $region64: #{conv_autoencoder_forward.1} parent=1 // pred_region
      _
    $region65: #{conv_autoencoder_forward.1} parent=1 // pred_fallthru
      _
    // Predicated region
    $region66: #{conv_autoencoder_forward.1} parent=1 // pred_check
      _
    $region67: #{conv_autoencoder_forward.1} parent=1 // pred_check_branch
      %58 = sbr.rel (0) target = $region69
    $region68: #{conv_autoencoder_forward.1} parent=1 // pred_region
      _
    $region69: #{conv_autoencoder_forward.1} parent=1 // pred_fallthru
      _
    // Predicated region
    $region70: #{conv_autoencoder_forward.1} parent=1 // pred_check
      _
    $region71: #{conv_autoencoder_forward.1} parent=1 // pred_check_branch
      %60 = sbr.rel (0) target = $region73
    $region72: #{conv_autoencoder_forward.1} parent=1 // pred_region
      _
    $region73: #{conv_autoencoder_forward.1} parent=1 // pred_fallthru
      _
    // Predicated region
    $region74: #{conv_autoencoder_forward.1} parent=1 // pred_check
      _
    $region75: #{conv_autoencoder_forward.1} parent=1 // pred_check_branch
      %62 = sbr.rel (0) target = $region77
    $region76: #{conv_autoencoder_forward.1} parent=1 // pred_region
      _
    $region77: #{conv_autoencoder_forward.1} parent=1 // pred_fallthru
      _
    %v63 = vld [vmem:[%s17] sm:$0xff]
    %v64 = vld [vmem:[%s0] sm:$0xff]
    %v65 = vld [vmem:[%s0 + $0x8] sm:$0xff]
    %v66 = vld [vmem:[%s0 + $0x10] sm:$0xff]
    %v67 = vld [vmem:[%s0 + $0x18] sm:$0xff]
    %v68 = vlaneseq
    %v69 = vshrl.u32 %v68, 7
    %v70 = vadd.s32 %v69, 8
    %v71 = vadd.s32 %v69, 16
    %v72 = vadd.s32 %v69, 24
    %v73 = vand.u32 %v69, 15
    %v74 = vand.u32 %v70, 15
    %v75 = vand.u32 %v71, 15
    %v76 = vand.u32 %v72, 15
    %vm77 = vcmp.eq.s32.totalorder %v73, 0
    %vm78 = vcmp.eq.s32.totalorder %v74, 0
    %vm79 = vcmp.eq.s32.totalorder %v75, 0
    %vm80 = vcmp.eq.s32.totalorder %v76, 0
    %v81 = vrot.slane %v64, 7
    %v82 = vrot.slane %v65, 7
    %v83 = vrot.slane %v66, 7
    %v84 = vrot.slane %v67, 7
    %vm85 = vcmp.lt.s32.totalorder %v69, 1
    %v86 = vsel %vm85, %v83, %v84
    %v87 = vsel %vm85, %v82, %v83
    %v88 = vsel %vm85, %v81, %v82
    %v89 = vsel %vm85, %v84, %v81
    %v90 = vsel %vm77, 0.0, %v89
    %v91 = vsel %vm78, 0.0, %v88
    %v92 = vsel %vm79, 0.0, %v87
    %v93 = vsel %vm80, 0.0, %v86
    %vm94 = vcmp.eq.s32.totalorder %v73, 15
    %vm95 = vcmp.eq.s32.totalorder %v74, 15
    %vm96 = vcmp.eq.s32.totalorder %v75, 15
    %vm97 = vcmp.eq.s32.totalorder %v76, 15
    %v98 = vrot.slane %v64, 1
    %v99 = vrot.slane %v65, 1
    %v100 = vrot.slane %v66, 1
    %v101 = vrot.slane %v67, 1
    %vm102 = vcmp.lt.s32.totalorder %v69, 7
    %v103 = vsel %vm102, %v100, %v101
    %v104 = vsel %vm102, %v99, %v100
    %v105 = vsel %vm102, %v98, %v99
    %v106 = vsel %vm102, %v101, %v98
    %v107 = vsel %vm94, 0.0, %v105
    %v108 = vsel %vm95, 0.0, %v104
    %v109 = vsel %vm96, 0.0, %v103
    %v110 = vsel %vm97, 0.0, %v106
    %v111 = vld [vmem:[%s1] sm:$0xff]
    %v112 = vld [vmem:[%s1 + $0x8] sm:$0xff]
    %v113 = vld [vmem:[%s1 + $0x10] sm:$0xff]
    %v114 = vld [vmem:[%s1 + $0x18] sm:$0xff]
    %v115 = vld [vmem:[%s1 + $0x20] sm:$0xff]
    %v116 = vld [vmem:[%s1 + $0x28] sm:$0xff]
    %v117 = vld [vmem:[%s1 + $0x30] sm:$0xff]
    %v118 = vld [vmem:[%s1 + $0x38] sm:$0xff]
    %vm119 = vcmask 130048
    %v121 = vsel %vm119, %v64, 0
    %v124 = vsel %vm119, %v65, 0
    %v127 = vsel %vm119, %v66, 0
    %v130 = vsel %vm119, %v67, 0
    %132 = vmatprep.subr.mxu0 0.0
    %133 = vmatpush1.msra.mxu0 0.0
    %134 = vmatprep.subr.mxu0 0.0
    %135 = vmatpush1.msra.mxu0 0.0
    %136 = vmatprep.subr.mxu0 0.0
    %137 = vmatpush1.msra.mxu0 0.0
    %138 = vmatprep.subr.mxu0 0.0
    %139 = vmatpush1.msra.mxu0 0.0
    %140 = vmatprep.subr.mxu0 0.0
    %141 = vmatpush1.msra.mxu0 0.0
    %142 = vmatprep.subr.mxu0 0.0
    %143 = vmatpush1.msra.mxu0 0.0
    %144 = vmatprep.subr.mxu0 0.0
    %145 = vmatpush1.msra.mxu0 0.0
    %146 = vmatprep.subr.mxu0 0.0
    %147 = vmatpush1.msra.mxu0 0.0
    %148 = vmatprep.subr.mxu0 0.0
    %149 = vmatpush1.msra.mxu0 0.0
    %150 = vmatprep.subr.mxu0 0.0
    %151 = vmatpush1.msra.mxu0 0.0
    %152 = vmatprep.subr.mxu0 0.0
    %153 = vmatpush1.msra.mxu0 0.0
    %154 = vmatprep.subr.mxu0 0.0
    %155 = vmatpush1.msra.mxu0 0.0
    %156 = vmatprep.subr.mxu0 0.0
    %157 = vmatpush1.msra.mxu0 0.0
    %158 = vmatprep.subr.mxu0 0.0
    %159 = vmatpush1.msra.mxu0 0.0
    %160 = vmatprep.subr.mxu0 %v118
    %161 = vmatpush1.msra.mxu0 %v117
    %162 = vmatprep.subr.mxu0 %v116
    %163 = vmatpush1.msra.mxu0 %v115
    %164 = vmatprep.subr.mxu0 0.0
    %165 = vmatpush2.msra.mxu0 0.0
    %166 = vmatprep.subr.mxu0 0.0
    %167 = vmatpush2.msra.mxu0 0.0
    %168 = vmatprep.subr.mxu0 0.0
    %169 = vmatpush2.msra.mxu0 0.0
    %170 = vmatprep.subr.mxu0 0.0
    %171 = vmatpush2.msra.mxu0 0.0
    %172 = vmatprep.subr.mxu0 0.0
    %173 = vmatpush2.msra.mxu0 0.0
    %174 = vmatprep.subr.mxu0 0.0
    %175 = vmatpush2.msra.mxu0 0.0
    %176 = vmatprep.subr.mxu0 0.0
    %177 = vmatpush2.msra.mxu0 0.0
    %178 = vmatprep.subr.mxu0 0.0
    %179 = vmatpush2.msra.mxu0 0.0
    %180 = vmatprep.subr.mxu0 0.0
    %181 = vmatpush2.msra.mxu0 0.0
    %182 = vmatprep.subr.mxu0 0.0
    %183 = vmatpush2.msra.mxu0 0.0
    %184 = vmatprep.subr.mxu0 0.0
    %185 = vmatpush2.msra.mxu0 0.0
    %186 = vmatprep.subr.mxu0 0.0
    %187 = vmatpush2.msra.mxu0 0.0
    %188 = vmatprep.subr.mxu0 0.0
    %189 = vmatpush2.msra.mxu0 0.0
    %190 = vmatprep.subr.mxu0 0.0
    %191 = vmatpush2.msra.mxu0 0.0
    %192 = vmatprep.subr.mxu0 0.0
    %193 = vmatpush2.msra.mxu0 0.0
    %194 = vmatprep.subr.mxu0 0.0
    %195 = vmatpush2.msra.mxu0 0.0
    %196 = vmatprep.mubr.f32.mxu0 0.0
    %197 = vmatmul.mubr.f32.gmra.mxu0 %v121
    %v198 = vpop.f32.mrf.mxu0
    %v199 = vadd.f32 0.0, %v198
    %v200 = vpop.f32.mrf.mxu0
    %v201 = vadd.f32 0.0, %v200
    %202 = vmatprep.mubr.f32.mxu0 0.0
    %203 = vmatmul.mubr.f32.gmra.mxu0 %v124
    %v204 = vpop.f32.mrf.mxu0
    %v205 = vadd.f32 0.0, %v204
    %v206 = vpop.f32.mrf.mxu0
    %v207 = vadd.f32 0.0, %v206
    %208 = vmatprep.mubr.f32.mxu0 0.0
    %209 = vmatmul.mubr.f32.gmra.mxu0 %v127
    %v210 = vpop.f32.mrf.mxu0
    %v211 = vadd.f32 0.0, %v210
    %v212 = vpop.f32.mrf.mxu0
    %v213 = vadd.f32 0.0, %v212
    %214 = vmatprep.mubr.f32.mxu0 0.0
    %215 = vmatmul.mubr.f32.gmra.mxu0 %v130
    %v216 = vpop.f32.mrf.mxu0
    %v217 = vadd.f32 0.0, %v216
    %v218 = vpop.f32.mrf.mxu0
    %v219 = vadd.f32 0.0, %v218
    %220 = vdwg.mxu0
    %v222 = vsel %vm119, %v90, 0
    %v225 = vsel %vm119, %v91, 0
    %v228 = vsel %vm119, %v92, 0
    %v231 = vsel %vm119, %v93, 0
    %233 = vmatprep.subr.mxu0 0.0
    %234 = vmatpush1.msra.mxu0 0.0
    %235 = vmatprep.subr.mxu0 0.0
    %236 = vmatpush1.msra.mxu0 0.0
    %237 = vmatprep.subr.mxu0 0.0
    %238 = vmatpush1.msra.mxu0 0.0
    %239 = vmatprep.subr.mxu0 0.0
    %240 = vmatpush1.msra.mxu0 0.0
    %241 = vmatprep.subr.mxu0 0.0
    %242 = vmatpush1.msra.mxu0 0.0
    %243 = vmatprep.subr.mxu0 0.0
    %244 = vmatpush1.msra.mxu0 0.0
    %245 = vmatprep.subr.mxu0 0.0
    %246 = vmatpush1.msra.mxu0 0.0
    %247 = vmatprep.subr.mxu0 0.0
    %248 = vmatpush1.msra.mxu0 0.0
    %249 = vmatprep.subr.mxu0 0.0
    %250 = vmatpush1.msra.mxu0 0.0
    %251 = vmatprep.subr.mxu0 0.0
    %252 = vmatpush1.msra.mxu0 0.0
    %253 = vmatprep.subr.mxu0 0.0
    %254 = vmatpush1.msra.mxu0 0.0
    %255 = vmatprep.subr.mxu0 0.0
    %256 = vmatpush1.msra.mxu0 0.0
    %257 = vmatprep.subr.mxu0 0.0
    %258 = vmatpush1.msra.mxu0 0.0
    %259 = vmatprep.subr.mxu0 0.0
    %260 = vmatpush1.msra.mxu0 0.0
    %261 = vmatprep.subr.mxu0 %v114
    %262 = vmatpush1.msra.mxu0 %v113
    %263 = vmatprep.subr.mxu0 %v112
    %264 = vmatpush1.msra.mxu0 %v111
    %265 = vmatprep.subr.mxu0 0.0
    %266 = vmatpush2.msra.mxu0 0.0
    %267 = vmatprep.subr.mxu0 0.0
    %268 = vmatpush2.msra.mxu0 0.0
    %269 = vmatprep.subr.mxu0 0.0
    %270 = vmatpush2.msra.mxu0 0.0
    %271 = vmatprep.subr.mxu0 0.0
    %272 = vmatpush2.msra.mxu0 0.0
    %273 = vmatprep.subr.mxu0 0.0
    %274 = vmatpush2.msra.mxu0 0.0
    %275 = vmatprep.subr.mxu0 0.0
    %276 = vmatpush2.msra.mxu0 0.0
    %277 = vmatprep.subr.mxu0 0.0
    %278 = vmatpush2.msra.mxu0 0.0
    %279 = vmatprep.subr.mxu0 0.0
    %280 = vmatpush2.msra.mxu0 0.0
    %281 = vmatprep.subr.mxu0 0.0
    %282 = vmatpush2.msra.mxu0 0.0
    %283 = vmatprep.subr.mxu0 0.0
    %284 = vmatpush2.msra.mxu0 0.0
    %285 = vmatprep.subr.mxu0 0.0
    %286 = vmatpush2.msra.mxu0 0.0
    %287 = vmatprep.subr.mxu0 0.0
    %288 = vmatpush2.msra.mxu0 0.0
    %289 = vmatprep.subr.mxu0 0.0
    %290 = vmatpush2.msra.mxu0 0.0
    %291 = vmatprep.subr.mxu0 0.0
    %292 = vmatpush2.msra.mxu0 0.0
    %293 = vmatprep.subr.mxu0 0.0
    %294 = vmatpush2.msra.mxu0 0.0
    %295 = vmatprep.subr.mxu0 0.0
    %296 = vmatpush2.msra.mxu0 0.0
    %297 = vmatprep.mubr.f32.mxu0 0.0
    %298 = vmatmul.mubr.f32.gmra.mxu0 %v222
    %v299 = vpop.f32.mrf.mxu0
    %v300 = vadd.f32 %v199, %v299
    %v301 = vpop.f32.mrf.mxu0
    %v302 = vadd.f32 %v201, %v301
    %303 = vmatprep.mubr.f32.mxu0 0.0
    %304 = vmatmul.mubr.f32.gmra.mxu0 %v225
    %v305 = vpop.f32.mrf.mxu0
    %v306 = vadd.f32 %v205, %v305
    %v307 = vpop.f32.mrf.mxu0
    %v308 = vadd.f32 %v207, %v307
    %309 = vmatprep.mubr.f32.mxu0 0.0
    %310 = vmatmul.mubr.f32.gmra.mxu0 %v228
    %v311 = vpop.f32.mrf.mxu0
    %v312 = vadd.f32 %v211, %v311
    %v313 = vpop.f32.mrf.mxu0
    %v314 = vadd.f32 %v213, %v313
    %315 = vmatprep.mubr.f32.mxu0 0.0
    %316 = vmatmul.mubr.f32.gmra.mxu0 %v231
    %v317 = vpop.f32.mrf.mxu0
    %v318 = vadd.f32 %v217, %v317
    %v319 = vpop.f32.mrf.mxu0
    %v320 = vadd.f32 %v219, %v319
    %321 = vdwg.mxu0
    %v322 = vld [vmem:[%s1 + $0x40] sm:$0xff]
    %v323 = vld [vmem:[%s1 + $0x48] sm:$0xff]
    %v324 = vld [vmem:[%s1 + $0x50] sm:$0xff]
    %v325 = vld [vmem:[%s1 + $0x58] sm:$0xff]
    %v327 = vsel %vm119, %v107, 0
    %v330 = vsel %vm119, %v108, 0
    %v333 = vsel %vm119, %v109, 0
    %v336 = vsel %vm119, %v110, 0
    %338 = vmatprep.subr.mxu0 0.0
    %339 = vmatpush1.msra.mxu0 0.0
    %340 = vmatprep.subr.mxu0 0.0
    %341 = vmatpush1.msra.mxu0 0.0
    %342 = vmatprep.subr.mxu0 0.0
    %343 = vmatpush1.msra.mxu0 0.0
    %344 = vmatprep.subr.mxu0 0.0
    %345 = vmatpush1.msra.mxu0 0.0
    %346 = vmatprep.subr.mxu0 0.0
    %347 = vmatpush1.msra.mxu0 0.0
    %348 = vmatprep.subr.mxu0 0.0
    %349 = vmatpush1.msra.mxu0 0.0
    %350 = vmatprep.subr.mxu0 0.0
    %351 = vmatpush1.msra.mxu0 0.0
    %352 = vmatprep.subr.mxu0 0.0
    %353 = vmatpush1.msra.mxu0 0.0
    %354 = vmatprep.subr.mxu0 0.0
    %355 = vmatpush1.msra.mxu0 0.0
    %356 = vmatprep.subr.mxu0 0.0
    %357 = vmatpush1.msra.mxu0 0.0
    %358 = vmatprep.subr.mxu0 0.0
    %359 = vmatpush1.msra.mxu0 0.0
    %360 = vmatprep.subr.mxu0 0.0
    %361 = vmatpush1.msra.mxu0 0.0
    %362 = vmatprep.subr.mxu0 0.0
    %363 = vmatpush1.msra.mxu0 0.0
    %364 = vmatprep.subr.mxu0 0.0
    %365 = vmatpush1.msra.mxu0 0.0
    %366 = vmatprep.subr.mxu0 %v325
    %367 = vmatpush1.msra.mxu0 %v324
    %368 = vmatprep.subr.mxu0 %v323
    %369 = vmatpush1.msra.mxu0 %v322
    %370 = vmatprep.subr.mxu0 0.0
    %371 = vmatpush2.msra.mxu0 0.0
    %372 = vmatprep.subr.mxu0 0.0
    %373 = vmatpush2.msra.mxu0 0.0
    %374 = vmatprep.subr.mxu0 0.0
    %375 = vmatpush2.msra.mxu0 0.0
    %376 = vmatprep.subr.mxu0 0.0
    %377 = vmatpush2.msra.mxu0 0.0
    %378 = vmatprep.subr.mxu0 0.0
    %379 = vmatpush2.msra.mxu0 0.0
    %380 = vmatprep.subr.mxu0 0.0
    %381 = vmatpush2.msra.mxu0 0.0
    %382 = vmatprep.subr.mxu0 0.0
    %383 = vmatpush2.msra.mxu0 0.0
    %384 = vmatprep.subr.mxu0 0.0
    %385 = vmatpush2.msra.mxu0 0.0
    %386 = vmatprep.subr.mxu0 0.0
    %387 = vmatpush2.msra.mxu0 0.0
    %388 = vmatprep.subr.mxu0 0.0
    %389 = vmatpush2.msra.mxu0 0.0
    %390 = vmatprep.subr.mxu0 0.0
    %391 = vmatpush2.msra.mxu0 0.0
    %392 = vmatprep.subr.mxu0 0.0
    %393 = vmatpush2.msra.mxu0 0.0
    %394 = vmatprep.subr.mxu0 0.0
    %395 = vmatpush2.msra.mxu0 0.0
    %396 = vmatprep.subr.mxu0 0.0
    %397 = vmatpush2.msra.mxu0 0.0
    %398 = vmatprep.subr.mxu0 0.0
    %399 = vmatpush2.msra.mxu0 0.0
    %400 = vmatprep.subr.mxu0 0.0
    %401 = vmatpush2.msra.mxu0 0.0
    %402 = vmatprep.mubr.f32.mxu0 0.0
    %403 = vmatmul.mubr.f32.gmra.mxu0 %v327
    %v404 = vpop.f32.mrf.mxu0
    %v405 = vadd.f32 0.0, %v404
    %v406 = vpop.f32.mrf.mxu0
    %v407 = vadd.f32 0.0, %v406
    %408 = vmatprep.mubr.f32.mxu0 0.0
    %409 = vmatmul.mubr.f32.gmra.mxu0 %v330
    %v410 = vpop.f32.mrf.mxu0
    %v411 = vadd.f32 0.0, %v410
    %v412 = vpop.f32.mrf.mxu0
    %v413 = vadd.f32 0.0, %v412
    %414 = vmatprep.mubr.f32.mxu0 0.0
    %415 = vmatmul.mubr.f32.gmra.mxu0 %v333
    %v416 = vpop.f32.mrf.mxu0
    %v417 = vadd.f32 0.0, %v416
    %v418 = vpop.f32.mrf.mxu0
    %v419 = vadd.f32 0.0, %v418
    %420 = vmatprep.mubr.f32.mxu0 0.0
    %421 = vmatmul.mubr.f32.gmra.mxu0 %v336
    %v422 = vpop.f32.mrf.mxu0
    %v423 = vadd.f32 0.0, %v422
    %v424 = vpop.f32.mrf.mxu0
    %v425 = vadd.f32 0.0, %v424
    %426 = vdwg.mxu0
    %v427 = vadd.f32 %v300, %v405
    %v428 = vadd.f32 %v302, %v407
    %v429 = vadd.f32 %v306, %v411
    %v430 = vadd.f32 %v308, %v413
    %v431 = vadd.f32 %v312, %v417
    %v432 = vadd.f32 %v314, %v419
    %v433 = vadd.f32 %v318, %v423
    %v434 = vadd.f32 %v320, %v425
    %v435 = vld [vmem:[%s5] sm:$0xff]
    %v436 = vld [vmem:[%s5 + $0x8] sm:$0xff]
    %v437 = vld [vmem:[%s5 + $0x10] sm:$0xff]
    %v438 = vld [vmem:[%s5 + $0x18] sm:$0xff]
    %v439 = vld [vmem:[%s5 + $0x20] sm:$0xff]
    %v440 = vld [vmem:[%s5 + $0x28] sm:$0xff]
    %v441 = vld [vmem:[%s5 + $0x30] sm:$0xff]
    %v442 = vld [vmem:[%s5 + $0x38] sm:$0xff]
    %v443 = vld [vmem:[%s5 + $0x40] sm:$0xff]
    %v444 = vld [vmem:[%s5 + $0x48] sm:$0xff]
    %v445 = vld [vmem:[%s5 + $0x50] sm:$0xff]
    %v446 = vld [vmem:[%s5 + $0x58] sm:$0xff]
    %v447 = vld [vmem:[%s5 + $0x60] sm:$0xff]
    %v448 = vld [vmem:[%s5 + $0x68] sm:$0xff]
    %v449 = vld [vmem:[%s5 + $0x70] sm:$0xff]
    %v450 = vld [vmem:[%s5 + $0x78] sm:$0xff]
    %v451 = vld [vmem:[%s5 + $0x80] sm:$0xff]
    %v452 = vld [vmem:[%s5 + $0x88] sm:$0xff]
    %v453 = vld [vmem:[%s5 + $0x90] sm:$0xff]
    %v454 = vld [vmem:[%s5 + $0x98] sm:$0xff]
    %v455 = vld [vmem:[%s5 + $0xa0] sm:$0xff]
    %v456 = vld [vmem:[%s5 + $0xa8] sm:$0xff]
    %v457 = vld [vmem:[%s5 + $0xb0] sm:$0xff]
    %v458 = vld [vmem:[%s5 + $0xb8] sm:$0xff]
    %v459 = vld [vmem:[%s5 + $0xc0] sm:$0xff]
    %v460 = vld [vmem:[%s5 + $0xc8] sm:$0xff]
    %v461 = vld [vmem:[%s5 + $0xd0] sm:$0xff]
    %v462 = vld [vmem:[%s5 + $0xd8] sm:$0xff]
    %v463 = vld [vmem:[%s5 + $0xe0] sm:$0xff]
    %v464 = vld [vmem:[%s5 + $0xe8] sm:$0xff]
    %v465 = vld [vmem:[%s5 + $0xf0] sm:$0xff]
    %v466 = vld [vmem:[%s5 + $0xf8] sm:$0xff]
    %v467 = vld [vmem:[%s6] sm:$0xff]
    %v468 = vld [vmem:[%s6 + $0x8] sm:$0xff]
    %v469 = vld [vmem:[%s6 + $0x10] sm:$0xff]
    %v470 = vld [vmem:[%s6 + $0x18] sm:$0xff]
    %v471 = vadd.f32 %v427, %v429
    %v472 = vadd.f32 %v471, %v431
    %v473 = vadd.f32 %v472, %v433
    %v474 = vrot.slane %v473, 4
    %v475 = vadd.f32 %v473, %v474
    %v476 = vrot.slane %v475, 2
    %v477 = vadd.f32 %v475, %v476
    %v478 = vrot.slane %v477, 1
    %v479 = vadd.f32 %v477, %v478
    %v480 = vadd.f32 %v428, %v430
    %v481 = vadd.f32 %v480, %v432
    %v482 = vadd.f32 %v481, %v434
    %v483 = vrot.slane %v482, 4
    %v484 = vadd.f32 %v482, %v483
    %v485 = vrot.slane %v484, 2
    %v486 = vadd.f32 %v484, %v485
    %v487 = vrot.slane %v486, 1
    %v488 = vadd.f32 %v486, %v487
    %489 = vmatprep.subr.mxu0 0.0
    %490 = vmatpush1.msra.mxu0 %v450
    %491 = vmatprep.subr.mxu0 0.0
    %492 = vmatpush1.msra.mxu0 %v449
    %493 = vmatprep.subr.mxu0 0.0
    %494 = vmatpush1.msra.mxu0 %v448
    %495 = vmatprep.subr.mxu0 0.0
    %496 = vmatpush1.msra.mxu0 %v447
    %497 = vmatprep.subr.mxu0 0.0
    %498 = vmatpush1.msra.mxu0 %v446
    %499 = vmatprep.subr.mxu0 0.0
    %500 = vmatpush1.msra.mxu0 %v445
    %501 = vmatprep.subr.mxu0 0.0
    %502 = vmatpush1.msra.mxu0 %v444
    %503 = vmatprep.subr.mxu0 0.0
    %504 = vmatpush1.msra.mxu0 %v443
    %505 = vmatprep.subr.mxu0 0.0
    %506 = vmatpush1.msra.mxu0 %v442
    %507 = vmatprep.subr.mxu0 0.0
    %508 = vmatpush1.msra.mxu0 %v441
    %509 = vmatprep.subr.mxu0 0.0
    %510 = vmatpush1.msra.mxu0 %v440
    %511 = vmatprep.subr.mxu0 0.0
    %512 = vmatpush1.msra.mxu0 %v439
    %513 = vmatprep.subr.mxu0 0.0
    %514 = vmatpush1.msra.mxu0 %v438
    %515 = vmatprep.subr.mxu0 0.0
    %516 = vmatpush1.msra.mxu0 %v437
    %517 = vmatprep.subr.mxu0 0.0
    %518 = vmatpush1.msra.mxu0 %v436
    %519 = vmatprep.subr.mxu0 0.0
    %520 = vmatpush1.msra.mxu0 %v435
    %521 = vmatprep.subr.mxu0 0.0
    %522 = vmatpush2.msra.mxu0 %v466
    %523 = vmatprep.subr.mxu0 0.0
    %524 = vmatpush2.msra.mxu0 %v465
    %525 = vmatprep.subr.mxu0 0.0
    %526 = vmatpush2.msra.mxu0 %v464
    %527 = vmatprep.subr.mxu0 0.0
    %528 = vmatpush2.msra.mxu0 %v463
    %529 = vmatprep.subr.mxu0 0.0
    %530 = vmatpush2.msra.mxu0 %v462
    %531 = vmatprep.subr.mxu0 0.0
    %532 = vmatpush2.msra.mxu0 %v461
    %533 = vmatprep.subr.mxu0 0.0
    %534 = vmatpush2.msra.mxu0 %v460
    %535 = vmatprep.subr.mxu0 0.0
    %536 = vmatpush2.msra.mxu0 %v459
    %537 = vmatprep.subr.mxu0 0.0
    %538 = vmatpush2.msra.mxu0 %v458
    %539 = vmatprep.subr.mxu0 0.0
    %540 = vmatpush2.msra.mxu0 %v457
    %541 = vmatprep.subr.mxu0 0.0
    %542 = vmatpush2.msra.mxu0 %v456
    %543 = vmatprep.subr.mxu0 0.0
    %544 = vmatpush2.msra.mxu0 %v455
    %545 = vmatprep.subr.mxu0 0.0
    %546 = vmatpush2.msra.mxu0 %v454
    %547 = vmatprep.subr.mxu0 0.0
    %548 = vmatpush2.msra.mxu0 %v453
    %549 = vmatprep.subr.mxu0 0.0
    %550 = vmatpush2.msra.mxu0 %v452
    %551 = vmatprep.subr.mxu0 0.0
    %552 = vmatpush2.msra.mxu0 %v451
    %553 = vmatprep.mubr.f32.mxu0 %v488
    %554 = vmatmul.mubr.f32.gmra.mxu0 %v479
    %v555 = vpop.f32.mrf.mxu0
    %v556 = vadd.f32 0.0, %v555
    %v557 = vpop.f32.mrf.mxu0
    %558 = vdwg.mxu0
    %v559 = vmul.f32 %v556, 0.001953125
    %v561 = vsel %vm119, %v559, 0
    %563 = vmatprep.subr.mxu0 0.0
    %564 = vmatpush1.msra.mxu0 0.0
    %565 = vmatprep.subr.mxu0 0.0
    %566 = vmatpush1.msra.mxu0 0.0
    %567 = vmatprep.subr.mxu0 0.0
    %568 = vmatpush1.msra.mxu0 0.0
    %569 = vmatprep.subr.mxu0 0.0
    %570 = vmatpush1.msra.mxu0 0.0
    %571 = vmatprep.subr.mxu0 0.0
    %572 = vmatpush1.msra.mxu0 0.0
    %573 = vmatprep.subr.mxu0 0.0
    %574 = vmatpush1.msra.mxu0 0.0
    %575 = vmatprep.subr.mxu0 0.0
    %576 = vmatpush1.msra.mxu0 0.0
    %577 = vmatprep.subr.mxu0 0.0
    %578 = vmatpush1.msra.mxu0 0.0
    %579 = vmatprep.subr.mxu0 0.0
    %580 = vmatpush1.msra.mxu0 0.0
    %581 = vmatprep.subr.mxu0 0.0
    %582 = vmatpush1.msra.mxu0 0.0
    %583 = vmatprep.subr.mxu0 0.0
    %584 = vmatpush1.msra.mxu0 0.0
    %585 = vmatprep.subr.mxu0 0.0
    %586 = vmatpush1.msra.mxu0 0.0
    %587 = vmatprep.subr.mxu0 0.0
    %588 = vmatpush1.msra.mxu0 0.0
    %589 = vmatprep.subr.mxu0 0.0
    %590 = vmatpush1.msra.mxu0 0.0
    %591 = vmatprep.subr.mxu0 %v470
    %592 = vmatpush1.msra.mxu0 %v469
    %593 = vmatprep.subr.mxu0 %v468
    %594 = vmatpush1.msra.mxu0 %v467
    %595 = vmatprep.subr.mxu0 0.0
    %596 = vmatpush2.msra.mxu0 0.0
    %597 = vmatprep.subr.mxu0 0.0
    %598 = vmatpush2.msra.mxu0 0.0
    %599 = vmatprep.subr.mxu0 0.0
    %600 = vmatpush2.msra.mxu0 0.0
    %601 = vmatprep.subr.mxu0 0.0
    %602 = vmatpush2.msra.mxu0 0.0
    %603 = vmatprep.subr.mxu0 0.0
    %604 = vmatpush2.msra.mxu0 0.0
    %605 = vmatprep.subr.mxu0 0.0
    %606 = vmatpush2.msra.mxu0 0.0
    %607 = vmatprep.subr.mxu0 0.0
    %608 = vmatpush2.msra.mxu0 0.0
    %609 = vmatprep.subr.mxu0 0.0
    %610 = vmatpush2.msra.mxu0 0.0
    %611 = vmatprep.subr.mxu0 0.0
    %612 = vmatpush2.msra.mxu0 0.0
    %613 = vmatprep.subr.mxu0 0.0
    %614 = vmatpush2.msra.mxu0 0.0
    %615 = vmatprep.subr.mxu0 0.0
    %616 = vmatpush2.msra.mxu0 0.0
    %617 = vmatprep.subr.mxu0 0.0
    %618 = vmatpush2.msra.mxu0 0.0
    %619 = vmatprep.subr.mxu0 0.0
    %620 = vmatpush2.msra.mxu0 0.0
    %621 = vmatprep.subr.mxu0 0.0
    %622 = vmatpush2.msra.mxu0 0.0
    %623 = vmatprep.subr.mxu0 0.0
    %624 = vmatpush2.msra.mxu0 0.0
    %625 = vmatprep.subr.mxu0 0.0
    %626 = vmatpush2.msra.mxu0 0.0
    %627 = vmatprep.mubr.f32.mxu0 0.0
    %628 = vmatmul.mubr.f32.gmra.mxu0 %v561
    %v629 = vpop.f32.mrf.mxu0
    %v630 = vadd.f32 0.0, %v629
    %v631 = vpop.f32.mrf.mxu0
    %v632 = vadd.f32 0.0, %v631
    %633 = vdwg.mxu0
    %v634 = vlaneseq
    %v635 = vshrl.u32 %v634, 7
    %v636 = vsub.s32 0, %v635
    %v637 = vrot.slane %v630, %v636
    %v638 = vlaneseq
    %v639 = vshrl.u32 %v638, 7
    %v640 = vsub.s32 0, %v639
    %v641 = vrot.slane %v632, %v640
    %v642 = vsub.f32 %v427, %v637
    %v643 = vsub.f32 %v428, %v641
    %v644 = vsub.f32 %v429, %v637
    %v645 = vsub.f32 %v430, %v641
    %v646 = vsub.f32 %v431, %v637
    %v647 = vsub.f32 %v432, %v641
    %v648 = vsub.f32 %v433, %v637
    %v649 = vsub.f32 %v434, %v641
    %v650 = vmul.f32 %v642, %v642
    %v651 = vmul.f32 %v643, %v643
    %v652 = vmul.f32 %v644, %v644
    %v653 = vmul.f32 %v645, %v645
    %v654 = vmul.f32 %v646, %v646
    %v655 = vmul.f32 %v647, %v647
    %v656 = vmul.f32 %v648, %v648
    %v657 = vmul.f32 %v649, %v649
    %v658 = vadd.f32 %v650, %v652
    %v659 = vadd.f32 %v658, %v654
    %v660 = vadd.f32 %v659, %v656
    %v661 = vrot.slane %v660, 4
    %v662 = vadd.f32 %v660, %v661
    %v663 = vrot.slane %v662, 2
    %v664 = vadd.f32 %v662, %v663
    %v665 = vrot.slane %v664, 1
    %v666 = vadd.f32 %v664, %v665
    %v667 = vadd.f32 %v651, %v653
    %v668 = vadd.f32 %v667, %v655
    %v669 = vadd.f32 %v668, %v657
    %v670 = vrot.slane %v669, 4
    %v671 = vadd.f32 %v669, %v670
    %v672 = vrot.slane %v671, 2
    %v673 = vadd.f32 %v671, %v672
    %v674 = vrot.slane %v673, 1
    %v675 = vadd.f32 %v673, %v674
    %676 = vmatprep.subr.mxu0 0.0
    %677 = vmatpush1.msra.mxu0 %v450
    %678 = vmatprep.subr.mxu0 0.0
    %679 = vmatpush1.msra.mxu0 %v449
    %680 = vmatprep.subr.mxu0 0.0
    %681 = vmatpush1.msra.mxu0 %v448
    %682 = vmatprep.subr.mxu0 0.0
    %683 = vmatpush1.msra.mxu0 %v447
    %684 = vmatprep.subr.mxu0 0.0
    %685 = vmatpush1.msra.mxu0 %v446
    %686 = vmatprep.subr.mxu0 0.0
    %687 = vmatpush1.msra.mxu0 %v445
    %688 = vmatprep.subr.mxu0 0.0
    %689 = vmatpush1.msra.mxu0 %v444
    %690 = vmatprep.subr.mxu0 0.0
    %691 = vmatpush1.msra.mxu0 %v443
    %692 = vmatprep.subr.mxu0 0.0
    %693 = vmatpush1.msra.mxu0 %v442
    %694 = vmatprep.subr.mxu0 0.0
    %695 = vmatpush1.msra.mxu0 %v441
    %696 = vmatprep.subr.mxu0 0.0
    %697 = vmatpush1.msra.mxu0 %v440
    %698 = vmatprep.subr.mxu0 0.0
    %699 = vmatpush1.msra.mxu0 %v439
    %700 = vmatprep.subr.mxu0 0.0
    %701 = vmatpush1.msra.mxu0 %v438
    %702 = vmatprep.subr.mxu0 0.0
    %703 = vmatpush1.msra.mxu0 %v437
    %704 = vmatprep.subr.mxu0 0.0
    %705 = vmatpush1.msra.mxu0 %v436
    %706 = vmatprep.subr.mxu0 0.0
    %707 = vmatpush1.msra.mxu0 %v435
    %708 = vmatprep.subr.mxu0 0.0
    %709 = vmatpush2.msra.mxu0 %v466
    %710 = vmatprep.subr.mxu0 0.0
    %711 = vmatpush2.msra.mxu0 %v465
    %712 = vmatprep.subr.mxu0 0.0
    %713 = vmatpush2.msra.mxu0 %v464
    %714 = vmatprep.subr.mxu0 0.0
    %715 = vmatpush2.msra.mxu0 %v463
    %716 = vmatprep.subr.mxu0 0.0
    %717 = vmatpush2.msra.mxu0 %v462
    %718 = vmatprep.subr.mxu0 0.0
    %719 = vmatpush2.msra.mxu0 %v461
    %720 = vmatprep.subr.mxu0 0.0
    %721 = vmatpush2.msra.mxu0 %v460
    %722 = vmatprep.subr.mxu0 0.0
    %723 = vmatpush2.msra.mxu0 %v459
    %724 = vmatprep.subr.mxu0 0.0
    %725 = vmatpush2.msra.mxu0 %v458
    %726 = vmatprep.subr.mxu0 0.0
    %727 = vmatpush2.msra.mxu0 %v457
    %728 = vmatprep.subr.mxu0 0.0
    %729 = vmatpush2.msra.mxu0 %v456
    %730 = vmatprep.subr.mxu0 0.0
    %731 = vmatpush2.msra.mxu0 %v455
    %732 = vmatprep.subr.mxu0 0.0
    %733 = vmatpush2.msra.mxu0 %v454
    %734 = vmatprep.subr.mxu0 0.0
    %735 = vmatpush2.msra.mxu0 %v453
    %736 = vmatprep.subr.mxu0 0.0
    %737 = vmatpush2.msra.mxu0 %v452
    %738 = vmatprep.subr.mxu0 0.0
    %739 = vmatpush2.msra.mxu0 %v451
    %740 = vmatprep.mubr.f32.mxu0 %v675
    %741 = vmatmul.mubr.f32.gmra.mxu0 %v666
    %v742 = vpop.f32.mrf.mxu0
    %v743 = vadd.f32 0.0, %v742
    %v744 = vpop.f32.mrf.mxu0
    %745 = vdwg.mxu0
    %v746 = vmul.f32 %v743, 0.001953125
    %v747 = vadd.f32 %v746, 1e-05
    %v748 = vrsqrt.pop %v747
    %v749 = vmul.f32 %v748, %v63
    %v751 = vsel %vm119, %v749, 0
    %753 = vmatprep.subr.mxu0 0.0
    %754 = vmatpush1.msra.mxu0 0.0
    %755 = vmatprep.subr.mxu0 0.0
    %756 = vmatpush1.msra.mxu0 0.0
    %757 = vmatprep.subr.mxu0 0.0
    %758 = vmatpush1.msra.mxu0 0.0
    %759 = vmatprep.subr.mxu0 0.0
    %760 = vmatpush1.msra.mxu0 0.0
    %761 = vmatprep.subr.mxu0 0.0
    %762 = vmatpush1.msra.mxu0 0.0
    %763 = vmatprep.subr.mxu0 0.0
    %764 = vmatpush1.msra.mxu0 0.0
    %765 = vmatprep.subr.mxu0 0.0
    %766 = vmatpush1.msra.mxu0 0.0
    %767 = vmatprep.subr.mxu0 0.0
    %768 = vmatpush1.msra.mxu0 0.0
    %769 = vmatprep.subr.mxu0 0.0
    %770 = vmatpush1.msra.mxu0 0.0
    %771 = vmatprep.subr.mxu0 0.0
    %772 = vmatpush1.msra.mxu0 0.0
    %773 = vmatprep.subr.mxu0 0.0
    %774 = vmatpush1.msra.mxu0 0.0
    %775 = vmatprep.subr.mxu0 0.0
    %776 = vmatpush1.msra.mxu0 0.0
    %777 = vmatprep.subr.mxu0 0.0
    %778 = vmatpush1.msra.mxu0 0.0
    %779 = vmatprep.subr.mxu0 0.0
    %780 = vmatpush1.msra.mxu0 0.0
    %781 = vmatprep.subr.mxu0 %v470
    %782 = vmatpush1.msra.mxu0 %v469
    %783 = vmatprep.subr.mxu0 %v468
    %784 = vmatpush1.msra.mxu0 %v467
    %785 = vmatprep.subr.mxu0 0.0
    %786 = vmatpush2.msra.mxu0 0.0
    %787 = vmatprep.subr.mxu0 0.0
    %788 = vmatpush2.msra.mxu0 0.0
    %789 = vmatprep.subr.mxu0 0.0
    %790 = vmatpush2.msra.mxu0 0.0
    %791 = vmatprep.subr.mxu0 0.0
    %792 = vmatpush2.msra.mxu0 0.0
    %793 = vmatprep.subr.mxu0 0.0
    %794 = vmatpush2.msra.mxu0 0.0
    %795 = vmatprep.subr.mxu0 0.0
    %796 = vmatpush2.msra.mxu0 0.0
    %797 = vmatprep.subr.mxu0 0.0
    %798 = vmatpush2.msra.mxu0 0.0
    %799 = vmatprep.subr.mxu0 0.0
    %800 = vmatpush2.msra.mxu0 0.0
    %801 = vmatprep.subr.mxu0 0.0
    %802 = vmatpush2.msra.mxu0 0.0
    %803 = vmatprep.subr.mxu0 0.0
    %804 = vmatpush2.msra.mxu0 0.0
    %805 = vmatprep.subr.mxu0 0.0
    %806 = vmatpush2.msra.mxu0 0.0
    %807 = vmatprep.subr.mxu0 0.0
    %808 = vmatpush2.msra.mxu0 0.0
    %809 = vmatprep.subr.mxu0 0.0
    %810 = vmatpush2.msra.mxu0 0.0
    %811 = vmatprep.subr.mxu0 0.0
    %812 = vmatpush2.msra.mxu0 0.0
    %813 = vmatprep.subr.mxu0 0.0
    %814 = vmatpush2.msra.mxu0 0.0
    %815 = vmatprep.subr.mxu0 0.0
    %816 = vmatpush2.msra.mxu0 0.0
    %817 = vmatprep.mubr.f32.mxu0 0.0
    %818 = vmatmul.mubr.f32.gmra.mxu0 %v751
    %v819 = vpop.f32.mrf.mxu0
    %v820 = vadd.f32 0.0, %v819
    %v821 = vpop.f32.mrf.mxu0
    %v822 = vadd.f32 0.0, %v821
    %823 = vdwg.mxu0
    %v824 = vlaneseq
    %v825 = vshrl.u32 %v824, 7
    %v826 = vsub.s32 0, %v825
    %v827 = vrot.slane %v820, %v826
    %v828 = vlaneseq
    %v829 = vshrl.u32 %v828, 7
    %v830 = vsub.s32 0, %v829
    %v831 = vrot.slane %v822, %v830
    %v832 = vmul.f32 %v642, %v827
    %v833 = vmul.f32 %v643, %v831
    %v834 = vmul.f32 %v644, %v827
    %v835 = vmul.f32 %v645, %v831
    %v836 = vmul.f32 %v646, %v827
    %v837 = vmul.f32 %v647, %v831
    %v838 = vmul.f32 %v648, %v827
    %v839 = vmul.f32 %v649, %v831
    %v841 = vrot.slane %v63, 1
    %v842 = vsel %vm119, %v841, 0
    %844 = vmatprep.subr.mxu0 0.0
    %845 = vmatpush1.msra.mxu0 0.0
    %846 = vmatprep.subr.mxu0 0.0
    %847 = vmatpush1.msra.mxu0 0.0
    %848 = vmatprep.subr.mxu0 0.0
    %849 = vmatpush1.msra.mxu0 0.0
    %850 = vmatprep.subr.mxu0 0.0
    %851 = vmatpush1.msra.mxu0 0.0
    %852 = vmatprep.subr.mxu0 0.0
    %853 = vmatpush1.msra.mxu0 0.0
    %854 = vmatprep.subr.mxu0 0.0
    %855 = vmatpush1.msra.mxu0 0.0
    %856 = vmatprep.subr.mxu0 0.0
    %857 = vmatpush1.msra.mxu0 0.0
    %858 = vmatprep.subr.mxu0 0.0
    %859 = vmatpush1.msra.mxu0 0.0
    %860 = vmatprep.subr.mxu0 0.0
    %861 = vmatpush1.msra.mxu0 0.0
    %862 = vmatprep.subr.mxu0 0.0
    %863 = vmatpush1.msra.mxu0 0.0
    %864 = vmatprep.subr.mxu0 0.0
    %865 = vmatpush1.msra.mxu0 0.0
    %866 = vmatprep.subr.mxu0 0.0
    %867 = vmatpush1.msra.mxu0 0.0
    %868 = vmatprep.subr.mxu0 0.0
    %869 = vmatpush1.msra.mxu0 0.0
    %870 = vmatprep.subr.mxu0 0.0
    %871 = vmatpush1.msra.mxu0 0.0
    %872 = vmatprep.subr.mxu0 %v470
    %873 = vmatpush1.msra.mxu0 %v469
    %874 = vmatprep.subr.mxu0 %v468
    %875 = vmatpush1.msra.mxu0 %v467
    %876 = vmatprep.subr.mxu0 0.0
    %877 = vmatpush2.msra.mxu0 0.0
    %878 = vmatprep.subr.mxu0 0.0
    %879 = vmatpush2.msra.mxu0 0.0
    %880 = vmatprep.subr.mxu0 0.0
    %881 = vmatpush2.msra.mxu0 0.0
    %882 = vmatprep.subr.mxu0 0.0
    %883 = vmatpush2.msra.mxu0 0.0
    %884 = vmatprep.subr.mxu0 0.0
    %885 = vmatpush2.msra.mxu0 0.0
    %886 = vmatprep.subr.mxu0 0.0
    %887 = vmatpush2.msra.mxu0 0.0
    %888 = vmatprep.subr.mxu0 0.0
    %889 = vmatpush2.msra.mxu0 0.0
    %890 = vmatprep.subr.mxu0 0.0
    %891 = vmatpush2.msra.mxu0 0.0
    %892 = vmatprep.subr.mxu0 0.0
    %893 = vmatpush2.msra.mxu0 0.0
    %894 = vmatprep.subr.mxu0 0.0
    %895 = vmatpush2.msra.mxu0 0.0
    %896 = vmatprep.subr.mxu0 0.0
    %897 = vmatpush2.msra.mxu0 0.0
    %898 = vmatprep.subr.mxu0 0.0
    %899 = vmatpush2.msra.mxu0 0.0
    %900 = vmatprep.subr.mxu0 0.0
    %901 = vmatpush2.msra.mxu0 0.0
    %902 = vmatprep.subr.mxu0 0.0
    %903 = vmatpush2.msra.mxu0 0.0
    %904 = vmatprep.subr.mxu0 0.0
    %905 = vmatpush2.msra.mxu0 0.0
    %906 = vmatprep.subr.mxu0 0.0
    %907 = vmatpush2.msra.mxu0 0.0
    %908 = vmatprep.mubr.f32.mxu0 0.0
    %909 = vmatmul.mubr.f32.gmra.mxu0 %v842
    %v910 = vpop.f32.mrf.mxu0
    %v911 = vadd.f32 0.0, %v910
    %v912 = vpop.f32.mrf.mxu0
    %v913 = vadd.f32 0.0, %v912
    %914 = vdwg.mxu0
    %v915 = vlaneseq
    %v916 = vshrl.u32 %v915, 7
    %v917 = vsub.s32 0, %v916
    %v918 = vrot.slane %v911, %v917
    %v919 = vlaneseq
    %v920 = vshrl.u32 %v919, 7
    %v921 = vsub.s32 0, %v920
    %v922 = vrot.slane %v913, %v921
    %v923 = vadd.f32 %v832, %v918
    %v924 = vadd.f32 %v833, %v922
    %v925 = vadd.f32 %v834, %v918
    %v926 = vadd.f32 %v835, %v922
    %v927 = vadd.f32 %v836, %v918
    %v928 = vadd.f32 %v837, %v922
    %v929 = vadd.f32 %v838, %v918
    %v930 = vadd.f32 %v839, %v922
    %v931 = vmax.f32 %v923, 0.0
    %v932 = vmax.f32 %v924, 0.0
    %v933 = vmax.f32 %v925, 0.0
    %v934 = vmax.f32 %v926, 0.0
    %v935 = vmax.f32 %v927, 0.0
    %v936 = vmax.f32 %v928, 0.0
    %v937 = vmax.f32 %v929, 0.0
    %v938 = vmax.f32 %v930, 0.0
    %v939 = vrot.slane %v931, 1
    %v940 = vrot.slane %v932, 1
    %v941 = vrot.slane %v933, 1
    %v942 = vrot.slane %v934, 1
    %v943 = vrot.slane %v935, 1
    %v944 = vrot.slane %v936, 1
    %v945 = vrot.slane %v937, 1
    %v946 = vrot.slane %v938, 1
    %v947 = vsel %vm102, %v943, %v945
    %v948 = vsel %vm102, %v944, %v946
    %v949 = vsel %vm102, %v941, %v943
    %v950 = vsel %vm102, %v942, %v944
    %v951 = vsel %vm102, %v939, %v941
    %v952 = vsel %vm102, %v940, %v942
    %v953 = vsel %vm102, %v945, %v939
    %v954 = vsel %vm102, %v946, %v940
    %v955 = vmax.f32 %v931, %v951
    %v956 = vmax.f32 %v932, %v952
    %v957 = vmax.f32 %v933, %v949
    %v958 = vmax.f32 %v934, %v950
    %v959 = vmax.f32 %v935, %v947
    %v960 = vmax.f32 %v936, %v948
    %v961 = vmax.f32 %v937, %v953
    %v962 = vmax.f32 %v938, %v954
    %v963 = vld [vmem:[%s11] sm:$0xff]
    %v964 = vld [vmem:[%s11 + $0x8] sm:$0xff]
    %vm965 = vcmask 261120
    %v967 = vsel %vm965, %v963, 0
    %v970 = vsel %vm965, %v964, 0
    %972 = vmatprep.subr.mxu0 0.0
    %973 = vmatpush1.msra.mxu0 0.0
    %974 = vmatprep.subr.mxu0 0.0
    %975 = vmatpush1.msra.mxu0 0.0
    %976 = vmatprep.subr.mxu0 0.0
    %977 = vmatpush1.msra.mxu0 0.0
    %978 = vmatprep.subr.mxu0 0.0
    %979 = vmatpush1.msra.mxu0 0.0
    %980 = vmatprep.subr.mxu0 0.0
    %981 = vmatpush1.msra.mxu0 0.0
    %982 = vmatprep.subr.mxu0 0.0
    %983 = vmatpush1.msra.mxu0 0.0
    %984 = vmatprep.subr.mxu0 0.0
    %985 = vmatpush1.msra.mxu0 0.0
    %986 = vmatprep.subr.mxu0 0.0
    %987 = vmatpush1.msra.mxu0 0.0
    %988 = vmatprep.subr.mxu0 0.0
    %989 = vmatpush1.msra.mxu0 0.0
    %990 = vmatprep.subr.mxu0 0.0
    %991 = vmatpush1.msra.mxu0 0.0
    %992 = vmatprep.subr.mxu0 0.0
    %993 = vmatpush1.msra.mxu0 0.0
    %994 = vmatprep.subr.mxu0 0.0
    %995 = vmatpush1.msra.mxu0 0.0
    %996 = vmatprep.subr.mxu0 %v962
    %997 = vmatpush1.msra.mxu0 %v961
    %998 = vmatprep.subr.mxu0 %v960
    %999 = vmatpush1.msra.mxu0 %v959
    %1000 = vmatprep.subr.mxu0 %v958
    %1001 = vmatpush1.msra.mxu0 %v957
    %1002 = vmatprep.subr.mxu0 %v956
    %1003 = vmatpush1.msra.mxu0 %v955
    %1004 = vmatprep.subr.mxu0 0.0
    %1005 = vmatpush2.msra.mxu0 0.0
    %1006 = vmatprep.subr.mxu0 0.0
    %1007 = vmatpush2.msra.mxu0 0.0
    %1008 = vmatprep.subr.mxu0 0.0
    %1009 = vmatpush2.msra.mxu0 0.0
    %1010 = vmatprep.subr.mxu0 0.0
    %1011 = vmatpush2.msra.mxu0 0.0
    %1012 = vmatprep.subr.mxu0 0.0
    %1013 = vmatpush2.msra.mxu0 0.0
    %1014 = vmatprep.subr.mxu0 0.0
    %1015 = vmatpush2.msra.mxu0 0.0
    %1016 = vmatprep.subr.mxu0 0.0
    %1017 = vmatpush2.msra.mxu0 0.0
    %1018 = vmatprep.subr.mxu0 0.0
    %1019 = vmatpush2.msra.mxu0 0.0
    %1020 = vmatprep.subr.mxu0 0.0
    %1021 = vmatpush2.msra.mxu0 0.0
    %1022 = vmatprep.subr.mxu0 0.0
    %1023 = vmatpush2.msra.mxu0 0.0
    %1024 = vmatprep.subr.mxu0 0.0
    %1025 = vmatpush2.msra.mxu0 0.0
    %1026 = vmatprep.subr.mxu0 0.0
    %1027 = vmatpush2.msra.mxu0 0.0
    %1028 = vmatprep.subr.mxu0 0.0
    %1029 = vmatpush2.msra.mxu0 0.0
    %1030 = vmatprep.subr.mxu0 0.0
    %1031 = vmatpush2.msra.mxu0 0.0
    %1032 = vmatprep.subr.mxu0 0.0
    %1033 = vmatpush2.msra.mxu0 0.0
    %1034 = vmatprep.subr.mxu0 0.0
    %1035 = vmatpush2.msra.mxu0 0.0
    %1036 = vmatprep.mubr.f32.mxu0 0.0
    %1037 = vmatmul.mubr.f32.gmra.mxu0 %v967
    %v1038 = vpop.f32.mrf.mxu0
    %v1039 = vadd.f32 0.0, %v1038
    %v1040 = vpop.f32.mrf.mxu0
    %v1041 = vadd.f32 0.0, %v1040
    %1042 = vmatprep.mubr.f32.mxu0 0.0
    %1043 = vmatmul.mubr.f32.gmra.mxu0 %v970
    %v1044 = vpop.f32.mrf.mxu0
    %v1045 = vadd.f32 0.0, %v1044
    %v1046 = vpop.f32.mrf.mxu0
    %v1047 = vadd.f32 0.0, %v1046
    %1048 = vdwg.mxu0
    %v1049 = vld [vmem:[%s12] sm:$0xff]
    %v1050 = vld [vmem:[%s12 + $0x8] sm:$0xff]
    %v1051 = vld [vmem:[%s12 + $0x10] sm:$0xff]
    %v1052 = vld [vmem:[%s12 + $0x18] sm:$0xff]
    %v1053 = vld [vmem:[%s12 + $0x20] sm:$0xff]
    %v1054 = vld [vmem:[%s12 + $0x28] sm:$0xff]
    %v1055 = vld [vmem:[%s12 + $0x30] sm:$0xff]
    %v1056 = vld [vmem:[%s12 + $0x38] sm:$0xff]
    %v1057 = vld [vmem:[%s12 + $0x40] sm:$0xff]
    %v1058 = vld [vmem:[%s12 + $0x48] sm:$0xff]
    %v1059 = vld [vmem:[%s12 + $0x50] sm:$0xff]
    %v1060 = vld [vmem:[%s12 + $0x58] sm:$0xff]
    %v1061 = vld [vmem:[%s12 + $0x60] sm:$0xff]
    %v1062 = vld [vmem:[%s12 + $0x68] sm:$0xff]
    %v1063 = vld [vmem:[%s12 + $0x70] sm:$0xff]
    %v1064 = vld [vmem:[%s12 + $0x78] sm:$0xff]
    %v1065 = vld [vmem:[%s12 + $0x80] sm:$0xff]
    %v1066 = vld [vmem:[%s12 + $0x88] sm:$0xff]
    %v1067 = vld [vmem:[%s12 + $0x90] sm:$0xff]
    %v1068 = vld [vmem:[%s12 + $0x98] sm:$0xff]
    %v1069 = vld [vmem:[%s12 + $0xa0] sm:$0xff]
    %v1070 = vld [vmem:[%s12 + $0xa8] sm:$0xff]
    %v1071 = vld [vmem:[%s12 + $0xb0] sm:$0xff]
    %v1072 = vld [vmem:[%s12 + $0xb8] sm:$0xff]
    %v1073 = vld [vmem:[%s12 + $0xc0] sm:$0xff]
    %v1074 = vld [vmem:[%s12 + $0xc8] sm:$0xff]
    %v1075 = vld [vmem:[%s12 + $0xd0] sm:$0xff]
    %v1076 = vld [vmem:[%s12 + $0xd8] sm:$0xff]
    %v1077 = vld [vmem:[%s12 + $0xe0] sm:$0xff]
    %v1078 = vld [vmem:[%s12 + $0xe8] sm:$0xff]
    %v1079 = vld [vmem:[%s12 + $0xf0] sm:$0xff]
    %v1080 = vld [vmem:[%s12 + $0xf8] sm:$0xff]
    %1081 = vmatprep.subr.mxu0 0.0
    %1082 = vmatpush1.msra.mxu0 %v1064
    %1083 = vmatprep.subr.mxu0 0.0
    %1084 = vmatpush1.msra.mxu0 %v1063
    %1085 = vmatprep.subr.mxu0 0.0
    %1086 = vmatpush1.msra.mxu0 %v1062
    %1087 = vmatprep.subr.mxu0 0.0
    %1088 = vmatpush1.msra.mxu0 %v1061
    %1089 = vmatprep.subr.mxu0 0.0
    %1090 = vmatpush1.msra.mxu0 %v1060
    %1091 = vmatprep.subr.mxu0 0.0
    %1092 = vmatpush1.msra.mxu0 %v1059
    %1093 = vmatprep.subr.mxu0 0.0
    %1094 = vmatpush1.msra.mxu0 %v1058
    %1095 = vmatprep.subr.mxu0 0.0
    %1096 = vmatpush1.msra.mxu0 %v1057
    %1097 = vmatprep.subr.mxu0 0.0
    %1098 = vmatpush1.msra.mxu0 %v1056
    %1099 = vmatprep.subr.mxu0 0.0
    %1100 = vmatpush1.msra.mxu0 %v1055
    %1101 = vmatprep.subr.mxu0 0.0
    %1102 = vmatpush1.msra.mxu0 %v1054
    %1103 = vmatprep.subr.mxu0 0.0
    %1104 = vmatpush1.msra.mxu0 %v1053
    %1105 = vmatprep.subr.mxu0 0.0
    %1106 = vmatpush1.msra.mxu0 %v1052
    %1107 = vmatprep.subr.mxu0 0.0
    %1108 = vmatpush1.msra.mxu0 %v1051
    %1109 = vmatprep.subr.mxu0 0.0
    %1110 = vmatpush1.msra.mxu0 %v1050
    %1111 = vmatprep.subr.mxu0 0.0
    %1112 = vmatpush1.msra.mxu0 %v1049
    %1113 = vmatprep.subr.mxu0 0.0
    %1114 = vmatpush2.msra.mxu0 %v1080
    %1115 = vmatprep.subr.mxu0 0.0
    %1116 = vmatpush2.msra.mxu0 %v1079
    %1117 = vmatprep.subr.mxu0 0.0
    %1118 = vmatpush2.msra.mxu0 %v1078
    %1119 = vmatprep.subr.mxu0 0.0
    %1120 = vmatpush2.msra.mxu0 %v1077
    %1121 = vmatprep.subr.mxu0 0.0
    %1122 = vmatpush2.msra.mxu0 %v1076
    %1123 = vmatprep.subr.mxu0 0.0
    %1124 = vmatpush2.msra.mxu0 %v1075
    %1125 = vmatprep.subr.mxu0 0.0
    %1126 = vmatpush2.msra.mxu0 %v1074
    %1127 = vmatprep.subr.mxu0 0.0
    %1128 = vmatpush2.msra.mxu0 %v1073
    %1129 = vmatprep.subr.mxu0 0.0
    %1130 = vmatpush2.msra.mxu0 %v1072
    %1131 = vmatprep.subr.mxu0 0.0
    %1132 = vmatpush2.msra.mxu0 %v1071
    %1133 = vmatprep.subr.mxu0 0.0
    %1134 = vmatpush2.msra.mxu0 %v1070
    %1135 = vmatprep.subr.mxu0 0.0
    %1136 = vmatpush2.msra.mxu0 %v1069
    %1137 = vmatprep.subr.mxu0 0.0
    %1138 = vmatpush2.msra.mxu0 %v1068
    %1139 = vmatprep.subr.mxu0 0.0
    %1140 = vmatpush2.msra.mxu0 %v1067
    %1141 = vmatprep.subr.mxu0 0.0
    %1142 = vmatpush2.msra.mxu0 %v1066
    %1143 = vmatprep.subr.mxu0 0.0
    %1144 = vmatpush2.msra.mxu0 %v1065
    %1145 = vmatprep.mubr.f32.mxu0 %v1041
    %1146 = vmatmul.mubr.f32.gmra.mxu0 %v1039
    %v1147 = vpop.f32.mrf.mxu0
    %v1148 = vadd.f32 0.0, %v1147
    %v1149 = vpop.f32.mrf.mxu0
    %1150 = vmatprep.mubr.f32.mxu0 %v1047
    %1151 = vmatmul.mubr.f32.gmra.mxu0 %v1045
    %v1152 = vpop.f32.mrf.mxu0
    %v1153 = vadd.f32 0.0, %v1152
    %v1154 = vpop.f32.mrf.mxu0
    %1155 = vdwg.mxu0
    %s1156 = scalar_lea.vmem %s12, 256
    %v1157 = vld [vmem:[%s1156] sm:$0xff]
    %v1158 = vld [vmem:[%s1156 + $0x8] sm:$0xff]
    %v1159 = vld [vmem:[%s1156 + $0x10] sm:$0xff]
    %v1160 = vld [vmem:[%s1156 + $0x18] sm:$0xff]
    %v1161 = vld [vmem:[%s1156 + $0x20] sm:$0xff]
    %v1162 = vld [vmem:[%s1156 + $0x28] sm:$0xff]
    %v1163 = vld [vmem:[%s1156 + $0x30] sm:$0xff]
    %v1164 = vld [vmem:[%s1156 + $0x38] sm:$0xff]
    %v1165 = vld [vmem:[%s1156 + $0x40] sm:$0xff]
    %v1166 = vld [vmem:[%s1156 + $0x48] sm:$0xff]
    %v1167 = vld [vmem:[%s1156 + $0x50] sm:$0xff]
    %v1168 = vld [vmem:[%s1156 + $0x58] sm:$0xff]
    %v1169 = vld [vmem:[%s1156 + $0x60] sm:$0xff]
    %v1170 = vld [vmem:[%s1156 + $0x68] sm:$0xff]
    %v1171 = vld [vmem:[%s1156 + $0x70] sm:$0xff]
    %v1172 = vld [vmem:[%s1156 + $0x78] sm:$0xff]
    %v1173 = vld [vmem:[%s1156 + $0x80] sm:$0xff]
    %v1174 = vld [vmem:[%s1156 + $0x88] sm:$0xff]
    %v1175 = vld [vmem:[%s1156 + $0x90] sm:$0xff]
    %v1176 = vld [vmem:[%s1156 + $0x98] sm:$0xff]
    %v1177 = vld [vmem:[%s1156 + $0xa0] sm:$0xff]
    %v1178 = vld [vmem:[%s1156 + $0xa8] sm:$0xff]
    %v1179 = vld [vmem:[%s1156 + $0xb0] sm:$0xff]
    %v1180 = vld [vmem:[%s1156 + $0xb8] sm:$0xff]
    %v1181 = vld [vmem:[%s1156 + $0xc0] sm:$0xff]
    %v1182 = vld [vmem:[%s1156 + $0xc8] sm:$0xff]
    %v1183 = vld [vmem:[%s1156 + $0xd0] sm:$0xff]
    %v1184 = vld [vmem:[%s1156 + $0xd8] sm:$0xff]
    %v1185 = vld [vmem:[%s1156 + $0xe0] sm:$0xff]
    %v1186 = vld [vmem:[%s1156 + $0xe8] sm:$0xff]
    %v1187 = vld [vmem:[%s1156 + $0xf0] sm:$0xff]
    %v1188 = vld [vmem:[%s1156 + $0xf8] sm:$0xff]
    %1189 = vmatprep.subr.mxu0 0.0
    %1190 = vmatpush1.msra.mxu0 %v1172
    %1191 = vmatprep.subr.mxu0 0.0
    %1192 = vmatpush1.msra.mxu0 %v1171
    %1193 = vmatprep.subr.mxu0 0.0
    %1194 = vmatpush1.msra.mxu0 %v1170
    %1195 = vmatprep.subr.mxu0 0.0
    %1196 = vmatpush1.msra.mxu0 %v1169
    %1197 = vmatprep.subr.mxu0 0.0
    %1198 = vmatpush1.msra.mxu0 %v1168
    %1199 = vmatprep.subr.mxu0 0.0
    %1200 = vmatpush1.msra.mxu0 %v1167
    %1201 = vmatprep.subr.mxu0 0.0
    %1202 = vmatpush1.msra.mxu0 %v1166
    %1203 = vmatprep.subr.mxu0 0.0
    %1204 = vmatpush1.msra.mxu0 %v1165
    %1205 = vmatprep.subr.mxu0 0.0
    %1206 = vmatpush1.msra.mxu0 %v1164
    %1207 = vmatprep.subr.mxu0 0.0
    %1208 = vmatpush1.msra.mxu0 %v1163
    %1209 = vmatprep.subr.mxu0 0.0
    %1210 = vmatpush1.msra.mxu0 %v1162
    %1211 = vmatprep.subr.mxu0 0.0
    %1212 = vmatpush1.msra.mxu0 %v1161
    %1213 = vmatprep.subr.mxu0 0.0
    %1214 = vmatpush1.msra.mxu0 %v1160
    %1215 = vmatprep.subr.mxu0 0.0
    %1216 = vmatpush1.msra.mxu0 %v1159
    %1217 = vmatprep.subr.mxu0 0.0
    %1218 = vmatpush1.msra.mxu0 %v1158
    %1219 = vmatprep.subr.mxu0 0.0
    %1220 = vmatpush1.msra.mxu0 %v1157
    %1221 = vmatprep.subr.mxu0 0.0
    %1222 = vmatpush2.msra.mxu0 %v1188
    %1223 = vmatprep.subr.mxu0 0.0
    %1224 = vmatpush2.msra.mxu0 %v1187
    %1225 = vmatprep.subr.mxu0 0.0
    %1226 = vmatpush2.msra.mxu0 %v1186
    %1227 = vmatprep.subr.mxu0 0.0
    %1228 = vmatpush2.msra.mxu0 %v1185
    %1229 = vmatprep.subr.mxu0 0.0
    %1230 = vmatpush2.msra.mxu0 %v1184
    %1231 = vmatprep.subr.mxu0 0.0
    %1232 = vmatpush2.msra.mxu0 %v1183
    %1233 = vmatprep.subr.mxu0 0.0
    %1234 = vmatpush2.msra.mxu0 %v1182
    %1235 = vmatprep.subr.mxu0 0.0
    %1236 = vmatpush2.msra.mxu0 %v1181
    %1237 = vmatprep.subr.mxu0 0.0
    %1238 = vmatpush2.msra.mxu0 %v1180
    %1239 = vmatprep.subr.mxu0 0.0
    %1240 = vmatpush2.msra.mxu0 %v1179
    %1241 = vmatprep.subr.mxu0 0.0
    %1242 = vmatpush2.msra.mxu0 %v1178
    %1243 = vmatprep.subr.mxu0 0.0
    %1244 = vmatpush2.msra.mxu0 %v1177
    %1245 = vmatprep.subr.mxu0 0.0
    %1246 = vmatpush2.msra.mxu0 %v1176
    %1247 = vmatprep.subr.mxu0 0.0
    %1248 = vmatpush2.msra.mxu0 %v1175
    %1249 = vmatprep.subr.mxu0 0.0
    %1250 = vmatpush2.msra.mxu0 %v1174
    %1251 = vmatprep.subr.mxu0 0.0
    %1252 = vmatpush2.msra.mxu0 %v1173
    %1253 = vmatprep.mubr.f32.mxu0 %v1041
    %1254 = vmatmul.mubr.f32.gmra.mxu0 %v1039
    %v1255 = vpop.f32.mrf.mxu0
    %v1256 = vadd.f32 0.0, %v1255
    %v1257 = vpop.f32.mrf.mxu0
    %1258 = vmatprep.mubr.f32.mxu0 %v1047
    %1259 = vmatmul.mubr.f32.gmra.mxu0 %v1045
    %v1260 = vpop.f32.mrf.mxu0
    %v1261 = vadd.f32 0.0, %v1260
    %v1262 = vpop.f32.mrf.mxu0
    %1263 = vdwg.mxu0
    %v1264 = vmax.f32 %v1148, %v1256
    %v1265 = vmax.f32 %v1153, %v1261
    %v1266 = vand.u32 %v69, 7
    %v1267 = vand.u32 %v70, 7
    %vm1268 = vcmp.eq.s32.totalorder %v1266, 0
    %vm1269 = vcmp.eq.s32.totalorder %v1267, 0
    %v1270 = vrot.slane %v1264, 7
    %v1271 = vrot.slane %v1265, 7
    %v1272 = vsel %vm85, %v1270, %v1271
    %v1273 = vsel %vm85, %v1271, %v1270
    %v1274 = vsel %vm1268, 0.0, %v1273
    %v1275 = vsel %vm1269, 0.0, %v1272
    %vm1276 = vcmp.eq.s32.totalorder %v1266, 7
    %vm1277 = vcmp.eq.s32.totalorder %v1267, 7
    %v1278 = vrot.slane %v1264, 1
    %v1279 = vrot.slane %v1265, 1
    %v1280 = vsel %vm102, %v1278, %v1279
    %v1281 = vsel %vm102, %v1279, %v1278
    %v1282 = vsel %vm1276, 0.0, %v1280
    %v1283 = vsel %vm1277, 0.0, %v1281
    %v1284 = vld [vmem:[%s2] sm:$0xff]
    %v1285 = vld [vmem:[%s2 + $0x8] sm:$0xff]
    %v1286 = vld [vmem:[%s2 + $0x10] sm:$0xff]
    %v1287 = vld [vmem:[%s2 + $0x18] sm:$0xff]
    %v1288 = vld [vmem:[%s2 + $0x20] sm:$0xff]
    %v1289 = vld [vmem:[%s2 + $0x28] sm:$0xff]
    %v1290 = vld [vmem:[%s2 + $0x30] sm:$0xff]
    %v1291 = vld [vmem:[%s2 + $0x38] sm:$0xff]
    %v1292 = vld [vmem:[%s2 + $0x40] sm:$0xff]
    %v1293 = vld [vmem:[%s2 + $0x48] sm:$0xff]
    %v1294 = vld [vmem:[%s2 + $0x50] sm:$0xff]
    %v1295 = vld [vmem:[%s2 + $0x58] sm:$0xff]
    %v1296 = vld [vmem:[%s2 + $0x60] sm:$0xff]
    %v1297 = vld [vmem:[%s2 + $0x68] sm:$0xff]
    %v1298 = vld [vmem:[%s2 + $0x70] sm:$0xff]
    %v1299 = vld [vmem:[%s2 + $0x78] sm:$0xff]
    %v1300 = vld [vmem:[%s2 + $0x80] sm:$0xff]
    %v1301 = vld [vmem:[%s2 + $0x88] sm:$0xff]
    %v1302 = vld [vmem:[%s2 + $0x90] sm:$0xff]
    %v1303 = vld [vmem:[%s2 + $0x98] sm:$0xff]
    %v1304 = vld [vmem:[%s2 + $0xa0] sm:$0xff]
    %v1305 = vld [vmem:[%s2 + $0xa8] sm:$0xff]
    %v1306 = vld [vmem:[%s2 + $0xb0] sm:$0xff]
    %v1307 = vld [vmem:[%s2 + $0xb8] sm:$0xff]
    %v1308 = vld [vmem:[%s2 + $0xc0] sm:$0xff]
    %v1309 = vld [vmem:[%s2 + $0xc8] sm:$0xff]
    %v1310 = vld [vmem:[%s2 + $0xd0] sm:$0xff]
    %v1311 = vld [vmem:[%s2 + $0xd8] sm:$0xff]
    %v1312 = vld [vmem:[%s2 + $0xe0] sm:$0xff]
    %v1313 = vld [vmem:[%s2 + $0xe8] sm:$0xff]
    %v1314 = vld [vmem:[%s2 + $0xf0] sm:$0xff]
    %v1315 = vld [vmem:[%s2 + $0xf8] sm:$0xff]
    %v1316 = vld [vmem:[%s2 + $0x100] sm:$0xff]
    %v1317 = vld [vmem:[%s2 + $0x108] sm:$0xff]
    %v1318 = vld [vmem:[%s2 + $0x110] sm:$0xff]
    %v1319 = vld [vmem:[%s2 + $0x118] sm:$0xff]
    %v1320 = vld [vmem:[%s2 + $0x120] sm:$0xff]
    %v1321 = vld [vmem:[%s2 + $0x128] sm:$0xff]
    %v1322 = vld [vmem:[%s2 + $0x130] sm:$0xff]
    %v1323 = vld [vmem:[%s2 + $0x138] sm:$0xff]
    %v1324 = vld [vmem:[%s2 + $0x140] sm:$0xff]
    %v1325 = vld [vmem:[%s2 + $0x148] sm:$0xff]
    %v1326 = vld [vmem:[%s2 + $0x150] sm:$0xff]
    %v1327 = vld [vmem:[%s2 + $0x158] sm:$0xff]
    %v1328 = vld [vmem:[%s2 + $0x160] sm:$0xff]
    %v1329 = vld [vmem:[%s2 + $0x168] sm:$0xff]
    %v1330 = vld [vmem:[%s2 + $0x170] sm:$0xff]
    %v1331 = vld [vmem:[%s2 + $0x178] sm:$0xff]
    %1332 = vmatprep.subr.mxu0 0.0
    %1333 = vmatpush1.msra.mxu0 %v1299
    %1334 = vmatprep.subr.mxu0 0.0
    %1335 = vmatpush1.msra.mxu0 %v1298
    %1336 = vmatprep.subr.mxu0 0.0
    %1337 = vmatpush1.msra.mxu0 %v1297
    %1338 = vmatprep.subr.mxu0 0.0
    %1339 = vmatpush1.msra.mxu0 %v1296
    %1340 = vmatprep.subr.mxu0 0.0
    %1341 = vmatpush1.msra.mxu0 %v1295
    %1342 = vmatprep.subr.mxu0 0.0
    %1343 = vmatpush1.msra.mxu0 %v1294
    %1344 = vmatprep.subr.mxu0 0.0
    %1345 = vmatpush1.msra.mxu0 %v1293
    %1346 = vmatprep.subr.mxu0 0.0
    %1347 = vmatpush1.msra.mxu0 %v1292
    %1348 = vmatprep.subr.mxu0 0.0
    %1349 = vmatpush1.msra.mxu0 %v1291
    %1350 = vmatprep.subr.mxu0 0.0
    %1351 = vmatpush1.msra.mxu0 %v1290
    %1352 = vmatprep.subr.mxu0 0.0
    %1353 = vmatpush1.msra.mxu0 %v1289
    %1354 = vmatprep.subr.mxu0 0.0
    %1355 = vmatpush1.msra.mxu0 %v1288
    %1356 = vmatprep.subr.mxu0 0.0
    %1357 = vmatpush1.msra.mxu0 %v1287
    %1358 = vmatprep.subr.mxu0 0.0
    %1359 = vmatpush1.msra.mxu0 %v1286
    %1360 = vmatprep.subr.mxu0 0.0
    %1361 = vmatpush1.msra.mxu0 %v1285
    %1362 = vmatprep.subr.mxu0 0.0
    %1363 = vmatpush1.msra.mxu0 %v1284
    %1364 = vmatprep.subr.mxu0 0.0
    %1365 = vmatpush2.msra.mxu0 %v1315
    %1366 = vmatprep.subr.mxu0 0.0
    %1367 = vmatpush2.msra.mxu0 %v1314
    %1368 = vmatprep.subr.mxu0 0.0
    %1369 = vmatpush2.msra.mxu0 %v1313
    %1370 = vmatprep.subr.mxu0 0.0
    %1371 = vmatpush2.msra.mxu0 %v1312
    %1372 = vmatprep.subr.mxu0 0.0
    %1373 = vmatpush2.msra.mxu0 %v1311
    %1374 = vmatprep.subr.mxu0 0.0
    %1375 = vmatpush2.msra.mxu0 %v1310
    %1376 = vmatprep.subr.mxu0 0.0
    %1377 = vmatpush2.msra.mxu0 %v1309
    %1378 = vmatprep.subr.mxu0 0.0
    %1379 = vmatpush2.msra.mxu0 %v1308
    %1380 = vmatprep.subr.mxu0 0.0
    %1381 = vmatpush2.msra.mxu0 %v1307
    %1382 = vmatprep.subr.mxu0 0.0
    %1383 = vmatpush2.msra.mxu0 %v1306
    %1384 = vmatprep.subr.mxu0 0.0
    %1385 = vmatpush2.msra.mxu0 %v1305
    %1386 = vmatprep.subr.mxu0 0.0
    %1387 = vmatpush2.msra.mxu0 %v1304
    %1388 = vmatprep.subr.mxu0 0.0
    %1389 = vmatpush2.msra.mxu0 %v1303
    %1390 = vmatprep.subr.mxu0 0.0
    %1391 = vmatpush2.msra.mxu0 %v1302
    %1392 = vmatprep.subr.mxu0 0.0
    %1393 = vmatpush2.msra.mxu0 %v1301
    %1394 = vmatprep.subr.mxu0 0.0
    %1395 = vmatpush2.msra.mxu0 %v1300
    %1396 = vmatprep.mubr.f32.mxu0 %v1264
    %1397 = vmatmul.mubr.f32.gmra.mxu0 %v1274
    %v1398 = vpop.f32.mrf.mxu0
    %v1399 = vadd.f32 0.0, %v1398
    %v1400 = vpop.f32.mrf.mxu0
    %1401 = vmatprep.mubr.f32.mxu0 %v1265
    %1402 = vmatmul.mubr.f32.gmra.mxu0 %v1275
    %v1403 = vpop.f32.mrf.mxu0
    %v1404 = vadd.f32 0.0, %v1403
    %v1405 = vpop.f32.mrf.mxu0
    %1406 = vdwg.mxu0
    %1407 = vmatprep.subr.mxu0 0.0
    %1408 = vmatpush1.msra.mxu0 %v1331
    %1409 = vmatprep.subr.mxu0 0.0
    %1410 = vmatpush1.msra.mxu0 %v1330
    %1411 = vmatprep.subr.mxu0 0.0
    %1412 = vmatpush1.msra.mxu0 %v1329
    %1413 = vmatprep.subr.mxu0 0.0
    %1414 = vmatpush1.msra.mxu0 %v1328
    %1415 = vmatprep.subr.mxu0 0.0
    %1416 = vmatpush1.msra.mxu0 %v1327
    %1417 = vmatprep.subr.mxu0 0.0
    %1418 = vmatpush1.msra.mxu0 %v1326
    %1419 = vmatprep.subr.mxu0 0.0
    %1420 = vmatpush1.msra.mxu0 %v1325
    %1421 = vmatprep.subr.mxu0 0.0
    %1422 = vmatpush1.msra.mxu0 %v1324
    %1423 = vmatprep.subr.mxu0 0.0
    %1424 = vmatpush1.msra.mxu0 %v1323
    %1425 = vmatprep.subr.mxu0 0.0
    %1426 = vmatpush1.msra.mxu0 %v1322
    %1427 = vmatprep.subr.mxu0 0.0
    %1428 = vmatpush1.msra.mxu0 %v1321
    %1429 = vmatprep.subr.mxu0 0.0
    %1430 = vmatpush1.msra.mxu0 %v1320
    %1431 = vmatprep.subr.mxu0 0.0
    %1432 = vmatpush1.msra.mxu0 %v1319
    %1433 = vmatprep.subr.mxu0 0.0
    %1434 = vmatpush1.msra.mxu0 %v1318
    %1435 = vmatprep.subr.mxu0 0.0
    %1436 = vmatpush1.msra.mxu0 %v1317
    %1437 = vmatprep.subr.mxu0 0.0
    %1438 = vmatpush1.msra.mxu0 %v1316
    %1439 = vmatprep.subr.mxu0 0.0
    %1440 = vmatpush2.msra.mxu0 0.0
    %1441 = vmatprep.subr.mxu0 0.0
    %1442 = vmatpush2.msra.mxu0 0.0
    %1443 = vmatprep.subr.mxu0 0.0
    %1444 = vmatpush2.msra.mxu0 0.0
    %1445 = vmatprep.subr.mxu0 0.0
    %1446 = vmatpush2.msra.mxu0 0.0
    %1447 = vmatprep.subr.mxu0 0.0
    %1448 = vmatpush2.msra.mxu0 0.0
    %1449 = vmatprep.subr.mxu0 0.0
    %1450 = vmatpush2.msra.mxu0 0.0
    %1451 = vmatprep.subr.mxu0 0.0
    %1452 = vmatpush2.msra.mxu0 0.0
    %1453 = vmatprep.subr.mxu0 0.0
    %1454 = vmatpush2.msra.mxu0 0.0
    %1455 = vmatprep.subr.mxu0 0.0
    %1456 = vmatpush2.msra.mxu0 0.0
    %1457 = vmatprep.subr.mxu0 0.0
    %1458 = vmatpush2.msra.mxu0 0.0
    %1459 = vmatprep.subr.mxu0 0.0
    %1460 = vmatpush2.msra.mxu0 0.0
    %1461 = vmatprep.subr.mxu0 0.0
    %1462 = vmatpush2.msra.mxu0 0.0
    %1463 = vmatprep.subr.mxu0 0.0
    %1464 = vmatpush2.msra.mxu0 0.0
    %1465 = vmatprep.subr.mxu0 0.0
    %1466 = vmatpush2.msra.mxu0 0.0
    %1467 = vmatprep.subr.mxu0 0.0
    %1468 = vmatpush2.msra.mxu0 0.0
    %1469 = vmatprep.subr.mxu0 0.0
    %1470 = vmatpush2.msra.mxu0 0.0
    %1471 = vmatprep.mubr.f32.mxu0 0.0
    %1472 = vmatmul.mubr.f32.gmra.mxu0 %v1282
    %v1473 = vpop.f32.mrf.mxu0
    %v1474 = vadd.f32 %v1399, %v1473
    %v1475 = vpop.f32.mrf.mxu0
    %1476 = vmatprep.mubr.f32.mxu0 0.0
    %1477 = vmatmul.mubr.f32.gmra.mxu0 %v1283
    %v1478 = vpop.f32.mrf.mxu0
    %v1479 = vadd.f32 %v1404, %v1478
    %v1480 = vpop.f32.mrf.mxu0
    %1481 = vdwg.mxu0
    %v1482 = vld [vmem:[%s7] sm:$0xff]
    %v1483 = vld [vmem:[%s7 + $0x8] sm:$0xff]
    %v1484 = vld [vmem:[%s7 + $0x10] sm:$0xff]
    %v1485 = vld [vmem:[%s7 + $0x18] sm:$0xff]
    %v1486 = vld [vmem:[%s8] sm:$0xf]
    %v1487 = vsel %vm965, %v1474, 0.0
    %v1488 = vsel %vm965, %v1479, 0.0
    %v1489 = vadd.f32 %v1487, %v1488
    %v1490 = vrot.slane %v1489, 4
    %v1491 = vadd.f32 %v1489, %v1490
    %v1492 = vrot.slane %v1491, 2
    %v1493 = vadd.f32 %v1491, %v1492
    %v1494 = vrot.slane %v1493, 1
    %v1495 = vadd.f32 %v1493, %v1494
    %v1497 = vsel %vm965, %v1495, 0
    %1499 = vmatprep.subr.mxu0 0.0
    %1500 = vmatpush1.msra.mxu0 0.0
    %1501 = vmatprep.subr.mxu0 0.0
    %1502 = vmatpush1.msra.mxu0 0.0
    %1503 = vmatprep.subr.mxu0 0.0
    %1504 = vmatpush1.msra.mxu0 0.0
    %1505 = vmatprep.subr.mxu0 0.0
    %1506 = vmatpush1.msra.mxu0 0.0
    %1507 = vmatprep.subr.mxu0 0.0
    %1508 = vmatpush1.msra.mxu0 0.0
    %1509 = vmatprep.subr.mxu0 0.0
    %1510 = vmatpush1.msra.mxu0 0.0
    %1511 = vmatprep.subr.mxu0 0.0
    %1512 = vmatpush1.msra.mxu0 0.0
    %1513 = vmatprep.subr.mxu0 0.0
    %1514 = vmatpush1.msra.mxu0 0.0
    %1515 = vmatprep.subr.mxu0 0.0
    %1516 = vmatpush1.msra.mxu0 0.0
    %1517 = vmatprep.subr.mxu0 0.0
    %1518 = vmatpush1.msra.mxu0 0.0
    %1519 = vmatprep.subr.mxu0 0.0
    %1520 = vmatpush1.msra.mxu0 0.0
    %1521 = vmatprep.subr.mxu0 0.0
    %1522 = vmatpush1.msra.mxu0 0.0
    %1523 = vmatprep.subr.mxu0 0.0
    %1524 = vmatpush1.msra.mxu0 %v1485
    %1525 = vmatprep.subr.mxu0 0.0
    %1526 = vmatpush1.msra.mxu0 %v1484
    %1527 = vmatprep.subr.mxu0 0.0
    %1528 = vmatpush1.msra.mxu0 %v1483
    %1529 = vmatprep.subr.mxu0 0.0
    %1530 = vmatpush1.msra.mxu0 %v1482
    %1531 = vmatprep.subr.mxu0 0.0
    %1532 = vmatpush2.msra.mxu0 0.0
    %1533 = vmatprep.subr.mxu0 0.0
    %1534 = vmatpush2.msra.mxu0 0.0
    %1535 = vmatprep.subr.mxu0 0.0
    %1536 = vmatpush2.msra.mxu0 0.0
    %1537 = vmatprep.subr.mxu0 0.0
    %1538 = vmatpush2.msra.mxu0 0.0
    %1539 = vmatprep.subr.mxu0 0.0
    %1540 = vmatpush2.msra.mxu0 0.0
    %1541 = vmatprep.subr.mxu0 0.0
    %1542 = vmatpush2.msra.mxu0 0.0
    %1543 = vmatprep.subr.mxu0 0.0
    %1544 = vmatpush2.msra.mxu0 0.0
    %1545 = vmatprep.subr.mxu0 0.0
    %1546 = vmatpush2.msra.mxu0 0.0
    %1547 = vmatprep.subr.mxu0 0.0
    %1548 = vmatpush2.msra.mxu0 0.0
    %1549 = vmatprep.subr.mxu0 0.0
    %1550 = vmatpush2.msra.mxu0 0.0
    %1551 = vmatprep.subr.mxu0 0.0
    %1552 = vmatpush2.msra.mxu0 0.0
    %1553 = vmatprep.subr.mxu0 0.0
    %1554 = vmatpush2.msra.mxu0 0.0
    %1555 = vmatprep.subr.mxu0 0.0
    %1556 = vmatpush2.msra.mxu0 0.0
    %1557 = vmatprep.subr.mxu0 0.0
    %1558 = vmatpush2.msra.mxu0 0.0
    %1559 = vmatprep.subr.mxu0 0.0
    %1560 = vmatpush2.msra.mxu0 0.0
    %1561 = vmatprep.subr.mxu0 0.0
    %1562 = vmatpush2.msra.mxu0 0.0
    %1563 = vmatprep.mubr.f32.mxu0 0.0
    %1564 = vmatmul.mubr.f32.gmra.mxu0 %v1497
    %v1565 = vpop.f32.mrf.mxu0
    %v1566 = vadd.f32 0.0, %v1565
    %v1567 = vpop.f32.mrf.mxu0
    %1568 = vdwg.mxu0
    %v1569 = vmul.f32 %v1566, 0.0078125
    %vm1570 = vcmask 31744
    %v1572 = vsel %vm1570, %v1569, 0
    %vm1574 = vcmask 1043456
    %v1576 = vsel %vm1574, %v1486, 0
    %1578 = vmatprep.subr.mxu0 0.0
    %1579 = vmatpush1.msra.mxu0 0.0
    %1580 = vmatprep.subr.mxu0 0.0
    %1581 = vmatpush1.msra.mxu0 0.0
    %1582 = vmatprep.subr.mxu0 0.0
    %1583 = vmatpush1.msra.mxu0 0.0
    %1584 = vmatprep.subr.mxu0 0.0
    %1585 = vmatpush1.msra.mxu0 0.0
    %1586 = vmatprep.subr.mxu0 0.0
    %1587 = vmatpush1.msra.mxu0 0.0
    %1588 = vmatprep.subr.mxu0 0.0
    %1589 = vmatpush1.msra.mxu0 0.0
    %1590 = vmatprep.subr.mxu0 0.0
    %1591 = vmatpush1.msra.mxu0 0.0
    %1592 = vmatprep.subr.mxu0 0.0
    %1593 = vmatpush1.msra.mxu0 0.0
    %1594 = vmatprep.subr.mxu0 0.0
    %1595 = vmatpush1.msra.mxu0 0.0
    %1596 = vmatprep.subr.mxu0 0.0
    %1597 = vmatpush1.msra.mxu0 0.0
    %1598 = vmatprep.subr.mxu0 0.0
    %1599 = vmatpush1.msra.mxu0 0.0
    %1600 = vmatprep.subr.mxu0 0.0
    %1601 = vmatpush1.msra.mxu0 0.0
    %1602 = vmatprep.subr.mxu0 0.0
    %1603 = vmatpush1.msra.mxu0 0.0
    %1604 = vmatprep.subr.mxu0 0.0
    %1605 = vmatpush1.msra.mxu0 0.0
    %1606 = vmatprep.subr.mxu0 0.0
    %1607 = vmatpush1.msra.mxu0 0.0
    %1608 = vmatprep.subr.mxu0 0.0
    %1609 = vmatpush1.msra.mxu0 %v1576
    %1610 = vmatprep.subr.mxu0 0.0
    %1611 = vmatpush2.msra.mxu0 0.0
    %1612 = vmatprep.subr.mxu0 0.0
    %1613 = vmatpush2.msra.mxu0 0.0
    %1614 = vmatprep.subr.mxu0 0.0
    %1615 = vmatpush2.msra.mxu0 0.0
    %1616 = vmatprep.subr.mxu0 0.0
    %1617 = vmatpush2.msra.mxu0 0.0
    %1618 = vmatprep.subr.mxu0 0.0
    %1619 = vmatpush2.msra.mxu0 0.0
    %1620 = vmatprep.subr.mxu0 0.0
    %1621 = vmatpush2.msra.mxu0 0.0
    %1622 = vmatprep.subr.mxu0 0.0
    %1623 = vmatpush2.msra.mxu0 0.0
    %1624 = vmatprep.subr.mxu0 0.0
    %1625 = vmatpush2.msra.mxu0 0.0
    %1626 = vmatprep.subr.mxu0 0.0
    %1627 = vmatpush2.msra.mxu0 0.0
    %1628 = vmatprep.subr.mxu0 0.0
    %1629 = vmatpush2.msra.mxu0 0.0
    %1630 = vmatprep.subr.mxu0 0.0
    %1631 = vmatpush2.msra.mxu0 0.0
    %1632 = vmatprep.subr.mxu0 0.0
    %1633 = vmatpush2.msra.mxu0 0.0
    %1634 = vmatprep.subr.mxu0 0.0
    %1635 = vmatpush2.msra.mxu0 0.0
    %1636 = vmatprep.subr.mxu0 0.0
    %1637 = vmatpush2.msra.mxu0 0.0
    %1638 = vmatprep.subr.mxu0 0.0
    %1639 = vmatpush2.msra.mxu0 0.0
    %1640 = vmatprep.subr.mxu0 0.0
    %1641 = vmatpush2.msra.mxu0 0.0
    %1642 = vmatprep.mubr.f32.mxu0 0.0
    %1643 = vmatmul.mubr.f32.gmra.mxu0 %v1572
    %v1644 = vpop.f32.mrf.mxu0
    %v1645 = vadd.f32 0.0, %v1644
    %v1646 = vpop.f32.mrf.mxu0
    %1647 = vdwg.mxu0
    %v1648 = vlaneseq
    %v1649 = vshrl.u32 %v1648, 7
    %v1650 = vsub.s32 0, %v1649
    %v1651 = vrot.slane %v1645, %v1650
    %v1652 = vsub.f32 %v1474, %v1651
    %v1653 = vsub.f32 %v1479, %v1651
    %v1654 = vmul.f32 %v1652, %v1652
    %v1655 = vmul.f32 %v1653, %v1653
    %v1656 = vsel %vm965, %v1654, 0.0
    %v1657 = vsel %vm965, %v1655, 0.0
    %v1658 = vadd.f32 %v1656, %v1657
    %v1659 = vrot.slane %v1658, 4
    %v1660 = vadd.f32 %v1658, %v1659
    %v1661 = vrot.slane %v1660, 2
    %v1662 = vadd.f32 %v1660, %v1661
    %v1663 = vrot.slane %v1662, 1
    %v1664 = vadd.f32 %v1662, %v1663
    %v1666 = vsel %vm965, %v1664, 0
    %1668 = vmatprep.subr.mxu0 0.0
    %1669 = vmatpush1.msra.mxu0 0.0
    %1670 = vmatprep.subr.mxu0 0.0
    %1671 = vmatpush1.msra.mxu0 0.0
    %1672 = vmatprep.subr.mxu0 0.0
    %1673 = vmatpush1.msra.mxu0 0.0
    %1674 = vmatprep.subr.mxu0 0.0
    %1675 = vmatpush1.msra.mxu0 0.0
    %1676 = vmatprep.subr.mxu0 0.0
    %1677 = vmatpush1.msra.mxu0 0.0
    %1678 = vmatprep.subr.mxu0 0.0
    %1679 = vmatpush1.msra.mxu0 0.0
    %1680 = vmatprep.subr.mxu0 0.0
    %1681 = vmatpush1.msra.mxu0 0.0
    %1682 = vmatprep.subr.mxu0 0.0
    %1683 = vmatpush1.msra.mxu0 0.0
    %1684 = vmatprep.subr.mxu0 0.0
    %1685 = vmatpush1.msra.mxu0 0.0
    %1686 = vmatprep.subr.mxu0 0.0
    %1687 = vmatpush1.msra.mxu0 0.0
    %1688 = vmatprep.subr.mxu0 0.0
    %1689 = vmatpush1.msra.mxu0 0.0
    %1690 = vmatprep.subr.mxu0 0.0
    %1691 = vmatpush1.msra.mxu0 0.0
    %1692 = vmatprep.subr.mxu0 0.0
    %1693 = vmatpush1.msra.mxu0 %v1485
    %1694 = vmatprep.subr.mxu0 0.0
    %1695 = vmatpush1.msra.mxu0 %v1484
    %1696 = vmatprep.subr.mxu0 0.0
    %1697 = vmatpush1.msra.mxu0 %v1483
    %1698 = vmatprep.subr.mxu0 0.0
    %1699 = vmatpush1.msra.mxu0 %v1482
    %1700 = vmatprep.subr.mxu0 0.0
    %1701 = vmatpush2.msra.mxu0 0.0
    %1702 = vmatprep.subr.mxu0 0.0
    %1703 = vmatpush2.msra.mxu0 0.0
    %1704 = vmatprep.subr.mxu0 0.0
    %1705 = vmatpush2.msra.mxu0 0.0
    %1706 = vmatprep.subr.mxu0 0.0
    %1707 = vmatpush2.msra.mxu0 0.0
    %1708 = vmatprep.subr.mxu0 0.0
    %1709 = vmatpush2.msra.mxu0 0.0
    %1710 = vmatprep.subr.mxu0 0.0
    %1711 = vmatpush2.msra.mxu0 0.0
    %1712 = vmatprep.subr.mxu0 0.0
    %1713 = vmatpush2.msra.mxu0 0.0
    %1714 = vmatprep.subr.mxu0 0.0
    %1715 = vmatpush2.msra.mxu0 0.0
    %1716 = vmatprep.subr.mxu0 0.0
    %1717 = vmatpush2.msra.mxu0 0.0
    %1718 = vmatprep.subr.mxu0 0.0
    %1719 = vmatpush2.msra.mxu0 0.0
    %1720 = vmatprep.subr.mxu0 0.0
    %1721 = vmatpush2.msra.mxu0 0.0
    %1722 = vmatprep.subr.mxu0 0.0
    %1723 = vmatpush2.msra.mxu0 0.0
    %1724 = vmatprep.subr.mxu0 0.0
    %1725 = vmatpush2.msra.mxu0 0.0
    %1726 = vmatprep.subr.mxu0 0.0
    %1727 = vmatpush2.msra.mxu0 0.0
    %1728 = vmatprep.subr.mxu0 0.0
    %1729 = vmatpush2.msra.mxu0 0.0
    %1730 = vmatprep.subr.mxu0 0.0
    %1731 = vmatpush2.msra.mxu0 0.0
    %1732 = vmatprep.mubr.f32.mxu0 0.0
    %1733 = vmatmul.mubr.f32.gmra.mxu0 %v1666
    %v1734 = vpop.f32.mrf.mxu0
    %v1735 = vadd.f32 0.0, %v1734
    %v1736 = vpop.f32.mrf.mxu0
    %1737 = vdwg.mxu0
    %v1738 = vmul.f32 %v1735, 0.0078125
    %v1739 = vadd.f32 %v1738, 1e-05
    %v1740 = vrsqrt.pop %v1739
    %v1741 = vrot.slane %v63, 2
    %v1743 = vmul.f32 %v1740, %v1741
    %v1745 = vsel %vm1570, %v1743, 0
    %1747 = vmatprep.subr.mxu0 0.0
    %1748 = vmatpush1.msra.mxu0 0.0
    %1749 = vmatprep.subr.mxu0 0.0
    %1750 = vmatpush1.msra.mxu0 0.0
    %1751 = vmatprep.subr.mxu0 0.0
    %1752 = vmatpush1.msra.mxu0 0.0
    %1753 = vmatprep.subr.mxu0 0.0
    %1754 = vmatpush1.msra.mxu0 0.0
    %1755 = vmatprep.subr.mxu0 0.0
    %1756 = vmatpush1.msra.mxu0 0.0
    %1757 = vmatprep.subr.mxu0 0.0
    %1758 = vmatpush1.msra.mxu0 0.0
    %1759 = vmatprep.subr.mxu0 0.0
    %1760 = vmatpush1.msra.mxu0 0.0
    %1761 = vmatprep.subr.mxu0 0.0
    %1762 = vmatpush1.msra.mxu0 0.0
    %1763 = vmatprep.subr.mxu0 0.0
    %1764 = vmatpush1.msra.mxu0 0.0
    %1765 = vmatprep.subr.mxu0 0.0
    %1766 = vmatpush1.msra.mxu0 0.0
    %1767 = vmatprep.subr.mxu0 0.0
    %1768 = vmatpush1.msra.mxu0 0.0
    %1769 = vmatprep.subr.mxu0 0.0
    %1770 = vmatpush1.msra.mxu0 0.0
    %1771 = vmatprep.subr.mxu0 0.0
    %1772 = vmatpush1.msra.mxu0 0.0
    %1773 = vmatprep.subr.mxu0 0.0
    %1774 = vmatpush1.msra.mxu0 0.0
    %1775 = vmatprep.subr.mxu0 0.0
    %1776 = vmatpush1.msra.mxu0 0.0
    %1777 = vmatprep.subr.mxu0 0.0
    %1778 = vmatpush1.msra.mxu0 %v1576
    %1779 = vmatprep.subr.mxu0 0.0
    %1780 = vmatpush2.msra.mxu0 0.0
    %1781 = vmatprep.subr.mxu0 0.0
    %1782 = vmatpush2.msra.mxu0 0.0
    %1783 = vmatprep.subr.mxu0 0.0
    %1784 = vmatpush2.msra.mxu0 0.0
    %1785 = vmatprep.subr.mxu0 0.0
    %1786 = vmatpush2.msra.mxu0 0.0
    %1787 = vmatprep.subr.mxu0 0.0
    %1788 = vmatpush2.msra.mxu0 0.0
    %1789 = vmatprep.subr.mxu0 0.0
    %1790 = vmatpush2.msra.mxu0 0.0
    %1791 = vmatprep.subr.mxu0 0.0
    %1792 = vmatpush2.msra.mxu0 0.0
    %1793 = vmatprep.subr.mxu0 0.0
    %1794 = vmatpush2.msra.mxu0 0.0
    %1795 = vmatprep.subr.mxu0 0.0
    %1796 = vmatpush2.msra.mxu0 0.0
    %1797 = vmatprep.subr.mxu0 0.0
    %1798 = vmatpush2.msra.mxu0 0.0
    %1799 = vmatprep.subr.mxu0 0.0
    %1800 = vmatpush2.msra.mxu0 0.0
    %1801 = vmatprep.subr.mxu0 0.0
    %1802 = vmatpush2.msra.mxu0 0.0
    %1803 = vmatprep.subr.mxu0 0.0
    %1804 = vmatpush2.msra.mxu0 0.0
    %1805 = vmatprep.subr.mxu0 0.0
    %1806 = vmatpush2.msra.mxu0 0.0
    %1807 = vmatprep.subr.mxu0 0.0
    %1808 = vmatpush2.msra.mxu0 0.0
    %1809 = vmatprep.subr.mxu0 0.0
    %1810 = vmatpush2.msra.mxu0 0.0
    %1811 = vmatprep.mubr.f32.mxu0 0.0
    %1812 = vmatmul.mubr.f32.gmra.mxu0 %v1745
    %v1813 = vpop.f32.mrf.mxu0
    %v1814 = vadd.f32 0.0, %v1813
    %v1815 = vpop.f32.mrf.mxu0
    %1816 = vdwg.mxu0
    %v1817 = vlaneseq
    %v1818 = vshrl.u32 %v1817, 7
    %v1819 = vsub.s32 0, %v1818
    %v1820 = vrot.slane %v1814, %v1819
    %v1821 = vmul.f32 %v1652, %v1820
    %v1822 = vmul.f32 %v1653, %v1820
    %v1823 = vrot.slane %v63, 3
    %v1824 = vsel %vm1570, %v1823, 0
    %1826 = vmatprep.subr.mxu0 0.0
    %1827 = vmatpush1.msra.mxu0 0.0
    %1828 = vmatprep.subr.mxu0 0.0
    %1829 = vmatpush1.msra.mxu0 0.0
    %1830 = vmatprep.subr.mxu0 0.0
    %1831 = vmatpush1.msra.mxu0 0.0
    %1832 = vmatprep.subr.mxu0 0.0
    %1833 = vmatpush1.msra.mxu0 0.0
    %1834 = vmatprep.subr.mxu0 0.0
    %1835 = vmatpush1.msra.mxu0 0.0
    %1836 = vmatprep.subr.mxu0 0.0
    %1837 = vmatpush1.msra.mxu0 0.0
    %1838 = vmatprep.subr.mxu0 0.0
    %1839 = vmatpush1.msra.mxu0 0.0
    %1840 = vmatprep.subr.mxu0 0.0
    %1841 = vmatpush1.msra.mxu0 0.0
    %1842 = vmatprep.subr.mxu0 0.0
    %1843 = vmatpush1.msra.mxu0 0.0
    %1844 = vmatprep.subr.mxu0 0.0
    %1845 = vmatpush1.msra.mxu0 0.0
    %1846 = vmatprep.subr.mxu0 0.0
    %1847 = vmatpush1.msra.mxu0 0.0
    %1848 = vmatprep.subr.mxu0 0.0
    %1849 = vmatpush1.msra.mxu0 0.0
    %1850 = vmatprep.subr.mxu0 0.0
    %1851 = vmatpush1.msra.mxu0 0.0
    %1852 = vmatprep.subr.mxu0 0.0
    %1853 = vmatpush1.msra.mxu0 0.0
    %1854 = vmatprep.subr.mxu0 0.0
    %1855 = vmatpush1.msra.mxu0 0.0
    %1856 = vmatprep.subr.mxu0 0.0
    %1857 = vmatpush1.msra.mxu0 %v1576
    %1858 = vmatprep.subr.mxu0 0.0
    %1859 = vmatpush2.msra.mxu0 0.0
    %1860 = vmatprep.subr.mxu0 0.0
    %1861 = vmatpush2.msra.mxu0 0.0
    %1862 = vmatprep.subr.mxu0 0.0
    %1863 = vmatpush2.msra.mxu0 0.0
    %1864 = vmatprep.subr.mxu0 0.0
    %1865 = vmatpush2.msra.mxu0 0.0
    %1866 = vmatprep.subr.mxu0 0.0
    %1867 = vmatpush2.msra.mxu0 0.0
    %1868 = vmatprep.subr.mxu0 0.0
    %1869 = vmatpush2.msra.mxu0 0.0
    %1870 = vmatprep.subr.mxu0 0.0
    %1871 = vmatpush2.msra.mxu0 0.0
    %1872 = vmatprep.subr.mxu0 0.0
    %1873 = vmatpush2.msra.mxu0 0.0
    %1874 = vmatprep.subr.mxu0 0.0
    %1875 = vmatpush2.msra.mxu0 0.0
    %1876 = vmatprep.subr.mxu0 0.0
    %1877 = vmatpush2.msra.mxu0 0.0
    %1878 = vmatprep.subr.mxu0 0.0
    %1879 = vmatpush2.msra.mxu0 0.0
    %1880 = vmatprep.subr.mxu0 0.0
    %1881 = vmatpush2.msra.mxu0 0.0
    %1882 = vmatprep.subr.mxu0 0.0
    %1883 = vmatpush2.msra.mxu0 0.0
    %1884 = vmatprep.subr.mxu0 0.0
    %1885 = vmatpush2.msra.mxu0 0.0
    %1886 = vmatprep.subr.mxu0 0.0
    %1887 = vmatpush2.msra.mxu0 0.0
    %1888 = vmatprep.subr.mxu0 0.0
    %1889 = vmatpush2.msra.mxu0 0.0
    %1890 = vmatprep.mubr.f32.mxu0 0.0
    %1891 = vmatmul.mubr.f32.gmra.mxu0 %v1824
    %v1892 = vpop.f32.mrf.mxu0
    %v1893 = vadd.f32 0.0, %v1892
    %v1894 = vpop.f32.mrf.mxu0
    %1895 = vdwg.mxu0
    %v1896 = vlaneseq
    %v1897 = vshrl.u32 %v1896, 7
    %v1898 = vsub.s32 0, %v1897
    %v1899 = vrot.slane %v1893, %v1898
    %v1900 = vadd.f32 %v1821, %v1899
    %v1901 = vadd.f32 %v1822, %v1899
    %v1902 = vmax.f32 %v1900, 0.0
    %v1903 = vmax.f32 %v1901, 0.0
    %v1904 = vrot.slane %v1902, 1
    %v1905 = vrot.slane %v1903, 1
    %v1906 = vsel %vm102, %v1904, %v1905
    %v1907 = vsel %vm102, %v1905, %v1904
    %v1908 = vmax.f32 %v1902, %v1906
    %v1909 = vmax.f32 %v1903, %v1907
    %v1910 = vld [vmem:[%s13] sm:$0xff]
    %v1912 = vsel %vm119, %v1910, 0
    %1914 = vmatprep.subr.mxu0 0.0
    %1915 = vmatpush1.msra.mxu0 0.0
    %1916 = vmatprep.subr.mxu0 0.0
    %1917 = vmatpush1.msra.mxu0 0.0
    %1918 = vmatprep.subr.mxu0 0.0
    %1919 = vmatpush1.msra.mxu0 0.0
    %1920 = vmatprep.subr.mxu0 0.0
    %1921 = vmatpush1.msra.mxu0 0.0
    %1922 = vmatprep.subr.mxu0 0.0
    %1923 = vmatpush1.msra.mxu0 0.0
    %1924 = vmatprep.subr.mxu0 0.0
    %1925 = vmatpush1.msra.mxu0 0.0
    %1926 = vmatprep.subr.mxu0 0.0
    %1927 = vmatpush1.msra.mxu0 0.0
    %1928 = vmatprep.subr.mxu0 0.0
    %1929 = vmatpush1.msra.mxu0 0.0
    %1930 = vmatprep.subr.mxu0 0.0
    %1931 = vmatpush1.msra.mxu0 0.0
    %1932 = vmatprep.subr.mxu0 0.0
    %1933 = vmatpush1.msra.mxu0 0.0
    %1934 = vmatprep.subr.mxu0 0.0
    %1935 = vmatpush1.msra.mxu0 0.0
    %1936 = vmatprep.subr.mxu0 0.0
    %1937 = vmatpush1.msra.mxu0 0.0
    %1938 = vmatprep.subr.mxu0 0.0
    %1939 = vmatpush1.msra.mxu0 0.0
    %1940 = vmatprep.subr.mxu0 0.0
    %1941 = vmatpush1.msra.mxu0 0.0
    %1942 = vmatprep.subr.mxu0 0.0
    %1943 = vmatpush1.msra.mxu0 %v1909
    %1944 = vmatprep.subr.mxu0 0.0
    %1945 = vmatpush1.msra.mxu0 %v1908
    %1946 = vmatprep.subr.mxu0 0.0
    %1947 = vmatpush2.msra.mxu0 0.0
    %1948 = vmatprep.subr.mxu0 0.0
    %1949 = vmatpush2.msra.mxu0 0.0
    %1950 = vmatprep.subr.mxu0 0.0
    %1951 = vmatpush2.msra.mxu0 0.0
    %1952 = vmatprep.subr.mxu0 0.0
    %1953 = vmatpush2.msra.mxu0 0.0
    %1954 = vmatprep.subr.mxu0 0.0
    %1955 = vmatpush2.msra.mxu0 0.0
    %1956 = vmatprep.subr.mxu0 0.0
    %1957 = vmatpush2.msra.mxu0 0.0
    %1958 = vmatprep.subr.mxu0 0.0
    %1959 = vmatpush2.msra.mxu0 0.0
    %1960 = vmatprep.subr.mxu0 0.0
    %1961 = vmatpush2.msra.mxu0 0.0
    %1962 = vmatprep.subr.mxu0 0.0
    %1963 = vmatpush2.msra.mxu0 0.0
    %1964 = vmatprep.subr.mxu0 0.0
    %1965 = vmatpush2.msra.mxu0 0.0
    %1966 = vmatprep.subr.mxu0 0.0
    %1967 = vmatpush2.msra.mxu0 0.0
    %1968 = vmatprep.subr.mxu0 0.0
    %1969 = vmatpush2.msra.mxu0 0.0
    %1970 = vmatprep.subr.mxu0 0.0
    %1971 = vmatpush2.msra.mxu0 0.0
    %1972 = vmatprep.subr.mxu0 0.0
    %1973 = vmatpush2.msra.mxu0 0.0
    %1974 = vmatprep.subr.mxu0 0.0
    %1975 = vmatpush2.msra.mxu0 0.0
    %1976 = vmatprep.subr.mxu0 0.0
    %1977 = vmatpush2.msra.mxu0 0.0
    %1978 = vmatprep.mubr.f32.mxu0 0.0
    %1979 = vmatmul.mubr.f32.gmra.mxu0 %v1912
    %v1980 = vpop.f32.mrf.mxu0
    %v1981 = vadd.f32 0.0, %v1980
    %v1982 = vpop.f32.mrf.mxu0
    %1983 = vdwg.mxu0
    %v1984 = vld [vmem:[%s14] sm:$0xff]
    %v1985 = vld [vmem:[%s14 + $0x8] sm:$0xff]
    %v1986 = vld [vmem:[%s14 + $0x10] sm:$0xff]
    %v1987 = vld [vmem:[%s14 + $0x18] sm:$0xff]
    %v1989 = vsel %vm965, %v1981, 0
    %1991 = vmatprep.subr.mxu0 0.0
    %1992 = vmatpush1.msra.mxu0 0.0
    %1993 = vmatprep.subr.mxu0 0.0
    %1994 = vmatpush1.msra.mxu0 0.0
    %1995 = vmatprep.subr.mxu0 0.0
    %1996 = vmatpush1.msra.mxu0 0.0
    %1997 = vmatprep.subr.mxu0 0.0
    %1998 = vmatpush1.msra.mxu0 0.0
    %1999 = vmatprep.subr.mxu0 0.0
    %2000 = vmatpush1.msra.mxu0 0.0
    %2001 = vmatprep.subr.mxu0 0.0
    %2002 = vmatpush1.msra.mxu0 0.0
    %2003 = vmatprep.subr.mxu0 0.0
    %2004 = vmatpush1.msra.mxu0 0.0
    %2005 = vmatprep.subr.mxu0 0.0
    %2006 = vmatpush1.msra.mxu0 0.0
    %2007 = vmatprep.subr.mxu0 0.0
    %2008 = vmatpush1.msra.mxu0 0.0
    %2009 = vmatprep.subr.mxu0 0.0
    %2010 = vmatpush1.msra.mxu0 0.0
    %2011 = vmatprep.subr.mxu0 0.0
    %2012 = vmatpush1.msra.mxu0 0.0
    %2013 = vmatprep.subr.mxu0 0.0
    %2014 = vmatpush1.msra.mxu0 0.0
    %2015 = vmatprep.subr.mxu0 0.0
    %2016 = vmatpush1.msra.mxu0 %v1987
    %2017 = vmatprep.subr.mxu0 0.0
    %2018 = vmatpush1.msra.mxu0 %v1986
    %2019 = vmatprep.subr.mxu0 0.0
    %2020 = vmatpush1.msra.mxu0 %v1985
    %2021 = vmatprep.subr.mxu0 0.0
    %2022 = vmatpush1.msra.mxu0 %v1984
    %2023 = vmatprep.subr.mxu0 0.0
    %2024 = vmatpush2.msra.mxu0 0.0
    %2025 = vmatprep.subr.mxu0 0.0
    %2026 = vmatpush2.msra.mxu0 0.0
    %2027 = vmatprep.subr.mxu0 0.0
    %2028 = vmatpush2.msra.mxu0 0.0
    %2029 = vmatprep.subr.mxu0 0.0
    %2030 = vmatpush2.msra.mxu0 0.0
    %2031 = vmatprep.subr.mxu0 0.0
    %2032 = vmatpush2.msra.mxu0 0.0
    %2033 = vmatprep.subr.mxu0 0.0
    %2034 = vmatpush2.msra.mxu0 0.0
    %2035 = vmatprep.subr.mxu0 0.0
    %2036 = vmatpush2.msra.mxu0 0.0
    %2037 = vmatprep.subr.mxu0 0.0
    %2038 = vmatpush2.msra.mxu0 0.0
    %2039 = vmatprep.subr.mxu0 0.0
    %2040 = vmatpush2.msra.mxu0 0.0
    %2041 = vmatprep.subr.mxu0 0.0
    %2042 = vmatpush2.msra.mxu0 0.0
    %2043 = vmatprep.subr.mxu0 0.0
    %2044 = vmatpush2.msra.mxu0 0.0
    %2045 = vmatprep.subr.mxu0 0.0
    %2046 = vmatpush2.msra.mxu0 0.0
    %2047 = vmatprep.subr.mxu0 0.0
    %2048 = vmatpush2.msra.mxu0 0.0
    %2049 = vmatprep.subr.mxu0 0.0
    %2050 = vmatpush2.msra.mxu0 0.0
    %2051 = vmatprep.subr.mxu0 0.0
    %2052 = vmatpush2.msra.mxu0 0.0
    %2053 = vmatprep.subr.mxu0 0.0
    %2054 = vmatpush2.msra.mxu0 0.0
    %2055 = vmatprep.mubr.f32.mxu0 0.0
    %2056 = vmatmul.mubr.f32.gmra.mxu0 %v1989
    %v2057 = vpop.f32.mrf.mxu0
    %v2058 = vadd.f32 0.0, %v2057
    %v2059 = vpop.f32.mrf.mxu0
    %2060 = vdwg.mxu0
    %s2061 = scalar_lea.vmem %s14, 32
    %v2062 = vld [vmem:[%s2061] sm:$0xff]
    %v2063 = vld [vmem:[%s2061 + $0x8] sm:$0xff]
    %v2064 = vld [vmem:[%s2061 + $0x10] sm:$0xff]
    %v2065 = vld [vmem:[%s2061 + $0x18] sm:$0xff]
    %2066 = vmatprep.subr.mxu0 0.0
    %2067 = vmatpush1.msra.mxu0 0.0
    %2068 = vmatprep.subr.mxu0 0.0
    %2069 = vmatpush1.msra.mxu0 0.0
    %2070 = vmatprep.subr.mxu0 0.0
    %2071 = vmatpush1.msra.mxu0 0.0
    %2072 = vmatprep.subr.mxu0 0.0
    %2073 = vmatpush1.msra.mxu0 0.0
    %2074 = vmatprep.subr.mxu0 0.0
    %2075 = vmatpush1.msra.mxu0 0.0
    %2076 = vmatprep.subr.mxu0 0.0
    %2077 = vmatpush1.msra.mxu0 0.0
    %2078 = vmatprep.subr.mxu0 0.0
    %2079 = vmatpush1.msra.mxu0 0.0
    %2080 = vmatprep.subr.mxu0 0.0
    %2081 = vmatpush1.msra.mxu0 0.0
    %2082 = vmatprep.subr.mxu0 0.0
    %2083 = vmatpush1.msra.mxu0 0.0
    %2084 = vmatprep.subr.mxu0 0.0
    %2085 = vmatpush1.msra.mxu0 0.0
    %2086 = vmatprep.subr.mxu0 0.0
    %2087 = vmatpush1.msra.mxu0 0.0
    %2088 = vmatprep.subr.mxu0 0.0
    %2089 = vmatpush1.msra.mxu0 0.0
    %2090 = vmatprep.subr.mxu0 0.0
    %2091 = vmatpush1.msra.mxu0 %v2065
    %2092 = vmatprep.subr.mxu0 0.0
    %2093 = vmatpush1.msra.mxu0 %v2064
    %2094 = vmatprep.subr.mxu0 0.0
    %2095 = vmatpush1.msra.mxu0 %v2063
    %2096 = vmatprep.subr.mxu0 0.0
    %2097 = vmatpush1.msra.mxu0 %v2062
    %2098 = vmatprep.subr.mxu0 0.0
    %2099 = vmatpush2.msra.mxu0 0.0
    %2100 = vmatprep.subr.mxu0 0.0
    %2101 = vmatpush2.msra.mxu0 0.0
    %2102 = vmatprep.subr.mxu0 0.0
    %2103 = vmatpush2.msra.mxu0 0.0
    %2104 = vmatprep.subr.mxu0 0.0
    %2105 = vmatpush2.msra.mxu0 0.0
    %2106 = vmatprep.subr.mxu0 0.0
    %2107 = vmatpush2.msra.mxu0 0.0
    %2108 = vmatprep.subr.mxu0 0.0
    %2109 = vmatpush2.msra.mxu0 0.0
    %2110 = vmatprep.subr.mxu0 0.0
    %2111 = vmatpush2.msra.mxu0 0.0
    %2112 = vmatprep.subr.mxu0 0.0
    %2113 = vmatpush2.msra.mxu0 0.0
    %2114 = vmatprep.subr.mxu0 0.0
    %2115 = vmatpush2.msra.mxu0 0.0
    %2116 = vmatprep.subr.mxu0 0.0
    %2117 = vmatpush2.msra.mxu0 0.0
    %2118 = vmatprep.subr.mxu0 0.0
    %2119 = vmatpush2.msra.mxu0 0.0
    %2120 = vmatprep.subr.mxu0 0.0
    %2121 = vmatpush2.msra.mxu0 0.0
    %2122 = vmatprep.subr.mxu0 0.0
    %2123 = vmatpush2.msra.mxu0 0.0
    %2124 = vmatprep.subr.mxu0 0.0
    %2125 = vmatpush2.msra.mxu0 0.0
    %2126 = vmatprep.subr.mxu0 0.0
    %2127 = vmatpush2.msra.mxu0 0.0
    %2128 = vmatprep.subr.mxu0 0.0
    %2129 = vmatpush2.msra.mxu0 0.0
    %2130 = vmatprep.mubr.f32.mxu0 0.0
    %2131 = vmatmul.mubr.f32.gmra.mxu0 %v1989
    %v2132 = vpop.f32.mrf.mxu0
    %v2133 = vadd.f32 0.0, %v2132
    %v2134 = vpop.f32.mrf.mxu0
    %2135 = vdwg.mxu0
    %v2136 = vmax.f32 %v2058, %v2133
    %v2137 = vld [vmem:[%s15] sm:$0xff]
    %v2138 = vld [vmem:[%s15 + $0x8] sm:$0xff]
    %v2139 = vld [vmem:[%s3] sm:$0xff]
    %v2140 = vld [vmem:[%s3 + $0x8] sm:$0xff]
    %v2142 = vsel %vm119, %v2136, 0
    %2144 = vmatprep.subr.mxu0 0.0
    %2145 = vmatpush1.msra.mxu0 0.0
    %2146 = vmatprep.subr.mxu0 0.0
    %2147 = vmatpush1.msra.mxu0 0.0
    %2148 = vmatprep.subr.mxu0 0.0
    %2149 = vmatpush1.msra.mxu0 0.0
    %2150 = vmatprep.subr.mxu0 0.0
    %2151 = vmatpush1.msra.mxu0 0.0
    %2152 = vmatprep.subr.mxu0 0.0
    %2153 = vmatpush1.msra.mxu0 0.0
    %2154 = vmatprep.subr.mxu0 0.0
    %2155 = vmatpush1.msra.mxu0 0.0
    %2156 = vmatprep.subr.mxu0 0.0
    %2157 = vmatpush1.msra.mxu0 0.0
    %2158 = vmatprep.subr.mxu0 0.0
    %2159 = vmatpush1.msra.mxu0 0.0
    %2160 = vmatprep.subr.mxu0 0.0
    %2161 = vmatpush1.msra.mxu0 0.0
    %2162 = vmatprep.subr.mxu0 0.0
    %2163 = vmatpush1.msra.mxu0 0.0
    %2164 = vmatprep.subr.mxu0 0.0
    %2165 = vmatpush1.msra.mxu0 0.0
    %2166 = vmatprep.subr.mxu0 0.0
    %2167 = vmatpush1.msra.mxu0 0.0
    %2168 = vmatprep.subr.mxu0 0.0
    %2169 = vmatpush1.msra.mxu0 0.0
    %2170 = vmatprep.subr.mxu0 0.0
    %2171 = vmatpush1.msra.mxu0 0.0
    %2172 = vmatprep.subr.mxu0 0.0
    %2173 = vmatpush1.msra.mxu0 %v2140
    %2174 = vmatprep.subr.mxu0 0.0
    %2175 = vmatpush1.msra.mxu0 %v2139
    %2176 = vmatprep.subr.mxu0 0.0
    %2177 = vmatpush2.msra.mxu0 0.0
    %2178 = vmatprep.subr.mxu0 0.0
    %2179 = vmatpush2.msra.mxu0 0.0
    %2180 = vmatprep.subr.mxu0 0.0
    %2181 = vmatpush2.msra.mxu0 0.0
    %2182 = vmatprep.subr.mxu0 0.0
    %2183 = vmatpush2.msra.mxu0 0.0
    %2184 = vmatprep.subr.mxu0 0.0
    %2185 = vmatpush2.msra.mxu0 0.0
    %2186 = vmatprep.subr.mxu0 0.0
    %2187 = vmatpush2.msra.mxu0 0.0
    %2188 = vmatprep.subr.mxu0 0.0
    %2189 = vmatpush2.msra.mxu0 0.0
    %2190 = vmatprep.subr.mxu0 0.0
    %2191 = vmatpush2.msra.mxu0 0.0
    %2192 = vmatprep.subr.mxu0 0.0
    %2193 = vmatpush2.msra.mxu0 0.0
    %2194 = vmatprep.subr.mxu0 0.0
    %2195 = vmatpush2.msra.mxu0 0.0
    %2196 = vmatprep.subr.mxu0 0.0
    %2197 = vmatpush2.msra.mxu0 0.0
    %2198 = vmatprep.subr.mxu0 0.0
    %2199 = vmatpush2.msra.mxu0 0.0
    %2200 = vmatprep.subr.mxu0 0.0
    %2201 = vmatpush2.msra.mxu0 0.0
    %2202 = vmatprep.subr.mxu0 0.0
    %2203 = vmatpush2.msra.mxu0 0.0
    %2204 = vmatprep.subr.mxu0 0.0
    %2205 = vmatpush2.msra.mxu0 0.0
    %2206 = vmatprep.subr.mxu0 0.0
    %2207 = vmatpush2.msra.mxu0 0.0
    %2208 = vmatprep.mubr.f32.mxu0 0.0
    %2209 = vmatmul.mubr.f32.gmra.mxu0 %v2142
    %v2210 = vpop.f32.mrf.mxu0
    %v2211 = vadd.f32 0.0, %v2210
    %v2212 = vpop.f32.mrf.mxu0
    %2213 = vdwg.mxu0
    %s2214 = scalar_lea.vmem %s15, 16
    %v2215 = vld [vmem:[%s2214] sm:$0xff]
    %v2216 = vld [vmem:[%s2214 + $0x8] sm:$0xff]
    %s2217 = scalar_lea.vmem %s3, 16
    %v2218 = vld [vmem:[%s2217] sm:$0xff]
    %v2219 = vld [vmem:[%s2217 + $0x8] sm:$0xff]
    %2220 = vmatprep.subr.mxu0 0.0
    %2221 = vmatpush1.msra.mxu0 0.0
    %2222 = vmatprep.subr.mxu0 0.0
    %2223 = vmatpush1.msra.mxu0 0.0
    %2224 = vmatprep.subr.mxu0 0.0
    %2225 = vmatpush1.msra.mxu0 0.0
    %2226 = vmatprep.subr.mxu0 0.0
    %2227 = vmatpush1.msra.mxu0 0.0
    %2228 = vmatprep.subr.mxu0 0.0
    %2229 = vmatpush1.msra.mxu0 0.0
    %2230 = vmatprep.subr.mxu0 0.0
    %2231 = vmatpush1.msra.mxu0 0.0
    %2232 = vmatprep.subr.mxu0 0.0
    %2233 = vmatpush1.msra.mxu0 0.0
    %2234 = vmatprep.subr.mxu0 0.0
    %2235 = vmatpush1.msra.mxu0 0.0
    %2236 = vmatprep.subr.mxu0 0.0
    %2237 = vmatpush1.msra.mxu0 0.0
    %2238 = vmatprep.subr.mxu0 0.0
    %2239 = vmatpush1.msra.mxu0 0.0
    %2240 = vmatprep.subr.mxu0 0.0
    %2241 = vmatpush1.msra.mxu0 0.0
    %2242 = vmatprep.subr.mxu0 0.0
    %2243 = vmatpush1.msra.mxu0 0.0
    %2244 = vmatprep.subr.mxu0 0.0
    %2245 = vmatpush1.msra.mxu0 0.0
    %2246 = vmatprep.subr.mxu0 0.0
    %2247 = vmatpush1.msra.mxu0 0.0
    %2248 = vmatprep.subr.mxu0 0.0
    %2249 = vmatpush1.msra.mxu0 %v2219
    %2250 = vmatprep.subr.mxu0 0.0
    %2251 = vmatpush1.msra.mxu0 %v2218
    %2252 = vmatprep.subr.mxu0 0.0
    %2253 = vmatpush2.msra.mxu0 0.0
    %2254 = vmatprep.subr.mxu0 0.0
    %2255 = vmatpush2.msra.mxu0 0.0
    %2256 = vmatprep.subr.mxu0 0.0
    %2257 = vmatpush2.msra.mxu0 0.0
    %2258 = vmatprep.subr.mxu0 0.0
    %2259 = vmatpush2.msra.mxu0 0.0
    %2260 = vmatprep.subr.mxu0 0.0
    %2261 = vmatpush2.msra.mxu0 0.0
    %2262 = vmatprep.subr.mxu0 0.0
    %2263 = vmatpush2.msra.mxu0 0.0
    %2264 = vmatprep.subr.mxu0 0.0
    %2265 = vmatpush2.msra.mxu0 0.0
    %2266 = vmatprep.subr.mxu0 0.0
    %2267 = vmatpush2.msra.mxu0 0.0
    %2268 = vmatprep.subr.mxu0 0.0
    %2269 = vmatpush2.msra.mxu0 0.0
    %2270 = vmatprep.subr.mxu0 0.0
    %2271 = vmatpush2.msra.mxu0 0.0
    %2272 = vmatprep.subr.mxu0 0.0
    %2273 = vmatpush2.msra.mxu0 0.0
    %2274 = vmatprep.subr.mxu0 0.0
    %2275 = vmatpush2.msra.mxu0 0.0
    %2276 = vmatprep.subr.mxu0 0.0
    %2277 = vmatpush2.msra.mxu0 0.0
    %2278 = vmatprep.subr.mxu0 0.0
    %2279 = vmatpush2.msra.mxu0 0.0
    %2280 = vmatprep.subr.mxu0 0.0
    %2281 = vmatpush2.msra.mxu0 0.0
    %2282 = vmatprep.subr.mxu0 0.0
    %2283 = vmatpush2.msra.mxu0 0.0
    %2284 = vmatprep.mubr.f32.mxu0 0.0
    %2285 = vmatmul.mubr.f32.gmra.mxu0 %v2142
    %v2286 = vpop.f32.mrf.mxu0
    %v2287 = vadd.f32 0.0, %v2286
    %v2288 = vpop.f32.mrf.mxu0
    %2289 = vdwg.mxu0
    %vm2290 = vcmask 64512
    %v2292 = vsel %vm2290, %v2215, 0
    %v2295 = vsel %vm2290, %v2216, 0
    %2297 = vmatprep.subr.mxu0 0.0
    %2298 = vmatpush1.msra.mxu0 0.0
    %2299 = vmatprep.subr.mxu0 0.0
    %2300 = vmatpush1.msra.mxu0 0.0
    %2301 = vmatprep.subr.mxu0 0.0
    %2302 = vmatpush1.msra.mxu0 0.0
    %2303 = vmatprep.subr.mxu0 0.0
    %2304 = vmatpush1.msra.mxu0 0.0
    %2305 = vmatprep.subr.mxu0 0.0
    %2306 = vmatpush1.msra.mxu0 0.0
    %2307 = vmatprep.subr.mxu0 0.0
    %2308 = vmatpush1.msra.mxu0 0.0
    %2309 = vmatprep.subr.mxu0 0.0
    %2310 = vmatpush1.msra.mxu0 0.0
    %2311 = vmatprep.subr.mxu0 0.0
    %2312 = vmatpush1.msra.mxu0 0.0
    %2313 = vmatprep.subr.mxu0 0.0
    %2314 = vmatpush1.msra.mxu0 0.0
    %2315 = vmatprep.subr.mxu0 0.0
    %2316 = vmatpush1.msra.mxu0 0.0
    %2317 = vmatprep.subr.mxu0 0.0
    %2318 = vmatpush1.msra.mxu0 0.0
    %2319 = vmatprep.subr.mxu0 0.0
    %2320 = vmatpush1.msra.mxu0 0.0
    %2321 = vmatprep.subr.mxu0 0.0
    %2322 = vmatpush1.msra.mxu0 0.0
    %2323 = vmatprep.subr.mxu0 0.0
    %2324 = vmatpush1.msra.mxu0 0.0
    %2325 = vmatprep.subr.mxu0 0.0
    %2326 = vmatpush1.msra.mxu0 0.0
    %2327 = vmatprep.subr.mxu0 0.0
    %2328 = vmatpush1.msra.mxu0 %v2287
    %2329 = vmatprep.subr.mxu0 0.0
    %2330 = vmatpush2.msra.mxu0 0.0
    %2331 = vmatprep.subr.mxu0 0.0
    %2332 = vmatpush2.msra.mxu0 0.0
    %2333 = vmatprep.subr.mxu0 0.0
    %2334 = vmatpush2.msra.mxu0 0.0
    %2335 = vmatprep.subr.mxu0 0.0
    %2336 = vmatpush2.msra.mxu0 0.0
    %2337 = vmatprep.subr.mxu0 0.0
    %2338 = vmatpush2.msra.mxu0 0.0
    %2339 = vmatprep.subr.mxu0 0.0
    %2340 = vmatpush2.msra.mxu0 0.0
    %2341 = vmatprep.subr.mxu0 0.0
    %2342 = vmatpush2.msra.mxu0 0.0
    %2343 = vmatprep.subr.mxu0 0.0
    %2344 = vmatpush2.msra.mxu0 0.0
    %2345 = vmatprep.subr.mxu0 0.0
    %2346 = vmatpush2.msra.mxu0 0.0
    %2347 = vmatprep.subr.mxu0 0.0
    %2348 = vmatpush2.msra.mxu0 0.0
    %2349 = vmatprep.subr.mxu0 0.0
    %2350 = vmatpush2.msra.mxu0 0.0
    %2351 = vmatprep.subr.mxu0 0.0
    %2352 = vmatpush2.msra.mxu0 0.0
    %2353 = vmatprep.subr.mxu0 0.0
    %2354 = vmatpush2.msra.mxu0 0.0
    %2355 = vmatprep.subr.mxu0 0.0
    %2356 = vmatpush2.msra.mxu0 0.0
    %2357 = vmatprep.subr.mxu0 0.0
    %2358 = vmatpush2.msra.mxu0 0.0
    %2359 = vmatprep.subr.mxu0 0.0
    %2360 = vmatpush2.msra.mxu0 0.0
    %2361 = vmatprep.mubr.f32.mxu0 0.0
    %2362 = vmatmul.mubr.f32.gmra.mxu0 %v2292
    %v2363 = vpop.f32.mrf.mxu0
    %v2364 = vadd.f32 0.0, %v2363
    %v2365 = vpop.f32.mrf.mxu0
    %2366 = vmatprep.mubr.f32.mxu0 0.0
    %2367 = vmatmul.mubr.f32.gmra.mxu0 %v2295
    %v2368 = vpop.f32.mrf.mxu0
    %v2369 = vadd.f32 0.0, %v2368
    %v2370 = vpop.f32.mrf.mxu0
    %2371 = vdwg.mxu0
    %v2373 = vsel %vm2290, %v2137, 0
    %v2376 = vsel %vm2290, %v2138, 0
    %2378 = vmatprep.subr.mxu0 0.0
    %2379 = vmatpush1.msra.mxu0 0.0
    %2380 = vmatprep.subr.mxu0 0.0
    %2381 = vmatpush1.msra.mxu0 0.0
    %2382 = vmatprep.subr.mxu0 0.0
    %2383 = vmatpush1.msra.mxu0 0.0
    %2384 = vmatprep.subr.mxu0 0.0
    %2385 = vmatpush1.msra.mxu0 0.0
    %2386 = vmatprep.subr.mxu0 0.0
    %2387 = vmatpush1.msra.mxu0 0.0
    %2388 = vmatprep.subr.mxu0 0.0
    %2389 = vmatpush1.msra.mxu0 0.0
    %2390 = vmatprep.subr.mxu0 0.0
    %2391 = vmatpush1.msra.mxu0 0.0
    %2392 = vmatprep.subr.mxu0 0.0
    %2393 = vmatpush1.msra.mxu0 0.0
    %2394 = vmatprep.subr.mxu0 0.0
    %2395 = vmatpush1.msra.mxu0 0.0
    %2396 = vmatprep.subr.mxu0 0.0
    %2397 = vmatpush1.msra.mxu0 0.0
    %2398 = vmatprep.subr.mxu0 0.0
    %2399 = vmatpush1.msra.mxu0 0.0
    %2400 = vmatprep.subr.mxu0 0.0
    %2401 = vmatpush1.msra.mxu0 0.0
    %2402 = vmatprep.subr.mxu0 0.0
    %2403 = vmatpush1.msra.mxu0 0.0
    %2404 = vmatprep.subr.mxu0 0.0
    %2405 = vmatpush1.msra.mxu0 0.0
    %2406 = vmatprep.subr.mxu0 0.0
    %2407 = vmatpush1.msra.mxu0 0.0
    %2408 = vmatprep.subr.mxu0 0.0
    %2409 = vmatpush1.msra.mxu0 %v2211
    %2410 = vmatprep.subr.mxu0 0.0
    %2411 = vmatpush2.msra.mxu0 0.0
    %2412 = vmatprep.subr.mxu0 0.0
    %2413 = vmatpush2.msra.mxu0 0.0
    %2414 = vmatprep.subr.mxu0 0.0
    %2415 = vmatpush2.msra.mxu0 0.0
    %2416 = vmatprep.subr.mxu0 0.0
    %2417 = vmatpush2.msra.mxu0 0.0
    %2418 = vmatprep.subr.mxu0 0.0
    %2419 = vmatpush2.msra.mxu0 0.0
    %2420 = vmatprep.subr.mxu0 0.0
    %2421 = vmatpush2.msra.mxu0 0.0
    %2422 = vmatprep.subr.mxu0 0.0
    %2423 = vmatpush2.msra.mxu0 0.0
    %2424 = vmatprep.subr.mxu0 0.0
    %2425 = vmatpush2.msra.mxu0 0.0
    %2426 = vmatprep.subr.mxu0 0.0
    %2427 = vmatpush2.msra.mxu0 0.0
    %2428 = vmatprep.subr.mxu0 0.0
    %2429 = vmatpush2.msra.mxu0 0.0
    %2430 = vmatprep.subr.mxu0 0.0
    %2431 = vmatpush2.msra.mxu0 0.0
    %2432 = vmatprep.subr.mxu0 0.0
    %2433 = vmatpush2.msra.mxu0 0.0
    %2434 = vmatprep.subr.mxu0 0.0
    %2435 = vmatpush2.msra.mxu0 0.0
    %2436 = vmatprep.subr.mxu0 0.0
    %2437 = vmatpush2.msra.mxu0 0.0
    %2438 = vmatprep.subr.mxu0 0.0
    %2439 = vmatpush2.msra.mxu0 0.0
    %2440 = vmatprep.subr.mxu0 0.0
    %2441 = vmatpush2.msra.mxu0 0.0
    %2442 = vmatprep.mubr.f32.mxu0 0.0
    %2443 = vmatmul.mubr.f32.gmra.mxu0 %v2373
    %v2444 = vpop.f32.mrf.mxu0
    %v2445 = vadd.f32 %v2364, %v2444
    %v2446 = vpop.f32.mrf.mxu0
    %2447 = vmatprep.mubr.f32.mxu0 0.0
    %2448 = vmatmul.mubr.f32.gmra.mxu0 %v2376
    %v2449 = vpop.f32.mrf.mxu0
    %v2450 = vadd.f32 %v2369, %v2449
    %v2451 = vpop.f32.mrf.mxu0
    %2452 = vdwg.mxu0
    %v2453 = vld [vmem:[%s9] sm:$0xff]
    %v2454 = vld [vmem:[%s9 + $0x8] sm:$0xff]
    %v2455 = vld [vmem:[%s9 + $0x10] sm:$0xff]
    %v2456 = vld [vmem:[%s9 + $0x18] sm:$0xff]
    %v2457 = vld [vmem:[%s9 + $0x20] sm:$0xff]
    %v2458 = vld [vmem:[%s9 + $0x28] sm:$0xff]
    %v2459 = vld [vmem:[%s9 + $0x30] sm:$0xff]
    %v2460 = vld [vmem:[%s9 + $0x38] sm:$0xff]
    %v2461 = vld [vmem:[%s9 + $0x40] sm:$0xff]
    %v2462 = vld [vmem:[%s9 + $0x48] sm:$0xff]
    %v2463 = vld [vmem:[%s9 + $0x50] sm:$0xff]
    %v2464 = vld [vmem:[%s9 + $0x58] sm:$0xff]
    %v2465 = vld [vmem:[%s9 + $0x60] sm:$0xff]
    %v2466 = vld [vmem:[%s9 + $0x68] sm:$0xff]
    %v2467 = vld [vmem:[%s9 + $0x70] sm:$0xff]
    %v2468 = vld [vmem:[%s9 + $0x78] sm:$0xff]
    %v2469 = vld [vmem:[%s10] sm:$0xff]
    %v2470 = vld [vmem:[%s10 + $0x8] sm:$0xff]
    %v2471 = vadd.f32 %v2445, %v2450
    %v2472 = vrot.slane %v2471, 4
    %v2473 = vadd.f32 %v2471, %v2472
    %v2474 = vrot.slane %v2473, 2
    %v2475 = vadd.f32 %v2473, %v2474
    %v2476 = vrot.slane %v2475, 1
    %v2477 = vadd.f32 %v2475, %v2476
    %2478 = vmatprep.subr.mxu0 0.0
    %2479 = vmatpush1.msra.mxu0 %v2468
    %2480 = vmatprep.subr.mxu0 0.0
    %2481 = vmatpush1.msra.mxu0 %v2467
    %2482 = vmatprep.subr.mxu0 0.0
    %2483 = vmatpush1.msra.mxu0 %v2466
    %2484 = vmatprep.subr.mxu0 0.0
    %2485 = vmatpush1.msra.mxu0 %v2465
    %2486 = vmatprep.subr.mxu0 0.0
    %2487 = vmatpush1.msra.mxu0 %v2464
    %2488 = vmatprep.subr.mxu0 0.0
    %2489 = vmatpush1.msra.mxu0 %v2463
    %2490 = vmatprep.subr.mxu0 0.0
    %2491 = vmatpush1.msra.mxu0 %v2462
    %2492 = vmatprep.subr.mxu0 0.0
    %2493 = vmatpush1.msra.mxu0 %v2461
    %2494 = vmatprep.subr.mxu0 0.0
    %2495 = vmatpush1.msra.mxu0 %v2460
    %2496 = vmatprep.subr.mxu0 0.0
    %2497 = vmatpush1.msra.mxu0 %v2459
    %2498 = vmatprep.subr.mxu0 0.0
    %2499 = vmatpush1.msra.mxu0 %v2458
    %2500 = vmatprep.subr.mxu0 0.0
    %2501 = vmatpush1.msra.mxu0 %v2457
    %2502 = vmatprep.subr.mxu0 0.0
    %2503 = vmatpush1.msra.mxu0 %v2456
    %2504 = vmatprep.subr.mxu0 0.0
    %2505 = vmatpush1.msra.mxu0 %v2455
    %2506 = vmatprep.subr.mxu0 0.0
    %2507 = vmatpush1.msra.mxu0 %v2454
    %2508 = vmatprep.subr.mxu0 0.0
    %2509 = vmatpush1.msra.mxu0 %v2453
    %2510 = vmatprep.subr.mxu0 0.0
    %2511 = vmatpush2.msra.mxu0 0.0
    %2512 = vmatprep.subr.mxu0 0.0
    %2513 = vmatpush2.msra.mxu0 0.0
    %2514 = vmatprep.subr.mxu0 0.0
    %2515 = vmatpush2.msra.mxu0 0.0
    %2516 = vmatprep.subr.mxu0 0.0
    %2517 = vmatpush2.msra.mxu0 0.0
    %2518 = vmatprep.subr.mxu0 0.0
    %2519 = vmatpush2.msra.mxu0 0.0
    %2520 = vmatprep.subr.mxu0 0.0
    %2521 = vmatpush2.msra.mxu0 0.0
    %2522 = vmatprep.subr.mxu0 0.0
    %2523 = vmatpush2.msra.mxu0 0.0
    %2524 = vmatprep.subr.mxu0 0.0
    %2525 = vmatpush2.msra.mxu0 0.0
    %2526 = vmatprep.subr.mxu0 0.0
    %2527 = vmatpush2.msra.mxu0 0.0
    %2528 = vmatprep.subr.mxu0 0.0
    %2529 = vmatpush2.msra.mxu0 0.0
    %2530 = vmatprep.subr.mxu0 0.0
    %2531 = vmatpush2.msra.mxu0 0.0
    %2532 = vmatprep.subr.mxu0 0.0
    %2533 = vmatpush2.msra.mxu0 0.0
    %2534 = vmatprep.subr.mxu0 0.0
    %2535 = vmatpush2.msra.mxu0 0.0
    %2536 = vmatprep.subr.mxu0 0.0
    %2537 = vmatpush2.msra.mxu0 0.0
    %2538 = vmatprep.subr.mxu0 0.0
    %2539 = vmatpush2.msra.mxu0 0.0
    %2540 = vmatprep.subr.mxu0 0.0
    %2541 = vmatpush2.msra.mxu0 0.0
    %2542 = vmatprep.mubr.f32.mxu0 0.0
    %2543 = vmatmul.mubr.f32.gmra.mxu0 %v2477
    %v2544 = vpop.f32.mrf.mxu0
    %v2545 = vadd.f32 0.0, %v2544
    %v2546 = vpop.f32.mrf.mxu0
    %2547 = vdwg.mxu0
    %v2548 = vmul.f32 %v2545, 0.0078125
    %v2550 = vsel %vm119, %v2548, 0
    %2552 = vmatprep.subr.mxu0 0.0
    %2553 = vmatpush1.msra.mxu0 0.0
    %2554 = vmatprep.subr.mxu0 0.0
    %2555 = vmatpush1.msra.mxu0 0.0
    %2556 = vmatprep.subr.mxu0 0.0
    %2557 = vmatpush1.msra.mxu0 0.0
    %2558 = vmatprep.subr.mxu0 0.0
    %2559 = vmatpush1.msra.mxu0 0.0
    %2560 = vmatprep.subr.mxu0 0.0
    %2561 = vmatpush1.msra.mxu0 0.0
    %2562 = vmatprep.subr.mxu0 0.0
    %2563 = vmatpush1.msra.mxu0 0.0
    %2564 = vmatprep.subr.mxu0 0.0
    %2565 = vmatpush1.msra.mxu0 0.0
    %2566 = vmatprep.subr.mxu0 0.0
    %2567 = vmatpush1.msra.mxu0 0.0
    %2568 = vmatprep.subr.mxu0 0.0
    %2569 = vmatpush1.msra.mxu0 0.0
    %2570 = vmatprep.subr.mxu0 0.0
    %2571 = vmatpush1.msra.mxu0 0.0
    %2572 = vmatprep.subr.mxu0 0.0
    %2573 = vmatpush1.msra.mxu0 0.0
    %2574 = vmatprep.subr.mxu0 0.0
    %2575 = vmatpush1.msra.mxu0 0.0
    %2576 = vmatprep.subr.mxu0 0.0
    %2577 = vmatpush1.msra.mxu0 0.0
    %2578 = vmatprep.subr.mxu0 0.0
    %2579 = vmatpush1.msra.mxu0 0.0
    %2580 = vmatprep.subr.mxu0 0.0
    %2581 = vmatpush1.msra.mxu0 %v2470
    %2582 = vmatprep.subr.mxu0 0.0
    %2583 = vmatpush1.msra.mxu0 %v2469
    %2584 = vmatprep.subr.mxu0 0.0
    %2585 = vmatpush2.msra.mxu0 0.0
    %2586 = vmatprep.subr.mxu0 0.0
    %2587 = vmatpush2.msra.mxu0 0.0
    %2588 = vmatprep.subr.mxu0 0.0
    %2589 = vmatpush2.msra.mxu0 0.0
    %2590 = vmatprep.subr.mxu0 0.0
    %2591 = vmatpush2.msra.mxu0 0.0
    %2592 = vmatprep.subr.mxu0 0.0
    %2593 = vmatpush2.msra.mxu0 0.0
    %2594 = vmatprep.subr.mxu0 0.0
    %2595 = vmatpush2.msra.mxu0 0.0
    %2596 = vmatprep.subr.mxu0 0.0
    %2597 = vmatpush2.msra.mxu0 0.0
    %2598 = vmatprep.subr.mxu0 0.0
    %2599 = vmatpush2.msra.mxu0 0.0
    %2600 = vmatprep.subr.mxu0 0.0
    %2601 = vmatpush2.msra.mxu0 0.0
    %2602 = vmatprep.subr.mxu0 0.0
    %2603 = vmatpush2.msra.mxu0 0.0
    %2604 = vmatprep.subr.mxu0 0.0
    %2605 = vmatpush2.msra.mxu0 0.0
    %2606 = vmatprep.subr.mxu0 0.0
    %2607 = vmatpush2.msra.mxu0 0.0
    %2608 = vmatprep.subr.mxu0 0.0
    %2609 = vmatpush2.msra.mxu0 0.0
    %2610 = vmatprep.subr.mxu0 0.0
    %2611 = vmatpush2.msra.mxu0 0.0
    %2612 = vmatprep.subr.mxu0 0.0
    %2613 = vmatpush2.msra.mxu0 0.0
    %2614 = vmatprep.subr.mxu0 0.0
    %2615 = vmatpush2.msra.mxu0 0.0
    %2616 = vmatprep.mubr.f32.mxu0 0.0
    %2617 = vmatmul.mubr.f32.gmra.mxu0 %v2550
    %v2618 = vpop.f32.mrf.mxu0
    %v2619 = vadd.f32 0.0, %v2618
    %v2620 = vpop.f32.mrf.mxu0
    %2621 = vdwg.mxu0
    %v2622 = vlaneseq
    %v2623 = vshrl.u32 %v2622, 7
    %v2624 = vsub.s32 0, %v2623
    %v2625 = vrot.slane %v2619, %v2624
    %v2626 = vsub.f32 %v2445, %v2625
    %v2627 = vsub.f32 %v2450, %v2625
    %v2628 = vmul.f32 %v2626, %v2626
    %v2629 = vmul.f32 %v2627, %v2627
    %v2630 = vadd.f32 %v2628, %v2629
    %v2631 = vrot.slane %v2630, 4
    %v2632 = vadd.f32 %v2630, %v2631
    %v2633 = vrot.slane %v2632, 2
    %v2634 = vadd.f32 %v2632, %v2633
    %v2635 = vrot.slane %v2634, 1
    %v2636 = vadd.f32 %v2634, %v2635
    %2637 = vmatprep.subr.mxu0 0.0
    %2638 = vmatpush1.msra.mxu0 %v2468
    %2639 = vmatprep.subr.mxu0 0.0
    %2640 = vmatpush1.msra.mxu0 %v2467
    %2641 = vmatprep.subr.mxu0 0.0
    %2642 = vmatpush1.msra.mxu0 %v2466
    %2643 = vmatprep.subr.mxu0 0.0
    %2644 = vmatpush1.msra.mxu0 %v2465
    %2645 = vmatprep.subr.mxu0 0.0
    %2646 = vmatpush1.msra.mxu0 %v2464
    %2647 = vmatprep.subr.mxu0 0.0
    %2648 = vmatpush1.msra.mxu0 %v2463
    %2649 = vmatprep.subr.mxu0 0.0
    %2650 = vmatpush1.msra.mxu0 %v2462
    %2651 = vmatprep.subr.mxu0 0.0
    %2652 = vmatpush1.msra.mxu0 %v2461
    %2653 = vmatprep.subr.mxu0 0.0
    %2654 = vmatpush1.msra.mxu0 %v2460
    %2655 = vmatprep.subr.mxu0 0.0
    %2656 = vmatpush1.msra.mxu0 %v2459
    %2657 = vmatprep.subr.mxu0 0.0
    %2658 = vmatpush1.msra.mxu0 %v2458
    %2659 = vmatprep.subr.mxu0 0.0
    %2660 = vmatpush1.msra.mxu0 %v2457
    %2661 = vmatprep.subr.mxu0 0.0
    %2662 = vmatpush1.msra.mxu0 %v2456
    %2663 = vmatprep.subr.mxu0 0.0
    %2664 = vmatpush1.msra.mxu0 %v2455
    %2665 = vmatprep.subr.mxu0 0.0
    %2666 = vmatpush1.msra.mxu0 %v2454
    %2667 = vmatprep.subr.mxu0 0.0
    %2668 = vmatpush1.msra.mxu0 %v2453
    %2669 = vmatprep.subr.mxu0 0.0
    %2670 = vmatpush2.msra.mxu0 0.0
    %2671 = vmatprep.subr.mxu0 0.0
    %2672 = vmatpush2.msra.mxu0 0.0
    %2673 = vmatprep.subr.mxu0 0.0
    %2674 = vmatpush2.msra.mxu0 0.0
    %2675 = vmatprep.subr.mxu0 0.0
    %2676 = vmatpush2.msra.mxu0 0.0
    %2677 = vmatprep.subr.mxu0 0.0
    %2678 = vmatpush2.msra.mxu0 0.0
    %2679 = vmatprep.subr.mxu0 0.0
    %2680 = vmatpush2.msra.mxu0 0.0
    %2681 = vmatprep.subr.mxu0 0.0
    %2682 = vmatpush2.msra.mxu0 0.0
    %2683 = vmatprep.subr.mxu0 0.0
    %2684 = vmatpush2.msra.mxu0 0.0
    %2685 = vmatprep.subr.mxu0 0.0
    %2686 = vmatpush2.msra.mxu0 0.0
    %2687 = vmatprep.subr.mxu0 0.0
    %2688 = vmatpush2.msra.mxu0 0.0
    %2689 = vmatprep.subr.mxu0 0.0
    %2690 = vmatpush2.msra.mxu0 0.0
    %2691 = vmatprep.subr.mxu0 0.0
    %2692 = vmatpush2.msra.mxu0 0.0
    %2693 = vmatprep.subr.mxu0 0.0
    %2694 = vmatpush2.msra.mxu0 0.0
    %2695 = vmatprep.subr.mxu0 0.0
    %2696 = vmatpush2.msra.mxu0 0.0
    %2697 = vmatprep.subr.mxu0 0.0
    %2698 = vmatpush2.msra.mxu0 0.0
    %2699 = vmatprep.subr.mxu0 0.0
    %2700 = vmatpush2.msra.mxu0 0.0
    %2701 = vmatprep.mubr.f32.mxu0 0.0
    %2702 = vmatmul.mubr.f32.gmra.mxu0 %v2636
    %v2703 = vpop.f32.mrf.mxu0
    %v2704 = vadd.f32 0.0, %v2703
    %v2705 = vpop.f32.mrf.mxu0
    %2706 = vdwg.mxu0
    %v2707 = vmul.f32 %v2704, 0.0078125
    %v2708 = vadd.f32 %v2707, 1e-05
    %v2709 = vrsqrt.pop %v2708
    %v2710 = vrot.slane %v63, 4
    %v2712 = vmul.f32 %v2709, %v2710
    %v2714 = vsel %vm119, %v2712, 0
    %2716 = vmatprep.subr.mxu0 0.0
    %2717 = vmatpush1.msra.mxu0 0.0
    %2718 = vmatprep.subr.mxu0 0.0
    %2719 = vmatpush1.msra.mxu0 0.0
    %2720 = vmatprep.subr.mxu0 0.0
    %2721 = vmatpush1.msra.mxu0 0.0
    %2722 = vmatprep.subr.mxu0 0.0
    %2723 = vmatpush1.msra.mxu0 0.0
    %2724 = vmatprep.subr.mxu0 0.0
    %2725 = vmatpush1.msra.mxu0 0.0
    %2726 = vmatprep.subr.mxu0 0.0
    %2727 = vmatpush1.msra.mxu0 0.0
    %2728 = vmatprep.subr.mxu0 0.0
    %2729 = vmatpush1.msra.mxu0 0.0
    %2730 = vmatprep.subr.mxu0 0.0
    %2731 = vmatpush1.msra.mxu0 0.0
    %2732 = vmatprep.subr.mxu0 0.0
    %2733 = vmatpush1.msra.mxu0 0.0
    %2734 = vmatprep.subr.mxu0 0.0
    %2735 = vmatpush1.msra.mxu0 0.0
    %2736 = vmatprep.subr.mxu0 0.0
    %2737 = vmatpush1.msra.mxu0 0.0
    %2738 = vmatprep.subr.mxu0 0.0
    %2739 = vmatpush1.msra.mxu0 0.0
    %2740 = vmatprep.subr.mxu0 0.0
    %2741 = vmatpush1.msra.mxu0 0.0
    %2742 = vmatprep.subr.mxu0 0.0
    %2743 = vmatpush1.msra.mxu0 0.0
    %2744 = vmatprep.subr.mxu0 0.0
    %2745 = vmatpush1.msra.mxu0 %v2470
    %2746 = vmatprep.subr.mxu0 0.0
    %2747 = vmatpush1.msra.mxu0 %v2469
    %2748 = vmatprep.subr.mxu0 0.0
    %2749 = vmatpush2.msra.mxu0 0.0
    %2750 = vmatprep.subr.mxu0 0.0
    %2751 = vmatpush2.msra.mxu0 0.0
    %2752 = vmatprep.subr.mxu0 0.0
    %2753 = vmatpush2.msra.mxu0 0.0
    %2754 = vmatprep.subr.mxu0 0.0
    %2755 = vmatpush2.msra.mxu0 0.0
    %2756 = vmatprep.subr.mxu0 0.0
    %2757 = vmatpush2.msra.mxu0 0.0
    %2758 = vmatprep.subr.mxu0 0.0
    %2759 = vmatpush2.msra.mxu0 0.0
    %2760 = vmatprep.subr.mxu0 0.0
    %2761 = vmatpush2.msra.mxu0 0.0
    %2762 = vmatprep.subr.mxu0 0.0
    %2763 = vmatpush2.msra.mxu0 0.0
    %2764 = vmatprep.subr.mxu0 0.0
    %2765 = vmatpush2.msra.mxu0 0.0
    %2766 = vmatprep.subr.mxu0 0.0
    %2767 = vmatpush2.msra.mxu0 0.0
    %2768 = vmatprep.subr.mxu0 0.0
    %2769 = vmatpush2.msra.mxu0 0.0
    %2770 = vmatprep.subr.mxu0 0.0
    %2771 = vmatpush2.msra.mxu0 0.0
    %2772 = vmatprep.subr.mxu0 0.0
    %2773 = vmatpush2.msra.mxu0 0.0
    %2774 = vmatprep.subr.mxu0 0.0
    %2775 = vmatpush2.msra.mxu0 0.0
    %2776 = vmatprep.subr.mxu0 0.0
    %2777 = vmatpush2.msra.mxu0 0.0
    %2778 = vmatprep.subr.mxu0 0.0
    %2779 = vmatpush2.msra.mxu0 0.0
    %2780 = vmatprep.mubr.f32.mxu0 0.0
    %2781 = vmatmul.mubr.f32.gmra.mxu0 %v2714
    %v2782 = vpop.f32.mrf.mxu0
    %v2783 = vadd.f32 0.0, %v2782
    %v2784 = vpop.f32.mrf.mxu0
    %2785 = vdwg.mxu0
    %v2786 = vlaneseq
    %v2787 = vshrl.u32 %v2786, 7
    %v2788 = vsub.s32 0, %v2787
    %v2789 = vrot.slane %v2783, %v2788
    %v2790 = vmul.f32 %v2626, %v2789
    %v2791 = vmul.f32 %v2627, %v2789
    %v2792 = vrot.slane %v63, 5
    %v2793 = vsel %vm119, %v2792, 0
    %2795 = vmatprep.subr.mxu0 0.0
    %2796 = vmatpush1.msra.mxu0 0.0
    %2797 = vmatprep.subr.mxu0 0.0
    %2798 = vmatpush1.msra.mxu0 0.0
    %2799 = vmatprep.subr.mxu0 0.0
    %2800 = vmatpush1.msra.mxu0 0.0
    %2801 = vmatprep.subr.mxu0 0.0
    %2802 = vmatpush1.msra.mxu0 0.0
    %2803 = vmatprep.subr.mxu0 0.0
    %2804 = vmatpush1.msra.mxu0 0.0
    %2805 = vmatprep.subr.mxu0 0.0
    %2806 = vmatpush1.msra.mxu0 0.0
    %2807 = vmatprep.subr.mxu0 0.0
    %2808 = vmatpush1.msra.mxu0 0.0
    %2809 = vmatprep.subr.mxu0 0.0
    %2810 = vmatpush1.msra.mxu0 0.0
    %2811 = vmatprep.subr.mxu0 0.0
    %2812 = vmatpush1.msra.mxu0 0.0
    %2813 = vmatprep.subr.mxu0 0.0
    %2814 = vmatpush1.msra.mxu0 0.0
    %2815 = vmatprep.subr.mxu0 0.0
    %2816 = vmatpush1.msra.mxu0 0.0
    %2817 = vmatprep.subr.mxu0 0.0
    %2818 = vmatpush1.msra.mxu0 0.0
    %2819 = vmatprep.subr.mxu0 0.0
    %2820 = vmatpush1.msra.mxu0 0.0
    %2821 = vmatprep.subr.mxu0 0.0
    %2822 = vmatpush1.msra.mxu0 0.0
    %2823 = vmatprep.subr.mxu0 0.0
    %2824 = vmatpush1.msra.mxu0 %v2470
    %2825 = vmatprep.subr.mxu0 0.0
    %2826 = vmatpush1.msra.mxu0 %v2469
    %2827 = vmatprep.subr.mxu0 0.0
    %2828 = vmatpush2.msra.mxu0 0.0
    %2829 = vmatprep.subr.mxu0 0.0
    %2830 = vmatpush2.msra.mxu0 0.0
    %2831 = vmatprep.subr.mxu0 0.0
    %2832 = vmatpush2.msra.mxu0 0.0
    %2833 = vmatprep.subr.mxu0 0.0
    %2834 = vmatpush2.msra.mxu0 0.0
    %2835 = vmatprep.subr.mxu0 0.0
    %2836 = vmatpush2.msra.mxu0 0.0
    %2837 = vmatprep.subr.mxu0 0.0
    %2838 = vmatpush2.msra.mxu0 0.0
    %2839 = vmatprep.subr.mxu0 0.0
    %2840 = vmatpush2.msra.mxu0 0.0
    %2841 = vmatprep.subr.mxu0 0.0
    %2842 = vmatpush2.msra.mxu0 0.0
    %2843 = vmatprep.subr.mxu0 0.0
    %2844 = vmatpush2.msra.mxu0 0.0
    %2845 = vmatprep.subr.mxu0 0.0
    %2846 = vmatpush2.msra.mxu0 0.0
    %2847 = vmatprep.subr.mxu0 0.0
    %2848 = vmatpush2.msra.mxu0 0.0
    %2849 = vmatprep.subr.mxu0 0.0
    %2850 = vmatpush2.msra.mxu0 0.0
    %2851 = vmatprep.subr.mxu0 0.0
    %2852 = vmatpush2.msra.mxu0 0.0
    %2853 = vmatprep.subr.mxu0 0.0
    %2854 = vmatpush2.msra.mxu0 0.0
    %2855 = vmatprep.subr.mxu0 0.0
    %2856 = vmatpush2.msra.mxu0 0.0
    %2857 = vmatprep.subr.mxu0 0.0
    %2858 = vmatpush2.msra.mxu0 0.0
    %2859 = vmatprep.mubr.f32.mxu0 0.0
    %2860 = vmatmul.mubr.f32.gmra.mxu0 %v2793
    %v2861 = vpop.f32.mrf.mxu0
    %v2862 = vadd.f32 0.0, %v2861
    %v2863 = vpop.f32.mrf.mxu0
    %2864 = vdwg.mxu0
    %v2865 = vlaneseq
    %v2866 = vshrl.u32 %v2865, 7
    %v2867 = vsub.s32 0, %v2866
    %v2868 = vrot.slane %v2862, %v2867
    %v2869 = vadd.f32 %v2790, %v2868
    %v2870 = vadd.f32 %v2791, %v2868
    %v2871 = vmax.f32 %v2869, 0.0
    %v2872 = vmax.f32 %v2870, 0.0
    %v2873 = vld [vmem:[%s16] sm:$0xff]
    %v2874 = vld [vmem:[%s16 + $0x8] sm:$0xff]
    %v2875 = vld [vmem:[%s16 + $0x10] sm:$0xff]
    %v2876 = vld [vmem:[%s16 + $0x18] sm:$0xff]
    %v2877 = vld [vmem:[%s4] sm:$0xff]
    %v2878 = vld [vmem:[%s4 + $0x8] sm:$0xff]
    %v2879 = vld [vmem:[%s4 + $0x10] sm:$0xff]
    %v2880 = vld [vmem:[%s4 + $0x18] sm:$0xff]
    %v2881 = vld [vmem:[%s4 + $0x20] sm:$0xff]
    %v2882 = vld [vmem:[%s4 + $0x28] sm:$0xff]
    %v2883 = vld [vmem:[%s4 + $0x30] sm:$0xff]
    %v2884 = vld [vmem:[%s4 + $0x38] sm:$0xff]
    %v2885 = vld [vmem:[%s4 + $0x40] sm:$0xff]
    %v2886 = vld [vmem:[%s4 + $0x48] sm:$0xff]
    %v2887 = vld [vmem:[%s4 + $0x50] sm:$0xff]
    %v2888 = vld [vmem:[%s4 + $0x58] sm:$0xff]
    %v2889 = vld [vmem:[%s4 + $0x60] sm:$0xff]
    %v2890 = vld [vmem:[%s4 + $0x68] sm:$0xff]
    %v2891 = vld [vmem:[%s4 + $0x70] sm:$0xff]
    %v2892 = vld [vmem:[%s4 + $0x78] sm:$0xff]
    %2893 = vmatprep.subr.mxu0 0.0
    %2894 = vmatpush1.msra.mxu0 %v2892
    %2895 = vmatprep.subr.mxu0 0.0
    %2896 = vmatpush1.msra.mxu0 %v2891
    %2897 = vmatprep.subr.mxu0 0.0
    %2898 = vmatpush1.msra.mxu0 %v2890
    %2899 = vmatprep.subr.mxu0 0.0
    %2900 = vmatpush1.msra.mxu0 %v2889
    %2901 = vmatprep.subr.mxu0 0.0
    %2902 = vmatpush1.msra.mxu0 %v2888
    %2903 = vmatprep.subr.mxu0 0.0
    %2904 = vmatpush1.msra.mxu0 %v2887
    %2905 = vmatprep.subr.mxu0 0.0
    %2906 = vmatpush1.msra.mxu0 %v2886
    %2907 = vmatprep.subr.mxu0 0.0
    %2908 = vmatpush1.msra.mxu0 %v2885
    %2909 = vmatprep.subr.mxu0 0.0
    %2910 = vmatpush1.msra.mxu0 %v2884
    %2911 = vmatprep.subr.mxu0 0.0
    %2912 = vmatpush1.msra.mxu0 %v2883
    %2913 = vmatprep.subr.mxu0 0.0
    %2914 = vmatpush1.msra.mxu0 %v2882
    %2915 = vmatprep.subr.mxu0 0.0
    %2916 = vmatpush1.msra.mxu0 %v2881
    %2917 = vmatprep.subr.mxu0 0.0
    %2918 = vmatpush1.msra.mxu0 %v2880
    %2919 = vmatprep.subr.mxu0 0.0
    %2920 = vmatpush1.msra.mxu0 %v2879
    %2921 = vmatprep.subr.mxu0 0.0
    %2922 = vmatpush1.msra.mxu0 %v2878
    %2923 = vmatprep.subr.mxu0 0.0
    %2924 = vmatpush1.msra.mxu0 %v2877
    %2925 = vmatprep.subr.mxu0 0.0
    %2926 = vmatpush2.msra.mxu0 0.0
    %2927 = vmatprep.subr.mxu0 0.0
    %2928 = vmatpush2.msra.mxu0 0.0
    %2929 = vmatprep.subr.mxu0 0.0
    %2930 = vmatpush2.msra.mxu0 0.0
    %2931 = vmatprep.subr.mxu0 0.0
    %2932 = vmatpush2.msra.mxu0 0.0
    %2933 = vmatprep.subr.mxu0 0.0
    %2934 = vmatpush2.msra.mxu0 0.0
    %2935 = vmatprep.subr.mxu0 0.0
    %2936 = vmatpush2.msra.mxu0 0.0
    %2937 = vmatprep.subr.mxu0 0.0
    %2938 = vmatpush2.msra.mxu0 0.0
    %2939 = vmatprep.subr.mxu0 0.0
    %2940 = vmatpush2.msra.mxu0 0.0
    %2941 = vmatprep.subr.mxu0 0.0
    %2942 = vmatpush2.msra.mxu0 0.0
    %2943 = vmatprep.subr.mxu0 0.0
    %2944 = vmatpush2.msra.mxu0 0.0
    %2945 = vmatprep.subr.mxu0 0.0
    %2946 = vmatpush2.msra.mxu0 0.0
    %2947 = vmatprep.subr.mxu0 0.0
    %2948 = vmatpush2.msra.mxu0 0.0
    %2949 = vmatprep.subr.mxu0 0.0
    %2950 = vmatpush2.msra.mxu0 0.0
    %2951 = vmatprep.subr.mxu0 0.0
    %2952 = vmatpush2.msra.mxu0 0.0
    %2953 = vmatprep.subr.mxu0 0.0
    %2954 = vmatpush2.msra.mxu0 0.0
    %2955 = vmatprep.subr.mxu0 0.0
    %2956 = vmatpush2.msra.mxu0 0.0
    %2957 = vmatprep.mubr.f32.mxu0 0.0
    %2958 = vmatmul.mubr.f32.gmra.mxu0 %v2871
    %v2959 = vpop.f32.mrf.mxu0
    %v2960 = vadd.f32 0.0, %v2959
    %v2961 = vpop.f32.mrf.mxu0
    %2962 = vmatprep.mubr.f32.mxu0 0.0
    %2963 = vmatmul.mubr.f32.gmra.mxu0 %v2872
    %v2964 = vpop.f32.mrf.mxu0
    %v2965 = vadd.f32 0.0, %v2964
    %v2966 = vpop.f32.mrf.mxu0
    %2967 = vdwg.mxu0
    %s2968 = scalar_lea.vmem %s16, 32
    %v2969 = vld [vmem:[%s2968] sm:$0xff]
    %v2970 = vld [vmem:[%s2968 + $0x8] sm:$0xff]
    %v2971 = vld [vmem:[%s2968 + $0x10] sm:$0xff]
    %v2972 = vld [vmem:[%s2968 + $0x18] sm:$0xff]
    %s2973 = scalar_lea.vmem %s4, 128
    %v2974 = vld [vmem:[%s2973] sm:$0xff]
    %v2975 = vld [vmem:[%s2973 + $0x8] sm:$0xff]
    %v2976 = vld [vmem:[%s2973 + $0x10] sm:$0xff]
    %v2977 = vld [vmem:[%s2973 + $0x18] sm:$0xff]
    %v2978 = vld [vmem:[%s2973 + $0x20] sm:$0xff]
    %v2979 = vld [vmem:[%s2973 + $0x28] sm:$0xff]
    %v2980 = vld [vmem:[%s2973 + $0x30] sm:$0xff]
    %v2981 = vld [vmem:[%s2973 + $0x38] sm:$0xff]
    %v2982 = vld [vmem:[%s2973 + $0x40] sm:$0xff]
    %v2983 = vld [vmem:[%s2973 + $0x48] sm:$0xff]
    %v2984 = vld [vmem:[%s2973 + $0x50] sm:$0xff]
    %v2985 = vld [vmem:[%s2973 + $0x58] sm:$0xff]
    %v2986 = vld [vmem:[%s2973 + $0x60] sm:$0xff]
    %v2987 = vld [vmem:[%s2973 + $0x68] sm:$0xff]
    %v2988 = vld [vmem:[%s2973 + $0x70] sm:$0xff]
    %v2989 = vld [vmem:[%s2973 + $0x78] sm:$0xff]
    %2990 = vmatprep.subr.mxu0 0.0
    %2991 = vmatpush1.msra.mxu0 %v2989
    %2992 = vmatprep.subr.mxu0 0.0
    %2993 = vmatpush1.msra.mxu0 %v2988
    %2994 = vmatprep.subr.mxu0 0.0
    %2995 = vmatpush1.msra.mxu0 %v2987
    %2996 = vmatprep.subr.mxu0 0.0
    %2997 = vmatpush1.msra.mxu0 %v2986
    %2998 = vmatprep.subr.mxu0 0.0
    %2999 = vmatpush1.msra.mxu0 %v2985
    %3000 = vmatprep.subr.mxu0 0.0
    %3001 = vmatpush1.msra.mxu0 %v2984
    %3002 = vmatprep.subr.mxu0 0.0
    %3003 = vmatpush1.msra.mxu0 %v2983
    %3004 = vmatprep.subr.mxu0 0.0
    %3005 = vmatpush1.msra.mxu0 %v2982
    %3006 = vmatprep.subr.mxu0 0.0
    %3007 = vmatpush1.msra.mxu0 %v2981
    %3008 = vmatprep.subr.mxu0 0.0
    %3009 = vmatpush1.msra.mxu0 %v2980
    %3010 = vmatprep.subr.mxu0 0.0
    %3011 = vmatpush1.msra.mxu0 %v2979
    %3012 = vmatprep.subr.mxu0 0.0
    %3013 = vmatpush1.msra.mxu0 %v2978
    %3014 = vmatprep.subr.mxu0 0.0
    %3015 = vmatpush1.msra.mxu0 %v2977
    %3016 = vmatprep.subr.mxu0 0.0
    %3017 = vmatpush1.msra.mxu0 %v2976
    %3018 = vmatprep.subr.mxu0 0.0
    %3019 = vmatpush1.msra.mxu0 %v2975
    %3020 = vmatprep.subr.mxu0 0.0
    %3021 = vmatpush1.msra.mxu0 %v2974
    %3022 = vmatprep.subr.mxu0 0.0
    %3023 = vmatpush2.msra.mxu0 0.0
    %3024 = vmatprep.subr.mxu0 0.0
    %3025 = vmatpush2.msra.mxu0 0.0
    %3026 = vmatprep.subr.mxu0 0.0
    %3027 = vmatpush2.msra.mxu0 0.0
    %3028 = vmatprep.subr.mxu0 0.0
    %3029 = vmatpush2.msra.mxu0 0.0
    %3030 = vmatprep.subr.mxu0 0.0
    %3031 = vmatpush2.msra.mxu0 0.0
    %3032 = vmatprep.subr.mxu0 0.0
    %3033 = vmatpush2.msra.mxu0 0.0
    %3034 = vmatprep.subr.mxu0 0.0
    %3035 = vmatpush2.msra.mxu0 0.0
    %3036 = vmatprep.subr.mxu0 0.0
    %3037 = vmatpush2.msra.mxu0 0.0
    %3038 = vmatprep.subr.mxu0 0.0
    %3039 = vmatpush2.msra.mxu0 0.0
    %3040 = vmatprep.subr.mxu0 0.0
    %3041 = vmatpush2.msra.mxu0 0.0
    %3042 = vmatprep.subr.mxu0 0.0
    %3043 = vmatpush2.msra.mxu0 0.0
    %3044 = vmatprep.subr.mxu0 0.0
    %3045 = vmatpush2.msra.mxu0 0.0
    %3046 = vmatprep.subr.mxu0 0.0
    %3047 = vmatpush2.msra.mxu0 0.0
    %3048 = vmatprep.subr.mxu0 0.0
    %3049 = vmatpush2.msra.mxu0 0.0
    %3050 = vmatprep.subr.mxu0 0.0
    %3051 = vmatpush2.msra.mxu0 0.0
    %3052 = vmatprep.subr.mxu0 0.0
    %3053 = vmatpush2.msra.mxu0 0.0
    %3054 = vmatprep.mubr.f32.mxu0 0.0
    %3055 = vmatmul.mubr.f32.gmra.mxu0 %v2871
    %v3056 = vpop.f32.mrf.mxu0
    %v3057 = vadd.f32 0.0, %v3056
    %v3058 = vpop.f32.mrf.mxu0
    %3059 = vmatprep.mubr.f32.mxu0 0.0
    %3060 = vmatmul.mubr.f32.gmra.mxu0 %v2872
    %v3061 = vpop.f32.mrf.mxu0
    %v3062 = vadd.f32 0.0, %v3061
    %v3063 = vpop.f32.mrf.mxu0
    %3064 = vdwg.mxu0
    %v3066 = vsel %vm119, %v2969, 0
    %v3069 = vsel %vm119, %v2970, 0
    %v3072 = vsel %vm119, %v2971, 0
    %v3075 = vsel %vm119, %v2972, 0
    %3077 = vmatprep.subr.mxu0 0.0
    %3078 = vmatpush1.msra.mxu0 0.0
    %3079 = vmatprep.subr.mxu0 0.0
    %3080 = vmatpush1.msra.mxu0 0.0
    %3081 = vmatprep.subr.mxu0 0.0
    %3082 = vmatpush1.msra.mxu0 0.0
    %3083 = vmatprep.subr.mxu0 0.0
    %3084 = vmatpush1.msra.mxu0 0.0
    %3085 = vmatprep.subr.mxu0 0.0
    %3086 = vmatpush1.msra.mxu0 0.0
    %3087 = vmatprep.subr.mxu0 0.0
    %3088 = vmatpush1.msra.mxu0 0.0
    %3089 = vmatprep.subr.mxu0 0.0
    %3090 = vmatpush1.msra.mxu0 0.0
    %3091 = vmatprep.subr.mxu0 0.0
    %3092 = vmatpush1.msra.mxu0 0.0
    %3093 = vmatprep.subr.mxu0 0.0
    %3094 = vmatpush1.msra.mxu0 0.0
    %3095 = vmatprep.subr.mxu0 0.0
    %3096 = vmatpush1.msra.mxu0 0.0
    %3097 = vmatprep.subr.mxu0 0.0
    %3098 = vmatpush1.msra.mxu0 0.0
    %3099 = vmatprep.subr.mxu0 0.0
    %3100 = vmatpush1.msra.mxu0 0.0
    %3101 = vmatprep.subr.mxu0 0.0
    %3102 = vmatpush1.msra.mxu0 0.0
    %3103 = vmatprep.subr.mxu0 0.0
    %3104 = vmatpush1.msra.mxu0 0.0
    %3105 = vmatprep.subr.mxu0 0.0
    %3106 = vmatpush1.msra.mxu0 %v3062
    %3107 = vmatprep.subr.mxu0 0.0
    %3108 = vmatpush1.msra.mxu0 %v3057
    %3109 = vmatprep.subr.mxu0 0.0
    %3110 = vmatpush2.msra.mxu0 0.0
    %3111 = vmatprep.subr.mxu0 0.0
    %3112 = vmatpush2.msra.mxu0 0.0
    %3113 = vmatprep.subr.mxu0 0.0
    %3114 = vmatpush2.msra.mxu0 0.0
    %3115 = vmatprep.subr.mxu0 0.0
    %3116 = vmatpush2.msra.mxu0 0.0
    %3117 = vmatprep.subr.mxu0 0.0
    %3118 = vmatpush2.msra.mxu0 0.0
    %3119 = vmatprep.subr.mxu0 0.0
    %3120 = vmatpush2.msra.mxu0 0.0
    %3121 = vmatprep.subr.mxu0 0.0
    %3122 = vmatpush2.msra.mxu0 0.0
    %3123 = vmatprep.subr.mxu0 0.0
    %3124 = vmatpush2.msra.mxu0 0.0
    %3125 = vmatprep.subr.mxu0 0.0
    %3126 = vmatpush2.msra.mxu0 0.0
    %3127 = vmatprep.subr.mxu0 0.0
    %3128 = vmatpush2.msra.mxu0 0.0
    %3129 = vmatprep.subr.mxu0 0.0
    %3130 = vmatpush2.msra.mxu0 0.0
    %3131 = vmatprep.subr.mxu0 0.0
    %3132 = vmatpush2.msra.mxu0 0.0
    %3133 = vmatprep.subr.mxu0 0.0
    %3134 = vmatpush2.msra.mxu0 0.0
    %3135 = vmatprep.subr.mxu0 0.0
    %3136 = vmatpush2.msra.mxu0 0.0
    %3137 = vmatprep.subr.mxu0 0.0
    %3138 = vmatpush2.msra.mxu0 0.0
    %3139 = vmatprep.subr.mxu0 0.0
    %3140 = vmatpush2.msra.mxu0 0.0
    %3141 = vmatprep.mubr.f32.mxu0 0.0
    %3142 = vmatmul.mubr.f32.gmra.mxu0 %v3066
    %v3143 = vpop.f32.mrf.mxu0
    %v3144 = vadd.f32 0.0, %v3143
    %v3145 = vpop.f32.mrf.mxu0
    %3146 = vmatprep.mubr.f32.mxu0 0.0
    %3147 = vmatmul.mubr.f32.gmra.mxu0 %v3069
    %v3148 = vpop.f32.mrf.mxu0
    %v3149 = vadd.f32 0.0, %v3148
    %v3150 = vpop.f32.mrf.mxu0
    %3151 = vmatprep.mubr.f32.mxu0 0.0
    %3152 = vmatmul.mubr.f32.gmra.mxu0 %v3072
    %v3153 = vpop.f32.mrf.mxu0
    %v3154 = vadd.f32 0.0, %v3153
    %v3155 = vpop.f32.mrf.mxu0
    %3156 = vmatprep.mubr.f32.mxu0 0.0
    %3157 = vmatmul.mubr.f32.gmra.mxu0 %v3075
    %v3158 = vpop.f32.mrf.mxu0
    %v3159 = vadd.f32 0.0, %v3158
    %v3160 = vpop.f32.mrf.mxu0
    %3161 = vdwg.mxu0
    %v3163 = vsel %vm119, %v2873, 0
    %v3166 = vsel %vm119, %v2874, 0
    %v3169 = vsel %vm119, %v2875, 0
    %v3172 = vsel %vm119, %v2876, 0
    %3174 = vmatprep.subr.mxu0 0.0
    %3175 = vmatpush1.msra.mxu0 0.0
    %3176 = vmatprep.subr.mxu0 0.0
    %3177 = vmatpush1.msra.mxu0 0.0
    %3178 = vmatprep.subr.mxu0 0.0
    %3179 = vmatpush1.msra.mxu0 0.0
    %3180 = vmatprep.subr.mxu0 0.0
    %3181 = vmatpush1.msra.mxu0 0.0
    %3182 = vmatprep.subr.mxu0 0.0
    %3183 = vmatpush1.msra.mxu0 0.0
    %3184 = vmatprep.subr.mxu0 0.0
    %3185 = vmatpush1.msra.mxu0 0.0
    %3186 = vmatprep.subr.mxu0 0.0
    %3187 = vmatpush1.msra.mxu0 0.0
    %3188 = vmatprep.subr.mxu0 0.0
    %3189 = vmatpush1.msra.mxu0 0.0
    %3190 = vmatprep.subr.mxu0 0.0
    %3191 = vmatpush1.msra.mxu0 0.0
    %3192 = vmatprep.subr.mxu0 0.0
    %3193 = vmatpush1.msra.mxu0 0.0
    %3194 = vmatprep.subr.mxu0 0.0
    %3195 = vmatpush1.msra.mxu0 0.0
    %3196 = vmatprep.subr.mxu0 0.0
    %3197 = vmatpush1.msra.mxu0 0.0
    %3198 = vmatprep.subr.mxu0 0.0
    %3199 = vmatpush1.msra.mxu0 0.0
    %3200 = vmatprep.subr.mxu0 0.0
    %3201 = vmatpush1.msra.mxu0 0.0
    %3202 = vmatprep.subr.mxu0 0.0
    %3203 = vmatpush1.msra.mxu0 %v2965
    %3204 = vmatprep.subr.mxu0 0.0
    %3205 = vmatpush1.msra.mxu0 %v2960
    %3206 = vmatprep.subr.mxu0 0.0
    %3207 = vmatpush2.msra.mxu0 0.0
    %3208 = vmatprep.subr.mxu0 0.0
    %3209 = vmatpush2.msra.mxu0 0.0
    %3210 = vmatprep.subr.mxu0 0.0
    %3211 = vmatpush2.msra.mxu0 0.0
    %3212 = vmatprep.subr.mxu0 0.0
    %3213 = vmatpush2.msra.mxu0 0.0
    %3214 = vmatprep.subr.mxu0 0.0
    %3215 = vmatpush2.msra.mxu0 0.0
    %3216 = vmatprep.subr.mxu0 0.0
    %3217 = vmatpush2.msra.mxu0 0.0
    %3218 = vmatprep.subr.mxu0 0.0
    %3219 = vmatpush2.msra.mxu0 0.0
    %3220 = vmatprep.subr.mxu0 0.0
    %3221 = vmatpush2.msra.mxu0 0.0
    %3222 = vmatprep.subr.mxu0 0.0
    %3223 = vmatpush2.msra.mxu0 0.0
    %3224 = vmatprep.subr.mxu0 0.0
    %3225 = vmatpush2.msra.mxu0 0.0
    %3226 = vmatprep.subr.mxu0 0.0
    %3227 = vmatpush2.msra.mxu0 0.0
    %3228 = vmatprep.subr.mxu0 0.0
    %3229 = vmatpush2.msra.mxu0 0.0
    %3230 = vmatprep.subr.mxu0 0.0
    %3231 = vmatpush2.msra.mxu0 0.0
    %3232 = vmatprep.subr.mxu0 0.0
    %3233 = vmatpush2.msra.mxu0 0.0
    %3234 = vmatprep.subr.mxu0 0.0
    %3235 = vmatpush2.msra.mxu0 0.0
    %3236 = vmatprep.subr.mxu0 0.0
    %3237 = vmatpush2.msra.mxu0 0.0
    %3238 = vmatprep.mubr.f32.mxu0 0.0
    %3239 = vmatmul.mubr.f32.gmra.mxu0 %v3163
    %v3240 = vpop.f32.mrf.mxu0
    %v3241 = vadd.f32 %v3144, %v3240
    %v3242 = vpop.f32.mrf.mxu0
    %3243 = vmatprep.mubr.f32.mxu0 0.0
    %3244 = vmatmul.mubr.f32.gmra.mxu0 %v3166
    %v3245 = vpop.f32.mrf.mxu0
    %v3246 = vadd.f32 %v3149, %v3245
    %v3247 = vpop.f32.mrf.mxu0
    %3248 = vmatprep.mubr.f32.mxu0 0.0
    %3249 = vmatmul.mubr.f32.gmra.mxu0 %v3169
    %v3250 = vpop.f32.mrf.mxu0
    %v3251 = vadd.f32 %v3154, %v3250
    %v3252 = vpop.f32.mrf.mxu0
    %3253 = vmatprep.mubr.f32.mxu0 0.0
    %3254 = vmatmul.mubr.f32.gmra.mxu0 %v3172
    %v3255 = vpop.f32.mrf.mxu0
    %v3256 = vadd.f32 %v3159, %v3255
    %v3257 = vpop.f32.mrf.mxu0
    %3258 = vdwg.mxu0
    %v3259 = vld [vmem:[%s18] sm:$0x1]
    %v3261 = vlaneseq
    %v3262 = vshrl.u32 %v3261, 7
    %v3263 = vsub.s32 0, %v3262
    %v3264 = vrot.slane %v3259, %v3263
    %v3266 = vadd.f32 %v3241, %v3264
    %v3267 = vadd.f32 %v3246, %v3264
    %v3268 = vadd.f32 %v3251, %v3264
    %v3269 = vadd.f32 %v3256, %v3264
    %v3270 = vmax.f32 %v3266, 0.0
    %v3271 = vmax.f32 %v3267, 0.0
    %v3272 = vmax.f32 %v3268, 0.0
    %v3273 = vmax.f32 %v3269, 0.0
    %3274 = vst.msk [vmem:[#allocation2] sm:$0xff] %vm119, %v3270
    %3275 = vst.msk [vmem:[#allocation2 + $0x8] sm:$0xff] %vm119, %v3271
    %3276 = vst.msk [vmem:[#allocation2 + $0x10] sm:$0xff] %vm119, %v3272
    %3277 = vst.msk [vmem:[#allocation2 + $0x18] sm:$0xff] %vm119, %v3273
    // Predicated region
    $region78: #{conv_autoencoder_forward.1} parent=1 // pred_check
      _
    $region79: #{conv_autoencoder_forward.1} parent=1 // pred_check_branch
      %3279 = sbr.rel (0) target = $region81
    $region80: #{conv_autoencoder_forward.1} parent=1 // pred_region
      %s3281 = ssub.s32 512, 512
      %3282 = vsyncadd [#allocation3], %s3281
      %s3283 = sshll.u32 [#allocation2], 4
      %s3284 = int_to_ptr.vmem [resolvable:$true] %s3283
      %3289 = dma.vmem_to_hbm [thread:$0]  %s3284, 512, %s19, [#allocation3], 128, 128, 8
    $region81: #{conv_autoencoder_forward.1} parent=1 // pred_fallthru
      _
    // Predicated region
    $region82: #{conv_autoencoder_forward.1} parent=1 // pred_check
      _
    $region83: #{conv_autoencoder_forward.1} parent=1 // pred_check_branch
      %3291 = sbr.rel (0) target = $region85
    $region84: #{conv_autoencoder_forward.1} parent=1 // pred_region
      %3292 = dma.done [#allocation3], 512
    $region85: #{conv_autoencoder_forward.1} parent=1 // pred_fallthru
      _
    %3293 = vsyncpa [#allocation3], 1

</llo_original>
